<compile_context>
chip_gen: v7x
topology: tpu7x:2x2x1
jax: 0.10.0
libtpu: 0.0.40
codegen_flags: <defaults>
</compile_context>

<pallas_src>
import functools
import math

import jax
import jax.numpy as jnp
from jax.experimental import pallas as pl
from jax.experimental.pallas import tpu as pltpu


# ----------------------------- helpers ---------------------------------------
def _layer_norm(x, gamma, beta, eps=1e-5):
    mu = jnp.mean(x, axis=-1, keepdims=True)
    var = jnp.mean((x - mu) ** 2, axis=-1, keepdims=True)
    return (x - mu) * jax.lax.rsqrt(var + eps) * gamma + beta


# --------------------------- fused model kernel -------------------------------
def _fused_model_kernel(
    x_ref, fw_ref, fb_ref,
    wqkv_ref, bqkv_ref, wo_ref, bo_ref,
    ln1g_ref, ln1b_ref, w1_ref, b1_ref, w2_ref, b2_ref, ln2g_ref, ln2b_ref,
    lw_ref, lb_ref,
    o_ref,
    h_scratch,
    *, n_head, bt, seq,
):
    blk = pl.program_id(1)
    n_blk = pl.num_programs(1)

    D = fw_ref.shape[1]
    dh = D // n_head
    R = bt * seq
    scale = 1.0 / math.sqrt(dh)

    # ---- first Linear: only on the first encoder-block step of this batch tile
    @pl.when(blk == 0)
    def _():
        x = x_ref[...].reshape(R, x_ref.shape[2])          # (Bt*S, Din_pad)
        h_scratch[...] = (
            jnp.dot(x, fw_ref[...], preferred_element_type=jnp.float32)
            + fb_ref[...]
        )

    h = h_scratch[...]                                      # (R, D)

    # ---- fused QKV projection: one full-width (R,D) x (D,3D) MXU matmul ----
    qkv = jnp.dot(h, wqkv_ref[0], preferred_element_type=jnp.float32) + bqkv_ref[0]

    wo = wo_ref[0]                                          # (D, D)

    # ---- attention: per-head scores/ctx (dh-deep, inherently small), batched
    #      over the Bt sequences, folded straight into the output projection.
    attn = None
    for hd in range(n_head):
        lo = hd * dh
        q_h = qkv[:, lo:lo + dh].reshape(bt, seq, dh)
        k_h = qkv[:, D + lo:D + lo + dh].reshape(bt, seq, dh)
        v_h = qkv[:, 2 * D + lo:2 * D + lo + dh].reshape(bt, seq, dh)

        s = jnp.einsum("bqd,bkd->bqk", q_h, k_h,
                       preferred_element_type=jnp.float32) * scale
        s = s - jnp.max(s, axis=-1, keepdims=True)
        p = jnp.exp(s)
        p = p / jnp.sum(p, axis=-1, keepdims=True)          # exact softmax
        ctx = jnp.einsum("bqk,bkd->bqd", p, v_h,
                         preferred_element_type=jnp.float32)  # (Bt, S, dh)

        part = jnp.dot(ctx.reshape(R, dh), wo[lo:lo + dh, :],
                       preferred_element_type=jnp.float32)   # (R, D)
        attn = part if attn is None else attn + part
    attn = attn + bo_ref[0]

    # ---- post-norm residual 1 ----
    x1 = _layer_norm(h + attn, ln1g_ref[0], ln1b_ref[0])

    # ---- feed-forward (ReLU) ----
    ff = jnp.maximum(
        jnp.dot(x1, w1_ref[0], preferred_element_type=jnp.float32) + b1_ref[0],
        0.0,
    )
    ff = jnp.dot(ff, w2_ref[0], preferred_element_type=jnp.float32) + b2_ref[0]

    # ---- post-norm residual 2 ----
    h_new = _layer_norm(x1 + ff, ln2g_ref[0], ln2b_ref[0])
    h_scratch[...] = h_new

    # ---- last Linear (lane-padded) + store: only on the final block step ----
    @pl.when(blk == n_blk - 1)
    def _():
        out = (jnp.dot(h_new, lw_ref[...], preferred_element_type=jnp.float32)
               + lb_ref[...])
        o_ref[...] = out.reshape(bt, seq, lw_ref.shape[1])


# ------------------------------ wrapper ---------------------------------------
def model_blocks_forward(params, x, n_head, bt=None):
    """x: (B, S, dimension+1) float32 -> (B, S, dimension+1)."""
    B, S, Din = x.shape
    fw, fb = params["first"]
    st = params["stacked"]
    lw_pad, lb_pad = params["last_padded"]
    n_blocks = st["wqkv"].shape[0]
    din_pad = fw.shape[0]
    D = fw.shape[1]
    Dpad = lw_pad.shape[1]
    dout = params["dim_out"]

    # lane-dense padded input features (zeros -> identical result)
    if Din < din_pad:
        x = jnp.pad(x, ((0, 0), (0, 0), (0, din_pad - Din)))

    # choose how many sequences to batch per grid step (fill MXU rows)
    if bt is None:
        bt = min(B, max(1, 128 // max(S, 1)))
        while B % bt != 0:
            bt -= 1

    def const_spec(a):
        nd = a.ndim
        return pl.BlockSpec(a.shape, lambda b, k, _nd=nd: (0,) * _nd)

    def block_spec(a):
        nd = a.ndim
        return pl.BlockSpec((1,) + a.shape[1:],
                            lambda b, k, _nd=nd: (k,) + (0,) * (_nd - 1))

    per_block = [
        st["wqkv"], st["bqkv"], st["wo"], st["bo"],
        st["ln1g"], st["ln1b"], st["w1"], st["b1"],
        st["w2"], st["b2"], st["ln2g"], st["ln2b"],
    ]

    in_specs = (
        [pl.BlockSpec((bt, S, din_pad), lambda b, k: (b, 0, 0))]
        + [const_spec(fw), const_spec(fb)]
        + [block_spec(a) for a in per_block]
        + [const_spec(lw_pad), const_spec(lb_pad)]
    )

    out = pl.pallas_call(
        functools.partial(_fused_model_kernel, n_head=n_head, bt=bt, seq=S),
        out_shape=jax.ShapeDtypeStruct((B, S, Dpad), jnp.float32),
        grid=(B // bt, n_blocks),
        in_specs=in_specs,
        out_specs=pl.BlockSpec((bt, S, Dpad), lambda b, k: (b, 0, 0)),
        scratch_shapes=[pltpu.VMEM((bt * S, D), jnp.float32)],
        compiler_params=pltpu.CompilerParams(
            dimension_semantics=("parallel", "arbitrary")),
    )(x, fw, fb, *per_block, lw_pad, lb_pad)
    return out[..., :dout]


# ------------------------------ parameters ------------------------------------
def init_params(key, dimension, dim_emb, n_head, n_blocks, n_ff):
    assert dim_emb % n_head == 0, "dim_emb must be divisible by n_head"
    din = dimension + 1
    din_pad = ((din + 127) // 128) * 128
    dpad_out = ((din + 127) // 128) * 128
    keys = jax.random.split(key, 2 + n_blocks)

    def lin(k, i, o, scale=0.1):
        kw, kb = jax.random.split(k)
        return (
            scale * jax.random.normal(kw, (i, o), jnp.float32),
            scale * jax.random.normal(kb, (1, o), jnp.float32),
        )

    first_w, first_b = lin(keys[0], din, dim_emb)
    fw_pad = jnp.zeros((din_pad, dim_emb), jnp.float32).at[:din, :].set(first_w)

    last_w, last_b = lin(keys[1], dim_emb, din)
    lw_pad = jnp.zeros((dim_emb, dpad_out), jnp.float32).at[:, :din].set(last_w)
    lb_pad = jnp.zeros((1, dpad_out), jnp.float32).at[:, :din].set(last_b)

    blocks = []
    for bi in range(n_blocks):
        bk = jax.random.split(keys[2 + bi], 6)
        wq, bq = lin(bk[0], dim_emb, dim_emb)
        wk, bkk = lin(bk[1], dim_emb, dim_emb)
        wv, bv = lin(bk[2], dim_emb, dim_emb)
        wo, bo = lin(bk[3], dim_emb, dim_emb)
        w1, b1 = lin(bk[4], dim_emb, n_ff)
        w2, b2 = lin(bk[5], n_ff, dim_emb)
        blocks.append(dict(
            # fused QKV weight: one full-width matmul in the kernel
            wqkv=jnp.concatenate([wq, wk, wv], axis=1),       # (D, 3D)
            bqkv=jnp.concatenate([bq, bkk, bv], axis=1),      # (1, 3D)
            wo=wo, bo=bo,
            ln1g=jnp.ones((1, dim_emb), jnp.float32),
            ln1b=jnp.zeros((1, dim_emb), jnp.float32),
            w1=w1, b1=b1, w2=w2, b2=b2,
            ln2g=jnp.ones((1, dim_emb), jnp.float32),
            ln2b=jnp.zeros((1, dim_emb), jnp.float32),
        ))
    stacked = {k: jnp.stack([b[k] for b in blocks], axis=0) for k in blocks[0]}

    return dict(first=(fw_pad, first_b), stacked=stacked,
                last_padded=(lw_pad, lb_pad), dim_out=din)


# --------------------------- pure-JAX reference --------------------------------
def reference_forward(params, x, n_head):
    fw, fb = params["first"]
    st = params["stacked"]
    lw, lb = params["last_padded"]
    dout = params["dim_out"]
    B, S, Din = x.shape
    din_pad, D = fw.shape
    dh = D // n_head
    xp = jnp.pad(x, ((0, 0), (0, 0), (0, din_pad - Din)))
    h = jnp.einsum("bsi,io->bso", xp, fw) + fb
    for i in range(st["wqkv"].shape[0]):
        qkv = jnp.einsum("bsd,de->bse", h, st["wqkv"][i]) + st["bqkv"][i]
        q = qkv[..., :D].reshape(B, S, n_head, dh)
        k = qkv[..., D:2 * D].reshape(B, S, n_head, dh)
        v = qkv[..., 2 * D:].reshape(B, S, n_head, dh)
        s = jnp.einsum("bqhd,bkhd->bhqk", q, k) / math.sqrt(dh)
        p = jax.nn.softmax(s, axis=-1)
        ctx = jnp.einsum("bhqk,bkhd->bqhd", p, v).reshape(B, S, D)
        attn = jnp.einsum("bsd,de->bse", ctx, st["wo"][i]) + st["bo"][i]
        x1 = _layer_norm(h + attn, st["ln1g"][i], st["ln1b"][i])
        ff = jnp.maximum(jnp.einsum("bsd,df->bsf", x1, st["w1"][i]) + st["b1"][i], 0.0)
        ff = jnp.einsum("bsf,fd->bsd", ff, st["w2"][i]) + st["b2"][i]
        h = _layer_norm(x1 + ff, st["ln2g"][i], st["ln2b"][i])
    out = jnp.einsum("bsd,do->bso", h, lw) + lb
    return out[..., :dout]


if __name__ == "__main__":
    # small, self-consistent config (lane-dense dim_emb / n_ff)
    dimension = 3          # input feature dim is dimension+1 = 4
    dim_emb = 128
    n_head = 4
    n_blocks = 2
    n_ff = 256
    batch, seq = 2, 8

    key = jax.random.PRNGKey(0)
    k_params, k_x = jax.random.split(key)
    params = init_params(k_params, dimension, dim_emb, n_head, n_blocks, n_ff)
    x = jax.random.normal(k_x, (batch, seq, dimension + 1), jnp.float32)

    out = model_blocks_forward(params, x, n_head)
    out = jax.block_until_ready(out)
    assert out.shape == (batch, seq, dimension + 1)

    ref = reference_forward(params, x, n_head)
    max_err = float(jnp.max(jnp.abs(out - ref)))
    assert max_err < 1e-3, f"mismatch vs reference: {max_err}"
    print("KERNEL_OK")
</pallas_src>

<mosaic_0001>
module attributes {stable_mosaic.version = 11 : i64} {
  func.func @_fused_model_kernel(%arg0: i32, %arg1: i32, %arg2: memref<2x8x128xf32, #tpu.memory_space<vmem>>, %arg3: memref<128x128xf32, #tpu.memory_space<vmem>>, %arg4: memref<1x128xf32, #tpu.memory_space<vmem>>, %arg5: memref<1x128x384xf32, #tpu.memory_space<vmem>>, %arg6: memref<1x1x384xf32, #tpu.memory_space<vmem>>, %arg7: memref<1x128x128xf32, #tpu.memory_space<vmem>>, %arg8: memref<1x1x128xf32, #tpu.memory_space<vmem>>, %arg9: memref<1x1x128xf32, #tpu.memory_space<vmem>>, %arg10: memref<1x1x128xf32, #tpu.memory_space<vmem>>, %arg11: memref<1x128x256xf32, #tpu.memory_space<vmem>>, %arg12: memref<1x1x256xf32, #tpu.memory_space<vmem>>, %arg13: memref<1x256x128xf32, #tpu.memory_space<vmem>>, %arg14: memref<1x1x128xf32, #tpu.memory_space<vmem>>, %arg15: memref<1x1x128xf32, #tpu.memory_space<vmem>>, %arg16: memref<1x1x128xf32, #tpu.memory_space<vmem>>, %arg17: memref<128x128xf32, #tpu.memory_space<vmem>>, %arg18: memref<1x128xf32, #tpu.memory_space<vmem>>, %arg19: memref<2x8x128xf32, #tpu.memory_space<vmem>>, %arg20: memref<16x128xf32, #tpu.memory_space<vmem>>) attributes {dimension_semantics = [#tpu.dimension_semantics<parallel>, #tpu.dimension_semantics<arbitrary>], iteration_bounds = array<i64: 1, 2>, scalar_prefetch = 0 : i64, scratch_operands = 1 : i64, tpu.core_type = #tpu.core_type<tc>, window_params = [{transform_indices = @transform_0, window_bounds = array<i64: 2, 8, 128>}, {pipeline_mode = #tpu.pipeline_mode<synchronous>, transform_indices = @transform_1, window_bounds = array<i64: 128, 128>}, {pipeline_mode = #tpu.pipeline_mode<synchronous>, transform_indices = @transform_2, window_bounds = array<i64: 1, 128>}, {transform_indices = @transform_3, window_bounds = array<i64: 1, 128, 384>}, {transform_indices = @transform_4, window_bounds = array<i64: 1, 1, 384>}, {transform_indices = @transform_5, window_bounds = array<i64: 1, 128, 128>}, {transform_indices = @transform_6, window_bounds = array<i64: 1, 1, 128>}, {transform_indices = @transform_7, window_bounds = array<i64: 1, 1, 128>}, {transform_indices = @transform_8, window_bounds = array<i64: 1, 1, 128>}, {transform_indices = @transform_9, window_bounds = array<i64: 1, 128, 256>}, {transform_indices = @transform_10, window_bounds = array<i64: 1, 1, 256>}, {transform_indices = @transform_11, window_bounds = array<i64: 1, 256, 128>}, {transform_indices = @transform_12, window_bounds = array<i64: 1, 1, 128>}, {transform_indices = @transform_13, window_bounds = array<i64: 1, 1, 128>}, {transform_indices = @transform_14, window_bounds = array<i64: 1, 1, 128>}, {pipeline_mode = #tpu.pipeline_mode<synchronous>, transform_indices = @transform_15, window_bounds = array<i64: 128, 128>}, {pipeline_mode = #tpu.pipeline_mode<synchronous>, transform_indices = @transform_16, window_bounds = array<i64: 1, 128>}, {transform_indices = @transform_17, window_bounds = array<i64: 2, 8, 128>}]} {
    %c0_i32 = arith.constant 0 : i32
    %0 = arith.cmpi eq, %arg1, %c0_i32 : i32
    %1 = arith.extui %0 : i1 to i32
    %c0_i32_0 = arith.constant 0 : i32
    %2 = arith.cmpi ne, %1, %c0_i32_0 : i32
    scf.if %2 {
      %c0_78 = arith.constant 0 : index
      %c0_79 = arith.constant 0 : index
      %c0_80 = arith.constant 0 : index
      %182 = vector.load %arg2[%c0_78, %c0_79, %c0_80] : memref<2x8x128xf32, #tpu.memory_space<vmem>>, vector<2x8x128xf32>
      %183 = vector.shape_cast %182 : vector<2x8x128xf32> to vector<16x128xf32>
      %c0_81 = arith.constant 0 : index
      %c0_82 = arith.constant 0 : index
      %184 = vector.load %arg3[%c0_81, %c0_82] : memref<128x128xf32, #tpu.memory_space<vmem>>, vector<128x128xf32>
      %cst_83 = arith.constant dense<0.000000e+00> : vector<16x128xf32>
      %185 = tpu.matmul %183, %184, %cst_83 {dimension_numbers = #tpu.dot_dimension_numbers<[1], [0], [0], [1], [0, 0, 1, 1], [], []>} : vector<16x128xf32>, vector<128x128xf32>, vector<16x128xf32> -> vector<16x128xf32>
      %c0_84 = arith.constant 0 : index
      %c0_85 = arith.constant 0 : index
      %186 = vector.load %arg4[%c0_84, %c0_85] : memref<1x128xf32, #tpu.memory_space<vmem>>, vector<1x128xf32>
      %187 = vector.broadcast %186 : vector<1x128xf32> to vector<16x128xf32>
      %188 = arith.addf %185, %187 : vector<16x128xf32>
      %c0_86 = arith.constant 0 : index
      %c0_87 = arith.constant 0 : index
      %189 = vector.load %arg20[%c0_86, %c0_87] : memref<16x128xf32, #tpu.memory_space<vmem>>, vector<16x128xf32>
      tpu.vector_store %arg20[%c0_86, %c0_87], %188 {strides = array<i32>} : memref<16x128xf32, #tpu.memory_space<vmem>>, vector<16x128xf32>,
    } else {
    }
    %c0 = arith.constant 0 : index
    %c0_1 = arith.constant 0 : index
    %3 = vector.load %arg20[%c0, %c0_1] : memref<16x128xf32, #tpu.memory_space<vmem>>, vector<16x128xf32>
    %c0_2 = arith.constant 0 : index
    %c0_3 = arith.constant 0 : index
    %c0_4 = arith.constant 0 : index
    %4 = vector.load %arg5[%c0_2, %c0_3, %c0_4] : memref<1x128x384xf32, #tpu.memory_space<vmem>>, vector<1x128x384xf32>
    %5 = vector.shape_cast %4 : vector<1x128x384xf32> to vector<128x384xf32>
    %cst = arith.constant dense<0.000000e+00> : vector<16x384xf32>
    %6 = tpu.matmul %3, %5, %cst {dimension_numbers = #tpu.dot_dimension_numbers<[1], [0], [0], [1], [0, 0, 1, 1], [], []>} : vector<16x128xf32>, vector<128x384xf32>, vector<16x384xf32> -> vector<16x384xf32>
    %c0_5 = arith.constant 0 : index
    %c0_6 = arith.constant 0 : index
    %c0_7 = arith.constant 0 : index
    %7 = vector.load %arg6[%c0_5, %c0_6, %c0_7] : memref<1x1x384xf32, #tpu.memory_space<vmem>>, vector<1x1x384xf32>
    %8 = vector.shape_cast %7 : vector<1x1x384xf32> to vector<1x384xf32>
    %9 = vector.broadcast %8 : vector<1x384xf32> to vector<16x384xf32>
    %10 = arith.addf %6, %9 : vector<16x384xf32>
    %c0_8 = arith.constant 0 : index
    %c0_9 = arith.constant 0 : index
    %c0_10 = arith.constant 0 : index
    %11 = vector.load %arg7[%c0_8, %c0_9, %c0_10] : memref<1x128x128xf32, #tpu.memory_space<vmem>>, vector<1x128x128xf32>
    %12 = vector.shape_cast %11 : vector<1x128x128xf32> to vector<128x128xf32>
    %13 = vector.extract_strided_slice %10 {offsets = [0, 0], sizes = [16, 32], strides = [1, 1]} : vector<16x384xf32> to vector<16x32xf32>
    %14 = vector.shape_cast %13 : vector<16x32xf32> to vector<2x8x32xf32>
    %15 = vector.extract_strided_slice %10 {offsets = [0, 128], sizes = [16, 32], strides = [1, 1]} : vector<16x384xf32> to vector<16x32xf32>
    %16 = vector.shape_cast %15 : vector<16x32xf32> to vector<2x8x32xf32>
    %17 = vector.extract_strided_slice %10 {offsets = [0, 256], sizes = [16, 32], strides = [1, 1]} : vector<16x384xf32> to vector<16x32xf32>
    %18 = vector.shape_cast %17 : vector<16x32xf32> to vector<2x8x32xf32>
    "tpu.trace_start"() <{level = 10 : i32, message = "bqd,bkd->bqk"}> : () -> ()
    %cst_11 = arith.constant dense<0.000000e+00> : vector<2x8x8xf32>
    %19 = tpu.matmul %14, %16, %cst_11 {dimension_numbers = #tpu.dot_dimension_numbers<[2], [2], [1], [1], [0, 0, 0, 1, 1, 1], [0], [0]>} : vector<2x8x32xf32>, vector<2x8x32xf32>, vector<2x8x8xf32> -> vector<2x8x8xf32>
    "tpu.trace_stop"() : () -> ()
    %cst_12 = arith.constant 0.176776692 : f32
    %20 = vector.broadcast %cst_12 : f32 to vector<2x8x8xf32>
    %21 = arith.mulf %19, %20 : vector<2x8x8xf32>
    %cst_13 = arith.constant dense<0xFF800000> : vector<2x8xf32>
    %22 = vector.multi_reduction <maximumf>, %21, %cst_13 [2] : vector<2x8x8xf32> to vector<2x8xf32>
    %23 = vector.shape_cast %22 : vector<2x8xf32> to vector<2x8x1xf32>
    %24 = vector.broadcast %23 : vector<2x8x1xf32> to vector<2x8x8xf32>
    %25 = arith.subf %21, %24 : vector<2x8x8xf32>
    %26 = math.exp %25 : vector<2x8x8xf32>
    %cst_14 = arith.constant dense<0.000000e+00> : vector<2x8xf32>
    %27 = vector.multi_reduction <add>, %26, %cst_14 [2] : vector<2x8x8xf32> to vector<2x8xf32>
    %28 = vector.shape_cast %27 : vector<2x8xf32> to vector<2x8x1xf32>
    %29 = vector.broadcast %28 : vector<2x8x1xf32> to vector<2x8x8xf32>
    %30 = arith.divf %26, %29 : vector<2x8x8xf32>
    "tpu.trace_start"() <{level = 10 : i32, message = "bqk,bkd->bqd"}> : () -> ()
    %cst_15 = arith.constant dense<0.000000e+00> : vector<2x8x32xf32>
    %31 = tpu.matmul %30, %18, %cst_15 {dimension_numbers = #tpu.dot_dimension_numbers<[2], [1], [1], [2], [0, 0, 0, 1, 1, 2], [0], [0]>} : vector<2x8x8xf32>, vector<2x8x32xf32>, vector<2x8x32xf32> -> vector<2x8x32xf32>
    "tpu.trace_stop"() : () -> ()
    %32 = vector.shape_cast %31 : vector<2x8x32xf32> to vector<16x32xf32>
    %33 = vector.extract_strided_slice %12 {offsets = [0, 0], sizes = [32, 128], strides = [1, 1]} : vector<128x128xf32> to vector<32x128xf32>
    %cst_16 = arith.constant dense<0.000000e+00> : vector<16x128xf32>
    %34 = tpu.matmul %32, %33, %cst_16 {dimension_numbers = #tpu.dot_dimension_numbers<[1], [0], [0], [1], [0, 0, 1, 1], [], []>} : vector<16x32xf32>, vector<32x128xf32>, vector<16x128xf32> -> vector<16x128xf32>
    %35 = vector.extract_strided_slice %10 {offsets = [0, 32], sizes = [16, 32], strides = [1, 1]} : vector<16x384xf32> to vector<16x32xf32>
    %36 = vector.shape_cast %35 : vector<16x32xf32> to vector<2x8x32xf32>
    %37 = vector.extract_strided_slice %10 {offsets = [0, 160], sizes = [16, 32], strides = [1, 1]} : vector<16x384xf32> to vector<16x32xf32>
    %38 = vector.shape_cast %37 : vector<16x32xf32> to vector<2x8x32xf32>
    %39 = vector.extract_strided_slice %10 {offsets = [0, 288], sizes = [16, 32], strides = [1, 1]} : vector<16x384xf32> to vector<16x32xf32>
    %40 = vector.shape_cast %39 : vector<16x32xf32> to vector<2x8x32xf32>
    "tpu.trace_start"() <{level = 10 : i32, message = "bqd,bkd->bqk"}> : () -> ()
    %cst_17 = arith.constant dense<0.000000e+00> : vector<2x8x8xf32>
    %41 = tpu.matmul %36, %38, %cst_17 {dimension_numbers = #tpu.dot_dimension_numbers<[2], [2], [1], [1], [0, 0, 0, 1, 1, 1], [0], [0]>} : vector<2x8x32xf32>, vector<2x8x32xf32>, vector<2x8x8xf32> -> vector<2x8x8xf32>
    "tpu.trace_stop"() : () -> ()
    %cst_18 = arith.constant 0.176776692 : f32
    %42 = vector.broadcast %cst_18 : f32 to vector<2x8x8xf32>
    %43 = arith.mulf %41, %42 : vector<2x8x8xf32>
    %cst_19 = arith.constant dense<0xFF800000> : vector<2x8xf32>
    %44 = vector.multi_reduction <maximumf>, %43, %cst_19 [2] : vector<2x8x8xf32> to vector<2x8xf32>
    %45 = vector.shape_cast %44 : vector<2x8xf32> to vector<2x8x1xf32>
    %46 = vector.broadcast %45 : vector<2x8x1xf32> to vector<2x8x8xf32>
    %47 = arith.subf %43, %46 : vector<2x8x8xf32>
    %48 = math.exp %47 : vector<2x8x8xf32>
    %cst_20 = arith.constant dense<0.000000e+00> : vector<2x8xf32>
    %49 = vector.multi_reduction <add>, %48, %cst_20 [2] : vector<2x8x8xf32> to vector<2x8xf32>
    %50 = vector.shape_cast %49 : vector<2x8xf32> to vector<2x8x1xf32>
    %51 = vector.broadcast %50 : vector<2x8x1xf32> to vector<2x8x8xf32>
    %52 = arith.divf %48, %51 : vector<2x8x8xf32>
    "tpu.trace_start"() <{level = 10 : i32, message = "bqk,bkd->bqd"}> : () -> ()
    %cst_21 = arith.constant dense<0.000000e+00> : vector<2x8x32xf32>
    %53 = tpu.matmul %52, %40, %cst_21 {dimension_numbers = #tpu.dot_dimension_numbers<[2], [1], [1], [2], [0, 0, 0, 1, 1, 2], [0], [0]>} : vector<2x8x8xf32>, vector<2x8x32xf32>, vector<2x8x32xf32> -> vector<2x8x32xf32>
    "tpu.trace_stop"() : () -> ()
    %54 = vector.shape_cast %53 : vector<2x8x32xf32> to vector<16x32xf32>
    %55 = vector.extract_strided_slice %12 {offsets = [32, 0], sizes = [32, 128], strides = [1, 1]} : vector<128x128xf32> to vector<32x128xf32>
    %cst_22 = arith.constant dense<0.000000e+00> : vector<16x128xf32>
    %56 = tpu.matmul %54, %55, %cst_22 {dimension_numbers = #tpu.dot_dimension_numbers<[1], [0], [0], [1], [0, 0, 1, 1], [], []>} : vector<16x32xf32>, vector<32x128xf32>, vector<16x128xf32> -> vector<16x128xf32>
    %57 = arith.addf %34, %56 : vector<16x128xf32>
    %58 = vector.extract_strided_slice %10 {offsets = [0, 64], sizes = [16, 32], strides = [1, 1]} : vector<16x384xf32> to vector<16x32xf32>
    %59 = vector.shape_cast %58 : vector<16x32xf32> to vector<2x8x32xf32>
    %60 = vector.extract_strided_slice %10 {offsets = [0, 192], sizes = [16, 32], strides = [1, 1]} : vector<16x384xf32> to vector<16x32xf32>
    %61 = vector.shape_cast %60 : vector<16x32xf32> to vector<2x8x32xf32>
    %62 = vector.extract_strided_slice %10 {offsets = [0, 320], sizes = [16, 32], strides = [1, 1]} : vector<16x384xf32> to vector<16x32xf32>
    %63 = vector.shape_cast %62 : vector<16x32xf32> to vector<2x8x32xf32>
    "tpu.trace_start"() <{level = 10 : i32, message = "bqd,bkd->bqk"}> : () -> ()
    %cst_23 = arith.constant dense<0.000000e+00> : vector<2x8x8xf32>
    %64 = tpu.matmul %59, %61, %cst_23 {dimension_numbers = #tpu.dot_dimension_numbers<[2], [2], [1], [1], [0, 0, 0, 1, 1, 1], [0], [0]>} : vector<2x8x32xf32>, vector<2x8x32xf32>, vector<2x8x8xf32> -> vector<2x8x8xf32>
    "tpu.trace_stop"() : () -> ()
    %cst_24 = arith.constant 0.176776692 : f32
    %65 = vector.broadcast %cst_24 : f32 to vector<2x8x8xf32>
    %66 = arith.mulf %64, %65 : vector<2x8x8xf32>
    %cst_25 = arith.constant dense<0xFF800000> : vector<2x8xf32>
    %67 = vector.multi_reduction <maximumf>, %66, %cst_25 [2] : vector<2x8x8xf32> to vector<2x8xf32>
    %68 = vector.shape_cast %67 : vector<2x8xf32> to vector<2x8x1xf32>
    %69 = vector.broadcast %68 : vector<2x8x1xf32> to vector<2x8x8xf32>
    %70 = arith.subf %66, %69 : vector<2x8x8xf32>
    %71 = math.exp %70 : vector<2x8x8xf32>
    %cst_26 = arith.constant dense<0.000000e+00> : vector<2x8xf32>
    %72 = vector.multi_reduction <add>, %71, %cst_26 [2] : vector<2x8x8xf32> to vector<2x8xf32>
    %73 = vector.shape_cast %72 : vector<2x8xf32> to vector<2x8x1xf32>
    %74 = vector.broadcast %73 : vector<2x8x1xf32> to vector<2x8x8xf32>
    %75 = arith.divf %71, %74 : vector<2x8x8xf32>
    "tpu.trace_start"() <{level = 10 : i32, message = "bqk,bkd->bqd"}> : () -> ()
    %cst_27 = arith.constant dense<0.000000e+00> : vector<2x8x32xf32>
    %76 = tpu.matmul %75, %63, %cst_27 {dimension_numbers = #tpu.dot_dimension_numbers<[2], [1], [1], [2], [0, 0, 0, 1, 1, 2], [0], [0]>} : vector<2x8x8xf32>, vector<2x8x32xf32>, vector<2x8x32xf32> -> vector<2x8x32xf32>
    "tpu.trace_stop"() : () -> ()
    %77 = vector.shape_cast %76 : vector<2x8x32xf32> to vector<16x32xf32>
    %78 = vector.extract_strided_slice %12 {offsets = [64, 0], sizes = [32, 128], strides = [1, 1]} : vector<128x128xf32> to vector<32x128xf32>
    %cst_28 = arith.constant dense<0.000000e+00> : vector<16x128xf32>
    %79 = tpu.matmul %77, %78, %cst_28 {dimension_numbers = #tpu.dot_dimension_numbers<[1], [0], [0], [1], [0, 0, 1, 1], [], []>} : vector<16x32xf32>, vector<32x128xf32>, vector<16x128xf32> -> vector<16x128xf32>
    %80 = arith.addf %57, %79 : vector<16x128xf32>
    %81 = vector.extract_strided_slice %10 {offsets = [0, 96], sizes = [16, 32], strides = [1, 1]} : vector<16x384xf32> to vector<16x32xf32>
    %82 = vector.shape_cast %81 : vector<16x32xf32> to vector<2x8x32xf32>
    %83 = vector.extract_strided_slice %10 {offsets = [0, 224], sizes = [16, 32], strides = [1, 1]} : vector<16x384xf32> to vector<16x32xf32>
    %84 = vector.shape_cast %83 : vector<16x32xf32> to vector<2x8x32xf32>
    %85 = vector.extract_strided_slice %10 {offsets = [0, 352], sizes = [16, 32], strides = [1, 1]} : vector<16x384xf32> to vector<16x32xf32>
    %86 = vector.shape_cast %85 : vector<16x32xf32> to vector<2x8x32xf32>
    "tpu.trace_start"() <{level = 10 : i32, message = "bqd,bkd->bqk"}> : () -> ()
    %cst_29 = arith.constant dense<0.000000e+00> : vector<2x8x8xf32>
    %87 = tpu.matmul %82, %84, %cst_29 {dimension_numbers = #tpu.dot_dimension_numbers<[2], [2], [1], [1], [0, 0, 0, 1, 1, 1], [0], [0]>} : vector<2x8x32xf32>, vector<2x8x32xf32>, vector<2x8x8xf32> -> vector<2x8x8xf32>
    "tpu.trace_stop"() : () -> ()
    %cst_30 = arith.constant 0.176776692 : f32
    %88 = vector.broadcast %cst_30 : f32 to vector<2x8x8xf32>
    %89 = arith.mulf %87, %88 : vector<2x8x8xf32>
    %cst_31 = arith.constant dense<0xFF800000> : vector<2x8xf32>
    %90 = vector.multi_reduction <maximumf>, %89, %cst_31 [2] : vector<2x8x8xf32> to vector<2x8xf32>
    %91 = vector.shape_cast %90 : vector<2x8xf32> to vector<2x8x1xf32>
    %92 = vector.broadcast %91 : vector<2x8x1xf32> to vector<2x8x8xf32>
    %93 = arith.subf %89, %92 : vector<2x8x8xf32>
    %94 = math.exp %93 : vector<2x8x8xf32>
    %cst_32 = arith.constant dense<0.000000e+00> : vector<2x8xf32>
    %95 = vector.multi_reduction <add>, %94, %cst_32 [2] : vector<2x8x8xf32> to vector<2x8xf32>
    %96 = vector.shape_cast %95 : vector<2x8xf32> to vector<2x8x1xf32>
    %97 = vector.broadcast %96 : vector<2x8x1xf32> to vector<2x8x8xf32>
    %98 = arith.divf %94, %97 : vector<2x8x8xf32>
    "tpu.trace_start"() <{level = 10 : i32, message = "bqk,bkd->bqd"}> : () -> ()
    %cst_33 = arith.constant dense<0.000000e+00> : vector<2x8x32xf32>
    %99 = tpu.matmul %98, %86, %cst_33 {dimension_numbers = #tpu.dot_dimension_numbers<[2], [1], [1], [2], [0, 0, 0, 1, 1, 2], [0], [0]>} : vector<2x8x8xf32>, vector<2x8x32xf32>, vector<2x8x32xf32> -> vector<2x8x32xf32>
    "tpu.trace_stop"() : () -> ()
    %100 = vector.shape_cast %99 : vector<2x8x32xf32> to vector<16x32xf32>
    %101 = vector.extract_strided_slice %12 {offsets = [96, 0], sizes = [32, 128], strides = [1, 1]} : vector<128x128xf32> to vector<32x128xf32>
    %cst_34 = arith.constant dense<0.000000e+00> : vector<16x128xf32>
    %102 = tpu.matmul %100, %101, %cst_34 {dimension_numbers = #tpu.dot_dimension_numbers<[1], [0], [0], [1], [0, 0, 1, 1], [], []>} : vector<16x32xf32>, vector<32x128xf32>, vector<16x128xf32> -> vector<16x128xf32>
    %103 = arith.addf %80, %102 : vector<16x128xf32>
    %c0_35 = arith.constant 0 : index
    %c0_36 = arith.constant 0 : index
    %c0_37 = arith.constant 0 : index
    %104 = vector.load %arg8[%c0_35, %c0_36, %c0_37] : memref<1x1x128xf32, #tpu.memory_space<vmem>>, vector<1x1x128xf32>
    %105 = vector.shape_cast %104 : vector<1x1x128xf32> to vector<1x128xf32>
    %106 = vector.broadcast %105 : vector<1x128xf32> to vector<16x128xf32>
    %107 = arith.addf %103, %106 : vector<16x128xf32>
    %108 = arith.addf %3, %107 : vector<16x128xf32>
    %c0_38 = arith.constant 0 : index
    %c0_39 = arith.constant 0 : index
    %c0_40 = arith.constant 0 : index
    %109 = vector.load %arg9[%c0_38, %c0_39, %c0_40] : memref<1x1x128xf32, #tpu.memory_space<vmem>>, vector<1x1x128xf32>
    %110 = vector.shape_cast %109 : vector<1x1x128xf32> to vector<1x128xf32>
    %c0_41 = arith.constant 0 : index
    %c0_42 = arith.constant 0 : index
    %c0_43 = arith.constant 0 : index
    %111 = vector.load %arg10[%c0_41, %c0_42, %c0_43] : memref<1x1x128xf32, #tpu.memory_space<vmem>>, vector<1x1x128xf32>
    %112 = vector.shape_cast %111 : vector<1x1x128xf32> to vector<1x128xf32>
    %cst_44 = arith.constant dense<0.000000e+00> : vector<16xf32>
    %113 = vector.multi_reduction <add>, %108, %cst_44 [1] : vector<16x128xf32> to vector<16xf32>
    %114 = vector.shape_cast %113 : vector<16xf32> to vector<16x1xf32>
    %cst_45 = arith.constant 1.280000e+02 : f32
    %115 = vector.broadcast %cst_45 : f32 to vector<16x1xf32>
    %116 = arith.divf %114, %115 : vector<16x1xf32>
    %117 = vector.broadcast %116 : vector<16x1xf32> to vector<16x128xf32>
    %118 = arith.subf %108, %117 : vector<16x128xf32>
    %119 = arith.mulf %118, %118 : vector<16x128xf32>
    %cst_46 = arith.constant dense<0.000000e+00> : vector<16xf32>
    %120 = vector.multi_reduction <add>, %119, %cst_46 [1] : vector<16x128xf32> to vector<16xf32>
    %121 = vector.shape_cast %120 : vector<16xf32> to vector<16x1xf32>
    %cst_47 = arith.constant 1.280000e+02 : f32
    %122 = vector.broadcast %cst_47 : f32 to vector<16x1xf32>
    %123 = arith.divf %121, %122 : vector<16x1xf32>
    %124 = vector.broadcast %116 : vector<16x1xf32> to vector<16x128xf32>
    %125 = arith.subf %108, %124 : vector<16x128xf32>
    %cst_48 = arith.constant 9.99999974E-6 : f32
    %126 = vector.broadcast %cst_48 : f32 to vector<16x1xf32>
    %127 = arith.addf %123, %126 : vector<16x1xf32>
    %128 = math.rsqrt %127 : vector<16x1xf32>
    %129 = vector.broadcast %128 : vector<16x1xf32> to vector<16x128xf32>
    %130 = arith.mulf %125, %129 : vector<16x128xf32>
    %131 = vector.broadcast %110 : vector<1x128xf32> to vector<16x128xf32>
    %132 = arith.mulf %130, %131 : vector<16x128xf32>
    %133 = vector.broadcast %112 : vector<1x128xf32> to vector<16x128xf32>
    %134 = arith.addf %132, %133 : vector<16x128xf32>
    %c0_49 = arith.constant 0 : index
    %c0_50 = arith.constant 0 : index
    %c0_51 = arith.constant 0 : index
    %135 = vector.load %arg11[%c0_49, %c0_50, %c0_51] : memref<1x128x256xf32, #tpu.memory_space<vmem>>, vector<1x128x256xf32>
    %136 = vector.shape_cast %135 : vector<1x128x256xf32> to vector<128x256xf32>
    %cst_52 = arith.constant dense<0.000000e+00> : vector<16x256xf32>
    %137 = tpu.matmul %134, %136, %cst_52 {dimension_numbers = #tpu.dot_dimension_numbers<[1], [0], [0], [1], [0, 0, 1, 1], [], []>} : vector<16x128xf32>, vector<128x256xf32>, vector<16x256xf32> -> vector<16x256xf32>
    %c0_53 = arith.constant 0 : index
    %c0_54 = arith.constant 0 : index
    %c0_55 = arith.constant 0 : index
    %138 = vector.load %arg12[%c0_53, %c0_54, %c0_55] : memref<1x1x256xf32, #tpu.memory_space<vmem>>, vector<1x1x256xf32>
    %139 = vector.shape_cast %138 : vector<1x1x256xf32> to vector<1x256xf32>
    %140 = vector.broadcast %139 : vector<1x256xf32> to vector<16x256xf32>
    %141 = arith.addf %137, %140 : vector<16x256xf32>
    %cst_56 = arith.constant 0.000000e+00 : f32
    %142 = vector.broadcast %cst_56 : f32 to vector<16x256xf32>
    %143 = arith.maximumf %141, %142 : vector<16x256xf32>
    %c0_57 = arith.constant 0 : index
    %c0_58 = arith.constant 0 : index
    %c0_59 = arith.constant 0 : index
    %144 = vector.load %arg13[%c0_57, %c0_58, %c0_59] : memref<1x256x128xf32, #tpu.memory_space<vmem>>, vector<1x256x128xf32>
    %145 = vector.shape_cast %144 : vector<1x256x128xf32> to vector<256x128xf32>
    %cst_60 = arith.constant dense<0.000000e+00> : vector<16x128xf32>
    %146 = tpu.matmul %143, %145, %cst_60 {dimension_numbers = #tpu.dot_dimension_numbers<[1], [0], [0], [1], [0, 0, 1, 1], [], []>} : vector<16x256xf32>, vector<256x128xf32>, vector<16x128xf32> -> vector<16x128xf32>
    %c0_61 = arith.constant 0 : index
    %c0_62 = arith.constant 0 : index
    %c0_63 = arith.constant 0 : index
    %147 = vector.load %arg14[%c0_61, %c0_62, %c0_63] : memref<1x1x128xf32, #tpu.memory_space<vmem>>, vector<1x1x128xf32>
    %148 = vector.shape_cast %147 : vector<1x1x128xf32> to vector<1x128xf32>
    %149 = vector.broadcast %148 : vector<1x128xf32> to vector<16x128xf32>
    %150 = arith.addf %146, %149 : vector<16x128xf32>
    %151 = arith.addf %134, %150 : vector<16x128xf32>
    %c0_64 = arith.constant 0 : index
    %c0_65 = arith.constant 0 : index
    %c0_66 = arith.constant 0 : index
    %152 = vector.load %arg15[%c0_64, %c0_65, %c0_66] : memref<1x1x128xf32, #tpu.memory_space<vmem>>, vector<1x1x128xf32>
    %153 = vector.shape_cast %152 : vector<1x1x128xf32> to vector<1x128xf32>
    %c0_67 = arith.constant 0 : index
    %c0_68 = arith.constant 0 : index
    %c0_69 = arith.constant 0 : index
    %154 = vector.load %arg16[%c0_67, %c0_68, %c0_69] : memref<1x1x128xf32, #tpu.memory_space<vmem>>, vector<1x1x128xf32>
    %155 = vector.shape_cast %154 : vector<1x1x128xf32> to vector<1x128xf32>
    %cst_70 = arith.constant dense<0.000000e+00> : vector<16xf32>
    %156 = vector.multi_reduction <add>, %151, %cst_70 [1] : vector<16x128xf32> to vector<16xf32>
    %157 = vector.shape_cast %156 : vector<16xf32> to vector<16x1xf32>
    %cst_71 = arith.constant 1.280000e+02 : f32
    %158 = vector.broadcast %cst_71 : f32 to vector<16x1xf32>
    %159 = arith.divf %157, %158 : vector<16x1xf32>
    %160 = vector.broadcast %159 : vector<16x1xf32> to vector<16x128xf32>
    %161 = arith.subf %151, %160 : vector<16x128xf32>
    %162 = arith.mulf %161, %161 : vector<16x128xf32>
    %cst_72 = arith.constant dense<0.000000e+00> : vector<16xf32>
    %163 = vector.multi_reduction <add>, %162, %cst_72 [1] : vector<16x128xf32> to vector<16xf32>
    %164 = vector.shape_cast %163 : vector<16xf32> to vector<16x1xf32>
    %cst_73 = arith.constant 1.280000e+02 : f32
    %165 = vector.broadcast %cst_73 : f32 to vector<16x1xf32>
    %166 = arith.divf %164, %165 : vector<16x1xf32>
    %167 = vector.broadcast %159 : vector<16x1xf32> to vector<16x128xf32>
    %168 = arith.subf %151, %167 : vector<16x128xf32>
    %cst_74 = arith.constant 9.99999974E-6 : f32
    %169 = vector.broadcast %cst_74 : f32 to vector<16x1xf32>
    %170 = arith.addf %166, %169 : vector<16x1xf32>
    %171 = math.rsqrt %170 : vector<16x1xf32>
    %172 = vector.broadcast %171 : vector<16x1xf32> to vector<16x128xf32>
    %173 = arith.mulf %168, %172 : vector<16x128xf32>
    %174 = vector.broadcast %153 : vector<1x128xf32> to vector<16x128xf32>
    %175 = arith.mulf %173, %174 : vector<16x128xf32>
    %176 = vector.broadcast %155 : vector<1x128xf32> to vector<16x128xf32>
    %177 = arith.addf %175, %176 : vector<16x128xf32>
    %c0_75 = arith.constant 0 : index
    %c0_76 = arith.constant 0 : index
    %178 = vector.load %arg20[%c0_75, %c0_76] : memref<16x128xf32, #tpu.memory_space<vmem>>, vector<16x128xf32>
    tpu.vector_store %arg20[%c0_75, %c0_76], %177 {strides = array<i32>} : memref<16x128xf32, #tpu.memory_space<vmem>>, vector<16x128xf32>,
    %c1_i32 = arith.constant 1 : i32
    %179 = arith.cmpi eq, %arg1, %c1_i32 : i32
    %180 = arith.extui %179 : i1 to i32
    %c0_i32_77 = arith.constant 0 : i32
    %181 = arith.cmpi ne, %180, %c0_i32_77 : i32
    scf.if %181 {
      %c0_78 = arith.constant 0 : index
      %c0_79 = arith.constant 0 : index
      %182 = vector.load %arg17[%c0_78, %c0_79] : memref<128x128xf32, #tpu.memory_space<vmem>>, vector<128x128xf32>
      %cst_80 = arith.constant dense<0.000000e+00> : vector<16x128xf32>
      %183 = tpu.matmul %177, %182, %cst_80 {dimension_numbers = #tpu.dot_dimension_numbers<[1], [0], [0], [1], [0, 0, 1, 1], [], []>} : vector<16x128xf32>, vector<128x128xf32>, vector<16x128xf32> -> vector<16x128xf32>
      %c0_81 = arith.constant 0 : index
      %c0_82 = arith.constant 0 : index
      %184 = vector.load %arg18[%c0_81, %c0_82] : memref<1x128xf32, #tpu.memory_space<vmem>>, vector<1x128xf32>
      %185 = vector.broadcast %184 : vector<1x128xf32> to vector<16x128xf32>
      %186 = arith.addf %183, %185 : vector<16x128xf32>
      %187 = vector.shape_cast %186 : vector<16x128xf32> to vector<2x8x128xf32>
      %c0_83 = arith.constant 0 : index
      %c0_84 = arith.constant 0 : index
      %c0_85 = arith.constant 0 : index
      %188 = vector.load %arg19[%c0_83, %c0_84, %c0_85] : memref<2x8x128xf32, #tpu.memory_space<vmem>>, vector<2x8x128xf32>
      tpu.vector_store %arg19[%c0_83, %c0_84, %c0_85], %187 {strides = array<i32>} : memref<2x8x128xf32, #tpu.memory_space<vmem>>, vector<2x8x128xf32>,
    } else {
    }
    return
  }
  func.func @transform_0(%arg0: i32, %arg1: i32) -> (i32, i32, i32) {
    %c0_i32 = arith.constant 0 : i32
    %c0_i32_0 = arith.constant 0 : i32
    %c0_i32_1 = arith.constant 0 : i32
    return %arg0, %c0_i32, %c0_i32_0 : i32, i32, i32
  }
  func.func @transform_1(%arg0: i32, %arg1: i32) -> (i32, i32) {
    %c0_i32 = arith.constant 0 : i32
    %c0_i32_0 = arith.constant 0 : i32
    %c0_i32_1 = arith.constant 0 : i32
    return %c0_i32, %c0_i32_0 : i32, i32
  }
  func.func @transform_2(%arg0: i32, %arg1: i32) -> (i32, i32) {
    %c0_i32 = arith.constant 0 : i32
    %c0_i32_0 = arith.constant 0 : i32
    %c0_i32_1 = arith.constant 0 : i32
    return %c0_i32, %c0_i32_0 : i32, i32
  }
  func.func @transform_3(%arg0: i32, %arg1: i32) -> (i32, i32, i32) {
    %c0_i32 = arith.constant 0 : i32
    %c0_i32_0 = arith.constant 0 : i32
    %c0_i32_1 = arith.constant 0 : i32
    return %arg1, %c0_i32, %c0_i32_0 : i32, i32, i32
  }
  func.func @transform_4(%arg0: i32, %arg1: i32) -> (i32, i32, i32) {
    %c0_i32 = arith.constant 0 : i32
    %c0_i32_0 = arith.constant 0 : i32
    %c0_i32_1 = arith.constant 0 : i32
    return %arg1, %c0_i32, %c0_i32_0 : i32, i32, i32
  }
  func.func @transform_5(%arg0: i32, %arg1: i32) -> (i32, i32, i32) {
    %c0_i32 = arith.constant 0 : i32
    %c0_i32_0 = arith.constant 0 : i32
    %c0_i32_1 = arith.constant 0 : i32
    return %arg1, %c0_i32, %c0_i32_0 : i32, i32, i32
  }
  func.func @transform_6(%arg0: i32, %arg1: i32) -> (i32, i32, i32) {
    %c0_i32 = arith.constant 0 : i32
    %c0_i32_0 = arith.constant 0 : i32
    %c0_i32_1 = arith.constant 0 : i32
    return %arg1, %c0_i32, %c0_i32_0 : i32, i32, i32
  }
  func.func @transform_7(%arg0: i32, %arg1: i32) -> (i32, i32, i32) {
    %c0_i32 = arith.constant 0 : i32
    %c0_i32_0 = arith.constant 0 : i32
    %c0_i32_1 = arith.constant 0 : i32
    return %arg1, %c0_i32, %c0_i32_0 : i32, i32, i32
  }
  func.func @transform_8(%arg0: i32, %arg1: i32) -> (i32, i32, i32) {
    %c0_i32 = arith.constant 0 : i32
    %c0_i32_0 = arith.constant 0 : i32
    %c0_i32_1 = arith.constant 0 : i32
    return %arg1, %c0_i32, %c0_i32_0 : i32, i32, i32
  }
  func.func @transform_9(%arg0: i32, %arg1: i32) -> (i32, i32, i32) {
    %c0_i32 = arith.constant 0 : i32
    %c0_i32_0 = arith.constant 0 : i32
    %c0_i32_1 = arith.constant 0 : i32
    return %arg1, %c0_i32, %c0_i32_0 : i32, i32, i32
  }
  func.func @transform_10(%arg0: i32, %arg1: i32) -> (i32, i32, i32) {
    %c0_i32 = arith.constant 0 : i32
    %c0_i32_0 = arith.constant 0 : i32
    %c0_i32_1 = arith.constant 0 : i32
    return %arg1, %c0_i32, %c0_i32_0 : i32, i32, i32
  }
  func.func @transform_11(%arg0: i32, %arg1: i32) -> (i32, i32, i32) {
    %c0_i32 = arith.constant 0 : i32
    %c0_i32_0 = arith.constant 0 : i32
    %c0_i32_1 = arith.constant 0 : i32
    return %arg1, %c0_i32, %c0_i32_0 : i32, i32, i32
  }
  func.func @transform_12(%arg0: i32, %arg1: i32) -> (i32, i32, i32) {
    %c0_i32 = arith.constant 0 : i32
    %c0_i32_0 = arith.constant 0 : i32
    %c0_i32_1 = arith.constant 0 : i32
    return %arg1, %c0_i32, %c0_i32_0 : i32, i32, i32
  }
  func.func @transform_13(%arg0: i32, %arg1: i32) -> (i32, i32, i32) {
    %c0_i32 = arith.constant 0 : i32
    %c0_i32_0 = arith.constant 0 : i32
    %c0_i32_1 = arith.constant 0 : i32
    return %arg1, %c0_i32, %c0_i32_0 : i32, i32, i32
  }
  func.func @transform_14(%arg0: i32, %arg1: i32) -> (i32, i32, i32) {
    %c0_i32 = arith.constant 0 : i32
    %c0_i32_0 = arith.constant 0 : i32
    %c0_i32_1 = arith.constant 0 : i32
    return %arg1, %c0_i32, %c0_i32_0 : i32, i32, i32
  }
  func.func @transform_15(%arg0: i32, %arg1: i32) -> (i32, i32) {
    %c0_i32 = arith.constant 0 : i32
    %c0_i32_0 = arith.constant 0 : i32
    %c0_i32_1 = arith.constant 0 : i32
    return %c0_i32, %c0_i32_0 : i32, i32
  }
  func.func @transform_16(%arg0: i32, %arg1: i32) -> (i32, i32) {
    %c0_i32 = arith.constant 0 : i32
    %c0_i32_0 = arith.constant 0 : i32
    %c0_i32_1 = arith.constant 0 : i32
    return %c0_i32, %c0_i32_0 : i32, i32
  }
  func.func @transform_17(%arg0: i32, %arg1: i32) -> (i32, i32, i32) {
    %c0_i32 = arith.constant 0 : i32
    %c0_i32_0 = arith.constant 0 : i32
    %c0_i32_1 = arith.constant 0 : i32
    return %arg0, %c0_i32, %c0_i32_0 : i32, i32, i32
  }
}

</mosaic_0001>

<llo_original>
// kernel: tpu_custom_call.1
$region0: #{tpu_custom_call.1}
  #allocation0 [shape = 'u32[]', space=smem, size = 0x4, offset = 0x4, fixed_abs, tag = 'smem constant byte address 0x4 - core index']
  #allocation1 [shape = 'u32[144,128]{1,0:T(1,128)}', space=vmem, size = 0x12000, scoped, tag = 'internal scratch']
  #allocation2 [shape = 'f32[16,128]{1,0:T(8,128)}', space=vmem, size = 0x2000, scoped, tag = 'scratch operand']
  %s0 = inlined_call_operand.hbm [shape: f32[2,8,128], index: 0, kind: input, shape index: {}]
  %s1 = inlined_call_operand.hbm [shape: f32[128,128], index: 1, kind: input, shape index: {}]
  %s2 = inlined_call_operand.hbm [shape: f32[1,128], index: 2, kind: input, shape index: {}]
  %s3 = inlined_call_operand.hbm [shape: f32[2,128,384], index: 3, kind: input, shape index: {}]
  %s4 = inlined_call_operand.vmem [shape: f32[2,1,384], index: 4, kind: input, shape index: {}]
  %s5 = inlined_call_operand.hbm [shape: f32[2,128,128], index: 5, kind: input, shape index: {}]
  %s6 = inlined_call_operand.vmem [shape: f32[2,1,128], index: 6, kind: input, shape index: {}]
  %s7 = inlined_call_operand.vmem [shape: f32[2,1,128], index: 7, kind: input, shape index: {}]
  %s8 = inlined_call_operand.vmem [shape: f32[2,1,128], index: 8, kind: input, shape index: {}]
  %s9 = inlined_call_operand.hbm [shape: f32[2,128,256], index: 9, kind: input, shape index: {}]
  %s10 = inlined_call_operand.vmem [shape: f32[2,1,256], index: 10, kind: input, shape index: {}]
  %s11 = inlined_call_operand.hbm [shape: f32[2,256,128], index: 11, kind: input, shape index: {}]
  %s12 = inlined_call_operand.vmem [shape: f32[2,1,128], index: 12, kind: input, shape index: {}]
  %s13 = inlined_call_operand.vmem [shape: f32[2,1,128], index: 13, kind: input, shape index: {}]
  %s14 = inlined_call_operand.vmem [shape: f32[2,1,128], index: 14, kind: input, shape index: {}]
  %s15 = inlined_call_operand.hbm [shape: f32[128,128], index: 15, kind: input, shape index: {}]
  %s16 = inlined_call_operand.vmem [shape: f32[1,128], index: 16, kind: input, shape index: {}]
  %s17 = inlined_call_operand.hbm [shape: f32[2,8,128], index: 17, kind: output, shape index: {}]
  %s18 = sld [smem:[#allocation0]]
  $region141: #{tpu_custom_call.1} parent=0
    _
  %s20 = ssub.s32 1, %s18
  %s21 = scalar_select 0, %s20, %s18
  $region1: #{tpu_custom_call.1} parent=0
    #allocation3 [shape = 'u8[8192]{0}', space=vmem, size = 0x2000, scoped, tag = 'input window, operand 0, single buffered']
    #allocation4 [shape = 's32[2]{0}', space=sflag, size = 0x8, scoped, tag = 'scoped memory for tpu_custom_call.1']
    #allocation5 [shape = 's32[2]{0}', space=sflag, size = 0x8, scoped, tag = 'scoped memory for tpu_custom_call.1']
    #allocation6 [shape = 'u8[65536]{0}', space=vmem, size = 0x10000, scoped, tag = 'input window, operand 1, single buffered']
    #allocation7 [shape = 's32[1]{0}', space=sflag, size = 0x4, scoped, tag = 'scoped memory for tpu_custom_call.1']
    #allocation8 [shape = 'u8[512]{0}', space=vmem, size = 0x400, scoped, tag = 'input window, operand 2, single buffered']
    #allocation9 [shape = 'u8[393216]{0}', space=vmem, size = 0x60000, scoped, tag = 'input window, operand 3']
    #allocation10 [shape = 's32[2]{0}', space=sflag, size = 0x8, scoped, tag = 'scoped memory for tpu_custom_call.1']
    #allocation11 [shape = 'u8[131072]{0}', space=vmem, size = 0x20000, scoped, tag = 'input window, operand 5']
    #allocation12 [shape = 'u8[262144]{0}', space=vmem, size = 0x40000, scoped, tag = 'input window, operand 9']
    #allocation13 [shape = 's32[2]{0}', space=sflag, size = 0x8, scoped, tag = 'scoped memory for tpu_custom_call.1']
    #allocation14 [shape = 'u8[262144]{0}', space=vmem, size = 0x40000, scoped, tag = 'input window, operand 11']
    #allocation15 [shape = 'u8[65536]{0}', space=vmem, size = 0x10000, scoped, tag = 'input window, operand 15, single buffered']
    #allocation16 [shape = 's32[1]{0}', space=sflag, size = 0x4, scoped, tag = 'scoped memory for tpu_custom_call.1']
    #allocation17 [shape = 'u8[8192]{0}', space=vmem, size = 0x2000, scoped, tag = 'output window, operand 0, single buffered']
    %22 = vsyncpa [#allocation4], 0
    %23 = vsyncpa [#allocation7], 0
    %24 = vsyncpa [#allocation10], 0
    %s25 = scalar_lea.sflag [#allocation10], 1
    %26 = vsyncpa %s25, 0
    %27 = vsyncpa [#allocation13], 0
    %s28 = scalar_lea.sflag [#allocation13], 1
    %29 = vsyncpa %s28, 0
    %30 = vsyncpa [#allocation16], 0
    %31 = vsyncpa [#allocation5], 0
    loop: start=0, step=1, limit=4
    $region2: #{tpu_custom_call.1} parent=1 // loop_pre_header
      _
    $region3: #{tpu_custom_call.1} parent=1 // loop_header
      %s33 = sphi 0, %s37
      %p34 = scmp.ge.s32.totalorder %s33, 4
      %s40 = sphi 0, %s52
      %s41 = sphi 0, %s48
      %s42 = sphi 0, %s40
      %s43 = sphi 0, %s41
      %s44 = sphi 0, %s42
      %s45 = sphi 0, %s43
      %s55 = sphi 0, %s57
      %s58 = sphi 0, %s55
      %s59 = sphi 0, %s58
      %s75 = sphi 0, %s59
      %s79 = sphi 0, %s79
      %s81 = sphi 0, %s79
      %s82 = sphi 0, %s81
      %s96 = sphi 0, %s82
      %s100 = sphi 0, %s100
      %s102 = sphi 0, %s100
      %s103 = sphi 0, %s102
      %s117 = sphi 0, %s103
      %s123 = sphi 0, %s125
      %s126 = sphi 0, %s123
      %s127 = sphi 0, %s126
      %s143 = sphi 0, %s127
      %s149 = sphi 0, %s151
      %s152 = sphi 0, %s149
      %s153 = sphi 0, %s152
      %s169 = sphi 0, %s153
      %s175 = sphi 0, %s177
      %s178 = sphi 0, %s175
      %s179 = sphi 0, %s178
      %s195 = sphi 0, %s179
      %s201 = sphi 0, %s203
      %s204 = sphi 0, %s201
      %s205 = sphi 0, %s204
      %s221 = sphi 0, %s205
      %s227 = sphi 0, %s229
      %s230 = sphi 0, %s227
      %s231 = sphi 0, %s230
      %s247 = sphi 0, %s231
      %s253 = sphi 0, %s255
      %s256 = sphi 0, %s253
      %s257 = sphi 0, %s256
      %s273 = sphi 0, %s257
      %s279 = sphi 0, %s281
      %s282 = sphi 0, %s279
      %s283 = sphi 0, %s282
      %s299 = sphi 0, %s283
      %s305 = sphi 0, %s307
      %s308 = sphi 0, %s305
      %s309 = sphi 0, %s308
      %s325 = sphi 0, %s309
      %s331 = sphi 0, %s333
      %s334 = sphi 0, %s331
      %s335 = sphi 0, %s334
      %s351 = sphi 0, %s335
      %s357 = sphi 0, %s359
      %s360 = sphi 0, %s357
      %s361 = sphi 0, %s360
      %s377 = sphi 0, %s361
      %s383 = sphi 0, %s385
      %s386 = sphi 0, %s383
      %s387 = sphi 0, %s386
      %s403 = sphi 0, %s387
      %s409 = sphi 0, %s411
      %s412 = sphi 0, %s409
      %s413 = sphi 0, %s412
      %s429 = sphi 0, %s413
      %s433 = sphi 0, %s433
      %s435 = sphi 0, %s433
      %s436 = sphi 0, %s435
      %s450 = sphi 0, %s436
      %s454 = sphi 0, %s454
      %s456 = sphi 0, %s454
      %s457 = sphi 0, %s456
      %s471 = sphi 0, %s457
      %s477 = sphi 0, %s479
      %s480 = sphi 0, %s477
      %s481 = sphi 0, %s480
      %s497 = sphi 0, %s481
    $region4: #{tpu_custom_call.1} parent=1 // loop_header_branch
      %36 = sbr.rel (%p34) target = $region8
    $region5: #{tpu_custom_call.1} parent=1 // loop_body
      %s38 = ssub.s32 %s33, 1
      %s39 = ssub.s32 %s33, 2
      %s46 = sadd.s32 1, %s41
      %p47 = scmp.ge.s32.totalorder %s46, 2
      %s48 = scalar_select %p47, 0, %s46
      %s49 = sadd.s32 1, %s40
      %s50 = scalar_select %p47, %s49, %s40
      %p51 = scmp.ge.s32.totalorder %s50, 1
      %s52 = scalar_select %p51, 0, %s50
      %s53 = ssub.s32 %s40, %s52
      %p54 = scmp.eq.s32.totalorder %s53, 0
      %s56 = sadd.s32 %s55, 1
      %s57 = scalar_select %p54, %s55, %s56
      %p60 = pneg %p54
      %p61 = scmp.eq.s32.totalorder %s33, 1
      %p62 = por %p60, %p61
      %p63 = scmp.ne.s32.totalorder %s55, %s58
      %p64 = scmp.eq.s32.totalorder %s33, 0
      %p65 = por %p63, %p64
      %p66 = scmp.ne.s32.totalorder %s55, %s58
      %p67 = scmp.eq.s32.totalorder %s38, 1
      %p68 = por %p66, %p67
      %p69 = scmp.ne.s32.totalorder %s58, %s59
      %p70 = scmp.eq.s32.totalorder %s38, 0
      %p71 = por %p69, %p70
      %p72 = scmp.ne.s32.totalorder %s58, %s59
      %p73 = scmp.eq.s32.totalorder %s39, 1
      %p74 = por %p72, %p73
      %p76 = scmp.ne.s32.totalorder %s59, %s75
      %p77 = scmp.eq.s32.totalorder %s39, 0
      %p78 = por %p76, %p77
      %s80 = sadd.s32 %s79, 1
      %p83 = scmp.eq.s32.totalorder %s33, 1
      %p84 = scmp.ne.s32.totalorder %s79, %s81
      %p85 = scmp.eq.s32.totalorder %s33, 0
      %p86 = por %p84, %p85
      %p87 = scmp.ne.s32.totalorder %s79, %s81
      %p88 = scmp.eq.s32.totalorder %s38, 1
      %p89 = por %p87, %p88
      %p90 = scmp.ne.s32.totalorder %s81, %s82
      %p91 = scmp.eq.s32.totalorder %s38, 0
      %p92 = por %p90, %p91
      %p93 = scmp.ne.s32.totalorder %s81, %s82
      %p94 = scmp.eq.s32.totalorder %s39, 1
      %p95 = por %p93, %p94
      %p97 = scmp.ne.s32.totalorder %s82, %s96
      %p98 = scmp.eq.s32.totalorder %s39, 0
      %p99 = por %p97, %p98
      %s101 = sadd.s32 %s100, 1
      %p104 = scmp.eq.s32.totalorder %s33, 1
      %p105 = scmp.ne.s32.totalorder %s100, %s102
      %p106 = scmp.eq.s32.totalorder %s33, 0
      %p107 = por %p105, %p106
      %p108 = scmp.ne.s32.totalorder %s100, %s102
      %p109 = scmp.eq.s32.totalorder %s38, 1
      %p110 = por %p108, %p109
      %p111 = scmp.ne.s32.totalorder %s102, %s103
      %p112 = scmp.eq.s32.totalorder %s38, 0
      %p113 = por %p111, %p112
      %p114 = scmp.ne.s32.totalorder %s102, %s103
      %p115 = scmp.eq.s32.totalorder %s39, 1
      %p116 = por %p114, %p115
      %p118 = scmp.ne.s32.totalorder %s103, %s117
      %p119 = scmp.eq.s32.totalorder %s39, 0
      %p120 = por %p118, %p119
      %s121 = ssub.s32 %s41, %s48
      %p122 = scmp.eq.s32.totalorder %s121, 0
      %s124 = sadd.s32 %s123, 1
      %s125 = scalar_select %p122, %s123, %s124
      %p128 = pneg %p122
      %p129 = scmp.eq.s32.totalorder %s33, 1
      %p130 = por %p128, %p129
      %p131 = scmp.ne.s32.totalorder %s123, %s126
      %p132 = scmp.eq.s32.totalorder %s33, 0
      %p133 = por %p131, %p132
      %p134 = scmp.ne.s32.totalorder %s123, %s126
      %p135 = scmp.eq.s32.totalorder %s38, 1
      %p136 = por %p134, %p135
      %p137 = scmp.ne.s32.totalorder %s126, %s127
      %p138 = scmp.eq.s32.totalorder %s38, 0
      %p139 = por %p137, %p138
      %p140 = scmp.ne.s32.totalorder %s126, %s127
      %p141 = scmp.eq.s32.totalorder %s39, 1
      %p142 = por %p140, %p141
      %p144 = scmp.ne.s32.totalorder %s127, %s143
      %p145 = scmp.eq.s32.totalorder %s39, 0
      %p146 = por %p144, %p145
      %s147 = ssub.s32 %s41, %s48
      %p148 = scmp.eq.s32.totalorder %s147, 0
      %s150 = sadd.s32 %s149, 1
      %s151 = scalar_select %p148, %s149, %s150
      %p154 = pneg %p148
      %p155 = scmp.eq.s32.totalorder %s33, 1
      %p156 = por %p154, %p155
      %p157 = scmp.ne.s32.totalorder %s149, %s152
      %p158 = scmp.eq.s32.totalorder %s33, 0
      %p159 = por %p157, %p158
      %p160 = scmp.ne.s32.totalorder %s149, %s152
      %p161 = scmp.eq.s32.totalorder %s38, 1
      %p162 = por %p160, %p161
      %p163 = scmp.ne.s32.totalorder %s152, %s153
      %p164 = scmp.eq.s32.totalorder %s38, 0
      %p165 = por %p163, %p164
      %p166 = scmp.ne.s32.totalorder %s152, %s153
      %p167 = scmp.eq.s32.totalorder %s39, 1
      %p168 = por %p166, %p167
      %p170 = scmp.ne.s32.totalorder %s153, %s169
      %p171 = scmp.eq.s32.totalorder %s39, 0
      %p172 = por %p170, %p171
      %s173 = ssub.s32 %s41, %s48
      %p174 = scmp.eq.s32.totalorder %s173, 0
      %s176 = sadd.s32 %s175, 1
      %s177 = scalar_select %p174, %s175, %s176
      %p180 = pneg %p174
      %p181 = scmp.eq.s32.totalorder %s33, 1
      %p182 = por %p180, %p181
      %p183 = scmp.ne.s32.totalorder %s175, %s178
      %p184 = scmp.eq.s32.totalorder %s33, 0
      %p185 = por %p183, %p184
      %p186 = scmp.ne.s32.totalorder %s175, %s178
      %p187 = scmp.eq.s32.totalorder %s38, 1
      %p188 = por %p186, %p187
      %p189 = scmp.ne.s32.totalorder %s178, %s179
      %p190 = scmp.eq.s32.totalorder %s38, 0
      %p191 = por %p189, %p190
      %p192 = scmp.ne.s32.totalorder %s178, %s179
      %p193 = scmp.eq.s32.totalorder %s39, 1
      %p194 = por %p192, %p193
      %p196 = scmp.ne.s32.totalorder %s179, %s195
      %p197 = scmp.eq.s32.totalorder %s39, 0
      %p198 = por %p196, %p197
      %s199 = ssub.s32 %s41, %s48
      %p200 = scmp.eq.s32.totalorder %s199, 0
      %s202 = sadd.s32 %s201, 1
      %s203 = scalar_select %p200, %s201, %s202
      %p206 = pneg %p200
      %p207 = scmp.eq.s32.totalorder %s33, 1
      %p208 = por %p206, %p207
      %p209 = scmp.ne.s32.totalorder %s201, %s204
      %p210 = scmp.eq.s32.totalorder %s33, 0
      %p211 = por %p209, %p210
      %p212 = scmp.ne.s32.totalorder %s201, %s204
      %p213 = scmp.eq.s32.totalorder %s38, 1
      %p214 = por %p212, %p213
      %p215 = scmp.ne.s32.totalorder %s204, %s205
      %p216 = scmp.eq.s32.totalorder %s38, 0
      %p217 = por %p215, %p216
      %p218 = scmp.ne.s32.totalorder %s204, %s205
      %p219 = scmp.eq.s32.totalorder %s39, 1
      %p220 = por %p218, %p219
      %p222 = scmp.ne.s32.totalorder %s205, %s221
      %p223 = scmp.eq.s32.totalorder %s39, 0
      %p224 = por %p222, %p223
      %s225 = ssub.s32 %s41, %s48
      %p226 = scmp.eq.s32.totalorder %s225, 0
      %s228 = sadd.s32 %s227, 1
      %s229 = scalar_select %p226, %s227, %s228
      %p232 = pneg %p226
      %p233 = scmp.eq.s32.totalorder %s33, 1
      %p234 = por %p232, %p233
      %p235 = scmp.ne.s32.totalorder %s227, %s230
      %p236 = scmp.eq.s32.totalorder %s33, 0
      %p237 = por %p235, %p236
      %p238 = scmp.ne.s32.totalorder %s227, %s230
      %p239 = scmp.eq.s32.totalorder %s38, 1
      %p240 = por %p238, %p239
      %p241 = scmp.ne.s32.totalorder %s230, %s231
      %p242 = scmp.eq.s32.totalorder %s38, 0
      %p243 = por %p241, %p242
      %p244 = scmp.ne.s32.totalorder %s230, %s231
      %p245 = scmp.eq.s32.totalorder %s39, 1
      %p246 = por %p244, %p245
      %p248 = scmp.ne.s32.totalorder %s231, %s247
      %p249 = scmp.eq.s32.totalorder %s39, 0
      %p250 = por %p248, %p249
      %s251 = ssub.s32 %s41, %s48
      %p252 = scmp.eq.s32.totalorder %s251, 0
      %s254 = sadd.s32 %s253, 1
      %s255 = scalar_select %p252, %s253, %s254
      %p258 = pneg %p252
      %p259 = scmp.eq.s32.totalorder %s33, 1
      %p260 = por %p258, %p259
      %p261 = scmp.ne.s32.totalorder %s253, %s256
      %p262 = scmp.eq.s32.totalorder %s33, 0
      %p263 = por %p261, %p262
      %p264 = scmp.ne.s32.totalorder %s253, %s256
      %p265 = scmp.eq.s32.totalorder %s38, 1
      %p266 = por %p264, %p265
      %p267 = scmp.ne.s32.totalorder %s256, %s257
      %p268 = scmp.eq.s32.totalorder %s38, 0
      %p269 = por %p267, %p268
      %p270 = scmp.ne.s32.totalorder %s256, %s257
      %p271 = scmp.eq.s32.totalorder %s39, 1
      %p272 = por %p270, %p271
      %p274 = scmp.ne.s32.totalorder %s257, %s273
      %p275 = scmp.eq.s32.totalorder %s39, 0
      %p276 = por %p274, %p275
      %s277 = ssub.s32 %s41, %s48
      %p278 = scmp.eq.s32.totalorder %s277, 0
      %s280 = sadd.s32 %s279, 1
      %s281 = scalar_select %p278, %s279, %s280
      %p284 = pneg %p278
      %p285 = scmp.eq.s32.totalorder %s33, 1
      %p286 = por %p284, %p285
      %p287 = scmp.ne.s32.totalorder %s279, %s282
      %p288 = scmp.eq.s32.totalorder %s33, 0
      %p289 = por %p287, %p288
      %p290 = scmp.ne.s32.totalorder %s279, %s282
      %p291 = scmp.eq.s32.totalorder %s38, 1
      %p292 = por %p290, %p291
      %p293 = scmp.ne.s32.totalorder %s282, %s283
      %p294 = scmp.eq.s32.totalorder %s38, 0
      %p295 = por %p293, %p294
      %p296 = scmp.ne.s32.totalorder %s282, %s283
      %p297 = scmp.eq.s32.totalorder %s39, 1
      %p298 = por %p296, %p297
      %p300 = scmp.ne.s32.totalorder %s283, %s299
      %p301 = scmp.eq.s32.totalorder %s39, 0
      %p302 = por %p300, %p301
      %s303 = ssub.s32 %s41, %s48
      %p304 = scmp.eq.s32.totalorder %s303, 0
      %s306 = sadd.s32 %s305, 1
      %s307 = scalar_select %p304, %s305, %s306
      %p310 = pneg %p304
      %p311 = scmp.eq.s32.totalorder %s33, 1
      %p312 = por %p310, %p311
      %p313 = scmp.ne.s32.totalorder %s305, %s308
      %p314 = scmp.eq.s32.totalorder %s33, 0
      %p315 = por %p313, %p314
      %p316 = scmp.ne.s32.totalorder %s305, %s308
      %p317 = scmp.eq.s32.totalorder %s38, 1
      %p318 = por %p316, %p317
      %p319 = scmp.ne.s32.totalorder %s308, %s309
      %p320 = scmp.eq.s32.totalorder %s38, 0
      %p321 = por %p319, %p320
      %p322 = scmp.ne.s32.totalorder %s308, %s309
      %p323 = scmp.eq.s32.totalorder %s39, 1
      %p324 = por %p322, %p323
      %p326 = scmp.ne.s32.totalorder %s309, %s325
      %p327 = scmp.eq.s32.totalorder %s39, 0
      %p328 = por %p326, %p327
      %s329 = ssub.s32 %s41, %s48
      %p330 = scmp.eq.s32.totalorder %s329, 0
      %s332 = sadd.s32 %s331, 1
      %s333 = scalar_select %p330, %s331, %s332
      %p336 = pneg %p330
      %p337 = scmp.eq.s32.totalorder %s33, 1
      %p338 = por %p336, %p337
      %p339 = scmp.ne.s32.totalorder %s331, %s334
      %p340 = scmp.eq.s32.totalorder %s33, 0
      %p341 = por %p339, %p340
      %p342 = scmp.ne.s32.totalorder %s331, %s334
      %p343 = scmp.eq.s32.totalorder %s38, 1
      %p344 = por %p342, %p343
      %p345 = scmp.ne.s32.totalorder %s334, %s335
      %p346 = scmp.eq.s32.totalorder %s38, 0
      %p347 = por %p345, %p346
      %p348 = scmp.ne.s32.totalorder %s334, %s335
      %p349 = scmp.eq.s32.totalorder %s39, 1
      %p350 = por %p348, %p349
      %p352 = scmp.ne.s32.totalorder %s335, %s351
      %p353 = scmp.eq.s32.totalorder %s39, 0
      %p354 = por %p352, %p353
      %s355 = ssub.s32 %s41, %s48
      %p356 = scmp.eq.s32.totalorder %s355, 0
      %s358 = sadd.s32 %s357, 1
      %s359 = scalar_select %p356, %s357, %s358
      %p362 = pneg %p356
      %p363 = scmp.eq.s32.totalorder %s33, 1
      %p364 = por %p362, %p363
      %p365 = scmp.ne.s32.totalorder %s357, %s360
      %p366 = scmp.eq.s32.totalorder %s33, 0
      %p367 = por %p365, %p366
      %p368 = scmp.ne.s32.totalorder %s357, %s360
      %p369 = scmp.eq.s32.totalorder %s38, 1
      %p370 = por %p368, %p369
      %p371 = scmp.ne.s32.totalorder %s360, %s361
      %p372 = scmp.eq.s32.totalorder %s38, 0
      %p373 = por %p371, %p372
      %p374 = scmp.ne.s32.totalorder %s360, %s361
      %p375 = scmp.eq.s32.totalorder %s39, 1
      %p376 = por %p374, %p375
      %p378 = scmp.ne.s32.totalorder %s361, %s377
      %p379 = scmp.eq.s32.totalorder %s39, 0
      %p380 = por %p378, %p379
      %s381 = ssub.s32 %s41, %s48
      %p382 = scmp.eq.s32.totalorder %s381, 0
      %s384 = sadd.s32 %s383, 1
      %s385 = scalar_select %p382, %s383, %s384
      %p388 = pneg %p382
      %p389 = scmp.eq.s32.totalorder %s33, 1
      %p390 = por %p388, %p389
      %p391 = scmp.ne.s32.totalorder %s383, %s386
      %p392 = scmp.eq.s32.totalorder %s33, 0
      %p393 = por %p391, %p392
      %p394 = scmp.ne.s32.totalorder %s383, %s386
      %p395 = scmp.eq.s32.totalorder %s38, 1
      %p396 = por %p394, %p395
      %p397 = scmp.ne.s32.totalorder %s386, %s387
      %p398 = scmp.eq.s32.totalorder %s38, 0
      %p399 = por %p397, %p398
      %p400 = scmp.ne.s32.totalorder %s386, %s387
      %p401 = scmp.eq.s32.totalorder %s39, 1
      %p402 = por %p400, %p401
      %p404 = scmp.ne.s32.totalorder %s387, %s403
      %p405 = scmp.eq.s32.totalorder %s39, 0
      %p406 = por %p404, %p405
      %s407 = ssub.s32 %s41, %s48
      %p408 = scmp.eq.s32.totalorder %s407, 0
      %s410 = sadd.s32 %s409, 1
      %s411 = scalar_select %p408, %s409, %s410
      %p414 = pneg %p408
      %p415 = scmp.eq.s32.totalorder %s33, 1
      %p416 = por %p414, %p415
      %p417 = scmp.ne.s32.totalorder %s409, %s412
      %p418 = scmp.eq.s32.totalorder %s33, 0
      %p419 = por %p417, %p418
      %p420 = scmp.ne.s32.totalorder %s409, %s412
      %p421 = scmp.eq.s32.totalorder %s38, 1
      %p422 = por %p420, %p421
      %p423 = scmp.ne.s32.totalorder %s412, %s413
      %p424 = scmp.eq.s32.totalorder %s38, 0
      %p425 = por %p423, %p424
      %p426 = scmp.ne.s32.totalorder %s412, %s413
      %p427 = scmp.eq.s32.totalorder %s39, 1
      %p428 = por %p426, %p427
      %p430 = scmp.ne.s32.totalorder %s413, %s429
      %p431 = scmp.eq.s32.totalorder %s39, 0
      %p432 = por %p430, %p431
      %s434 = sadd.s32 %s433, 1
      %p437 = scmp.eq.s32.totalorder %s33, 1
      %p438 = scmp.ne.s32.totalorder %s433, %s435
      %p439 = scmp.eq.s32.totalorder %s33, 0
      %p440 = por %p438, %p439
      %p441 = scmp.ne.s32.totalorder %s433, %s435
      %p442 = scmp.eq.s32.totalorder %s38, 1
      %p443 = por %p441, %p442
      %p444 = scmp.ne.s32.totalorder %s435, %s436
      %p445 = scmp.eq.s32.totalorder %s38, 0
      %p446 = por %p444, %p445
      %p447 = scmp.ne.s32.totalorder %s435, %s436
      %p448 = scmp.eq.s32.totalorder %s39, 1
      %p449 = por %p447, %p448
      %p451 = scmp.ne.s32.totalorder %s436, %s450
      %p452 = scmp.eq.s32.totalorder %s39, 0
      %p453 = por %p451, %p452
      %s455 = sadd.s32 %s454, 1
      %p458 = scmp.eq.s32.totalorder %s33, 1
      %p459 = scmp.ne.s32.totalorder %s454, %s456
      %p460 = scmp.eq.s32.totalorder %s33, 0
      %p461 = por %p459, %p460
      %p462 = scmp.ne.s32.totalorder %s454, %s456
      %p463 = scmp.eq.s32.totalorder %s38, 1
      %p464 = por %p462, %p463
      %p465 = scmp.ne.s32.totalorder %s456, %s457
      %p466 = scmp.eq.s32.totalorder %s38, 0
      %p467 = por %p465, %p466
      %p468 = scmp.ne.s32.totalorder %s456, %s457
      %p469 = scmp.eq.s32.totalorder %s39, 1
      %p470 = por %p468, %p469
      %p472 = scmp.ne.s32.totalorder %s457, %s471
      %p473 = scmp.eq.s32.totalorder %s39, 0
      %p474 = por %p472, %p473
      %s475 = ssub.s32 %s40, %s52
      %p476 = scmp.eq.s32.totalorder %s475, 0
      %s478 = sadd.s32 %s477, 1
      %s479 = scalar_select %p476, %s477, %s478
      %p482 = pneg %p476
      %p483 = scmp.eq.s32.totalorder %s33, 1
      %p484 = por %p482, %p483
      %p485 = scmp.ne.s32.totalorder %s477, %s480
      %p486 = scmp.eq.s32.totalorder %s33, 0
      %p487 = por %p485, %p486
      %p488 = scmp.ne.s32.totalorder %s477, %s480
      %p489 = scmp.eq.s32.totalorder %s38, 1
      %p490 = por %p488, %p489
      %p491 = scmp.ne.s32.totalorder %s480, %s481
      %p492 = scmp.eq.s32.totalorder %s38, 0
      %p493 = por %p491, %p492
      %p494 = scmp.ne.s32.totalorder %s480, %s481
      %p495 = scmp.eq.s32.totalorder %s39, 1
      %p496 = por %p494, %p495
      %p498 = scmp.ne.s32.totalorder %s481, %s497
      %p499 = scmp.eq.s32.totalorder %s39, 0
      %p500 = por %p498, %p499
      %p501 = scmp.le.s32.totalorder 1, %s33
      %p502 = scmp.lt.s32.totalorder %s33, 3
      %p503 = pnand %p501, %p502
      %p504 = pneg %p503
      // Predicated region
      $region9: #{tpu_custom_call.1} parent=5 // pred_check
        _
      $region10: #{tpu_custom_call.1} parent=5 // pred_check_branch
        %506 = sbr.rel (%p503) target = $region12
      $region11: #{tpu_custom_call.1} parent=5 // pred_region
        %s507 = ssub.s32 %s33, 1
        // Predicated region
        $region13: #{tpu_custom_call.1} parent=11 // pred_check
          %p508 = pneg %p71
        $region14: #{tpu_custom_call.1} parent=11 // pred_check_branch
          %510 = sbr.rel (%p508) target = $region16
        $region15: #{tpu_custom_call.1} parent=11 // pred_region
          %s511 = smul.u32 2, %s42
          %s513 = ssub.s32 256, 256
          %514 = vsyncadd [#allocation4], %s513
          %s515 = smul.addr %s511, 128
          %s516 = scalar_lea.hbm %s0, %s515
          %s517 = sshll.u32 [#allocation3], 4
          %s518 = int_to_ptr.vmem [resolvable:$true] %s517
          %523 = dma.hbm_to_vmem [thread:$0]  %s516, 256, %s518, [#allocation4], 128, 128, 8
        $region16: #{tpu_custom_call.1} parent=11 // pred_fallthru
          _
        // Predicated region
        $region17: #{tpu_custom_call.1} parent=11 // pred_check
          %p524 = pneg %p92
        $region18: #{tpu_custom_call.1} parent=11 // pred_check_branch
          %526 = sbr.rel (%p524) target = $region20
        $region19: #{tpu_custom_call.1} parent=11 // pred_region
          %s528 = ssub.s32 2048, 2048
          %529 = vsyncadd [#allocation7], %s528
          %s530 = sshll.u32 [#allocation6], 4
          %s531 = int_to_ptr.vmem [resolvable:$true] %s530
          %536 = dma.hbm_to_vmem [thread:$0]  %s1, 2048, %s531, [#allocation7], 128, 128, 8
        $region20: #{tpu_custom_call.1} parent=11 // pred_fallthru
          _
        // Predicated region
        $region21: #{tpu_custom_call.1} parent=11 // pred_check
          %p537 = pneg %p113
        $region22: #{tpu_custom_call.1} parent=11 // pred_check_branch
          %539 = sbr.rel (%p537) target = $region24
        $region23: #{tpu_custom_call.1} parent=11 // pred_region
          %s541 = ssub.s32 16, 16
          %542 = vsyncadd [#allocation7], %s541
          %s544 = sshll.u32 [#allocation8], 4
          %s545 = int_to_ptr.vmem [resolvable:$true] %s544
          %547 = dma.hbm_to_vmem [thread:$0]  %s2, 16, %s545, [#allocation7]
        $region24: #{tpu_custom_call.1} parent=11 // pred_fallthru
          _
        // Predicated region
        $region25: #{tpu_custom_call.1} parent=11 // pred_check
          %p548 = pneg %p446
        $region26: #{tpu_custom_call.1} parent=11 // pred_check_branch
          %550 = sbr.rel (%p548) target = $region28
        $region27: #{tpu_custom_call.1} parent=11 // pred_region
          %s552 = ssub.s32 2048, 2048
          %553 = vsyncadd [#allocation16], %s552
          %s554 = sshll.u32 [#allocation15], 4
          %s555 = int_to_ptr.vmem [resolvable:$true] %s554
          %560 = dma.hbm_to_vmem [thread:$0]  %s15, 2048, %s555, [#allocation16], 128, 128, 8
        $region28: #{tpu_custom_call.1} parent=11 // pred_fallthru
          _
        // Predicated region
        $region29: #{tpu_custom_call.1} parent=11 // pred_check
          %p561 = pneg %p467
        $region30: #{tpu_custom_call.1} parent=11 // pred_check_branch
          %563 = sbr.rel (%p561) target = $region32
        $region31: #{tpu_custom_call.1} parent=11 // pred_region
          _
        $region32: #{tpu_custom_call.1} parent=11 // pred_fallthru
          _
      $region12: #{tpu_custom_call.1} parent=5 // pred_fallthru
        _
      %p564 = scmp.lt.s32.totalorder %s33, 2
      // Predicated region
      $region33: #{tpu_custom_call.1} parent=5 // pred_check
        %p565 = pneg %p564
      $region34: #{tpu_custom_call.1} parent=5 // pred_check_branch
        %567 = sbr.rel (%p565) target = $region36
      $region35: #{tpu_custom_call.1} parent=5 // pred_region
        // Predicated region
        $region37: #{tpu_custom_call.1} parent=35 // pred_check
          %p568 = pneg %p133
        $region38: #{tpu_custom_call.1} parent=35 // pred_check_branch
          %570 = sbr.rel (%p568) target = $region40
        $region39: #{tpu_custom_call.1} parent=35 // pred_region
          %s571 = sand.u32 %s33, 1
          %s572 = scalar_lea.sflag [#allocation10], %s571
          %s573 = sand.u32 %s123, 1
          %s574 = smul.addr %s573, 384
          %s575 = scalar_lea.vmem [#allocation9], %s574
          %s577 = ssub.s32 6144, 6144
          %578 = vsyncadd %s572, %s577
          %s579 = smul.addr %s41, 48
          %s580 = smul.addr %s579, 128
          %s581 = scalar_lea.hbm %s3, %s580
          %s582 = sshll.u32 %s575, 4
          %s583 = int_to_ptr.vmem [resolvable:$true] %s582
          %588 = dma.hbm_to_vmem [thread:$0]  %s581, 6144, %s583, %s572, 384, 384, 24
        $region40: #{tpu_custom_call.1} parent=35 // pred_fallthru
          _
        // Predicated region
        $region41: #{tpu_custom_call.1} parent=35 // pred_check
          %p589 = pneg %p159
        $region42: #{tpu_custom_call.1} parent=35 // pred_check_branch
          %591 = sbr.rel (%p589) target = $region44
        $region43: #{tpu_custom_call.1} parent=35 // pred_region
          %p592 = scmp.lt.s32.totalorder %s41, 1
          %s593 = scalar_select %p592, %s41, 1
          %s594 = smul.addr %s593, 3
          %s595 = scalar_lea.vmem %s4, %s594
        $region44: #{tpu_custom_call.1} parent=35 // pred_fallthru
          _
        // Predicated region
        $region45: #{tpu_custom_call.1} parent=35 // pred_check
          %p596 = pneg %p185
        $region46: #{tpu_custom_call.1} parent=35 // pred_check_branch
          %598 = sbr.rel (%p596) target = $region48
        $region47: #{tpu_custom_call.1} parent=35 // pred_region
          %s599 = sand.u32 %s33, 1
          %s600 = scalar_lea.sflag [#allocation10], %s599
          %s601 = sand.u32 %s175, 1
          %s602 = smul.addr %s601, 128
          %s603 = scalar_lea.vmem [#allocation11], %s602
          %s605 = ssub.s32 2048, 2048
          %606 = vsyncadd %s600, %s605
          %s607 = smul.addr %s41, 16
          %s608 = smul.addr %s607, 128
          %s609 = scalar_lea.hbm %s5, %s608
          %s610 = sshll.u32 %s603, 4
          %s611 = int_to_ptr.vmem [resolvable:$true] %s610
          %616 = dma.hbm_to_vmem [thread:$0]  %s609, 2048, %s611, %s600, 128, 128, 8
        $region48: #{tpu_custom_call.1} parent=35 // pred_fallthru
          _
        // Predicated region
        $region49: #{tpu_custom_call.1} parent=35 // pred_check
          %p617 = pneg %p211
        $region50: #{tpu_custom_call.1} parent=35 // pred_check_branch
          %619 = sbr.rel (%p617) target = $region52
        $region51: #{tpu_custom_call.1} parent=35 // pred_region
          %p620 = scmp.lt.s32.totalorder %s41, 1
          %s621 = scalar_select %p620, %s41, 1
          %s622 = scalar_lea.vmem %s6, %s621
        $region52: #{tpu_custom_call.1} parent=35 // pred_fallthru
          _
        // Predicated region
        $region53: #{tpu_custom_call.1} parent=35 // pred_check
          %p623 = pneg %p237
        $region54: #{tpu_custom_call.1} parent=35 // pred_check_branch
          %625 = sbr.rel (%p623) target = $region56
        $region55: #{tpu_custom_call.1} parent=35 // pred_region
          %p626 = scmp.lt.s32.totalorder %s41, 1
          %s627 = scalar_select %p626, %s41, 1
          %s628 = scalar_lea.vmem %s7, %s627
        $region56: #{tpu_custom_call.1} parent=35 // pred_fallthru
          _
        // Predicated region
        $region57: #{tpu_custom_call.1} parent=35 // pred_check
          %p629 = pneg %p263
        $region58: #{tpu_custom_call.1} parent=35 // pred_check_branch
          %631 = sbr.rel (%p629) target = $region60
        $region59: #{tpu_custom_call.1} parent=35 // pred_region
          %p632 = scmp.lt.s32.totalorder %s41, 1
          %s633 = scalar_select %p632, %s41, 1
          %s634 = scalar_lea.vmem %s8, %s633
        $region60: #{tpu_custom_call.1} parent=35 // pred_fallthru
          _
        // Predicated region
        $region61: #{tpu_custom_call.1} parent=35 // pred_check
          %p635 = pneg %p289
        $region62: #{tpu_custom_call.1} parent=35 // pred_check_branch
          %637 = sbr.rel (%p635) target = $region64
        $region63: #{tpu_custom_call.1} parent=35 // pred_region
          %s638 = sand.u32 %s33, 1
          %s639 = scalar_lea.sflag [#allocation13], %s638
          %s640 = sand.u32 %s279, 1
          %s641 = smul.addr %s640, 256
          %s642 = scalar_lea.vmem [#allocation12], %s641
          %s644 = ssub.s32 4096, 4096
          %645 = vsyncadd %s639, %s644
          %s646 = smul.addr %s41, 32
          %s647 = smul.addr %s646, 128
          %s648 = scalar_lea.hbm %s9, %s647
          %s649 = sshll.u32 %s642, 4
          %s650 = int_to_ptr.vmem [resolvable:$true] %s649
          %655 = dma.hbm_to_vmem [thread:$0]  %s648, 4096, %s650, %s639, 256, 256, 16
        $region64: #{tpu_custom_call.1} parent=35 // pred_fallthru
          _
        // Predicated region
        $region65: #{tpu_custom_call.1} parent=35 // pred_check
          %p656 = pneg %p315
        $region66: #{tpu_custom_call.1} parent=35 // pred_check_branch
          %658 = sbr.rel (%p656) target = $region68
        $region67: #{tpu_custom_call.1} parent=35 // pred_region
          %p659 = scmp.lt.s32.totalorder %s41, 1
          %s660 = scalar_select %p659, %s41, 1
          %s661 = smul.addr %s660, 2
          %s662 = scalar_lea.vmem %s10, %s661
        $region68: #{tpu_custom_call.1} parent=35 // pred_fallthru
          _
        // Predicated region
        $region69: #{tpu_custom_call.1} parent=35 // pred_check
          %p663 = pneg %p341
        $region70: #{tpu_custom_call.1} parent=35 // pred_check_branch
          %665 = sbr.rel (%p663) target = $region72
        $region71: #{tpu_custom_call.1} parent=35 // pred_region
          %s666 = sand.u32 %s33, 1
          %s667 = scalar_lea.sflag [#allocation13], %s666
          %s668 = sand.u32 %s331, 1
          %s669 = smul.addr %s668, 256
          %s670 = scalar_lea.vmem [#allocation14], %s669
          %s672 = ssub.s32 4096, 4096
          %673 = vsyncadd %s667, %s672
          %s674 = smul.addr %s41, 32
          %s675 = smul.addr %s674, 128
          %s676 = scalar_lea.hbm %s11, %s675
          %s677 = sshll.u32 %s670, 4
          %s678 = int_to_ptr.vmem [resolvable:$true] %s677
          %683 = dma.hbm_to_vmem [thread:$0]  %s676, 4096, %s678, %s667, 128, 128, 8
        $region72: #{tpu_custom_call.1} parent=35 // pred_fallthru
          _
        // Predicated region
        $region73: #{tpu_custom_call.1} parent=35 // pred_check
          %p684 = pneg %p367
        $region74: #{tpu_custom_call.1} parent=35 // pred_check_branch
          %686 = sbr.rel (%p684) target = $region76
        $region75: #{tpu_custom_call.1} parent=35 // pred_region
          %p687 = scmp.lt.s32.totalorder %s41, 1
          %s688 = scalar_select %p687, %s41, 1
          %s689 = scalar_lea.vmem %s12, %s688
        $region76: #{tpu_custom_call.1} parent=35 // pred_fallthru
          _
        // Predicated region
        $region77: #{tpu_custom_call.1} parent=35 // pred_check
          %p690 = pneg %p393
        $region78: #{tpu_custom_call.1} parent=35 // pred_check_branch
          %692 = sbr.rel (%p690) target = $region80
        $region79: #{tpu_custom_call.1} parent=35 // pred_region
          %p693 = scmp.lt.s32.totalorder %s41, 1
          %s694 = scalar_select %p693, %s41, 1
          %s695 = scalar_lea.vmem %s13, %s694
        $region80: #{tpu_custom_call.1} parent=35 // pred_fallthru
          _
        // Predicated region
        $region81: #{tpu_custom_call.1} parent=35 // pred_check
          %p696 = pneg %p419
        $region82: #{tpu_custom_call.1} parent=35 // pred_check_branch
          %698 = sbr.rel (%p696) target = $region84
        $region83: #{tpu_custom_call.1} parent=35 // pred_region
          %p699 = scmp.lt.s32.totalorder %s41, 1
          %s700 = scalar_select %p699, %s41, 1
          %s701 = scalar_lea.vmem %s14, %s700
        $region84: #{tpu_custom_call.1} parent=35 // pred_fallthru
          _
      $region36: #{tpu_custom_call.1} parent=5 // pred_fallthru
        _
      %p702 = scmp.le.s32.totalorder 1, %s33
      %p703 = scmp.lt.s32.totalorder %s33, 3
      %p704 = pnand %p702, %p703
      %p705 = pneg %p704
      // Predicated region
      $region85: #{tpu_custom_call.1} parent=5 // pred_check
        _
      $region86: #{tpu_custom_call.1} parent=5 // pred_check_branch
        %707 = sbr.rel (%p704) target = $region88
      $region87: #{tpu_custom_call.1} parent=5 // pred_region
        %s708 = ssub.s32 %s33, 1
        // Predicated region
        $region89: #{tpu_custom_call.1} parent=87 // pred_check
          %p709 = pneg %p71
        $region90: #{tpu_custom_call.1} parent=87 // pred_check_branch
          %711 = sbr.rel (%p709) target = $region92
        $region91: #{tpu_custom_call.1} parent=87 // pred_region
          %712 = dma.done [#allocation4], 256
        $region92: #{tpu_custom_call.1} parent=87 // pred_fallthru
          _
        // Predicated region
        $region93: #{tpu_custom_call.1} parent=87 // pred_check
          %p713 = pneg %p92
        $region94: #{tpu_custom_call.1} parent=87 // pred_check_branch
          %715 = sbr.rel (%p713) target = $region96
        $region95: #{tpu_custom_call.1} parent=87 // pred_region
          %716 = dma.done [#allocation7], 2048
        $region96: #{tpu_custom_call.1} parent=87 // pred_fallthru
          _
        // Predicated region
        $region97: #{tpu_custom_call.1} parent=87 // pred_check
          %p717 = pneg %p113
        $region98: #{tpu_custom_call.1} parent=87 // pred_check_branch
          %719 = sbr.rel (%p717) target = $region100
        $region99: #{tpu_custom_call.1} parent=87 // pred_region
          %720 = dma.done [#allocation7], 16
        $region100: #{tpu_custom_call.1} parent=87 // pred_fallthru
          _
        %s721 = sand.u32 %s38, 1
        %s722 = scalar_lea.sflag [#allocation10], %s721
        %s723 = sand.u32 %s126, 1
        %s724 = smul.addr %s723, 384
        %s725 = scalar_lea.vmem [#allocation9], %s724
        // Predicated region
        $region101: #{tpu_custom_call.1} parent=87 // pred_check
          %p726 = pneg %p139
        $region102: #{tpu_custom_call.1} parent=87 // pred_check_branch
          %728 = sbr.rel (%p726) target = $region104
        $region103: #{tpu_custom_call.1} parent=87 // pred_region
          %729 = dma.done %s722, 6144
        $region104: #{tpu_custom_call.1} parent=87 // pred_fallthru
          _
        %s730 = sand.u32 %s38, 1
        %s731 = scalar_lea.sflag [#allocation10], %s730
        %s732 = sand.u32 %s178, 1
        %s733 = smul.addr %s732, 128
        %s734 = scalar_lea.vmem [#allocation11], %s733
        // Predicated region
        $region105: #{tpu_custom_call.1} parent=87 // pred_check
          %p735 = pneg %p191
        $region106: #{tpu_custom_call.1} parent=87 // pred_check_branch
          %737 = sbr.rel (%p735) target = $region108
        $region107: #{tpu_custom_call.1} parent=87 // pred_region
          %738 = dma.done %s731, 2048
        $region108: #{tpu_custom_call.1} parent=87 // pred_fallthru
          _
        %s739 = sand.u32 %s38, 1
        %s740 = scalar_lea.sflag [#allocation13], %s739
        %s741 = sand.u32 %s282, 1
        %s742 = smul.addr %s741, 256
        %s743 = scalar_lea.vmem [#allocation12], %s742
        // Predicated region
        $region109: #{tpu_custom_call.1} parent=87 // pred_check
          %p744 = pneg %p295
        $region110: #{tpu_custom_call.1} parent=87 // pred_check_branch
          %746 = sbr.rel (%p744) target = $region112
        $region111: #{tpu_custom_call.1} parent=87 // pred_region
          %747 = dma.done %s740, 4096
        $region112: #{tpu_custom_call.1} parent=87 // pred_fallthru
          _
        %s748 = sand.u32 %s38, 1
        %s749 = scalar_lea.sflag [#allocation13], %s748
        %s750 = sand.u32 %s334, 1
        %s751 = smul.addr %s750, 256
        %s752 = scalar_lea.vmem [#allocation14], %s751
        // Predicated region
        $region113: #{tpu_custom_call.1} parent=87 // pred_check
          %p753 = pneg %p347
        $region114: #{tpu_custom_call.1} parent=87 // pred_check_branch
          %755 = sbr.rel (%p753) target = $region116
        $region115: #{tpu_custom_call.1} parent=87 // pred_region
          %756 = dma.done %s749, 4096
        $region116: #{tpu_custom_call.1} parent=87 // pred_fallthru
          _
        // Predicated region
        $region117: #{tpu_custom_call.1} parent=87 // pred_check
          %p757 = pneg %p446
        $region118: #{tpu_custom_call.1} parent=87 // pred_check_branch
          %759 = sbr.rel (%p757) target = $region120
        $region119: #{tpu_custom_call.1} parent=87 // pred_region
          %760 = dma.done [#allocation16], 2048
        $region120: #{tpu_custom_call.1} parent=87 // pred_fallthru
          _
        %p761 = pneg %p71
        %p762 = pneg %p68
        %p763 = pneg %p92
        %p764 = pneg %p89
        %p765 = pneg %p113
        %p766 = pneg %p110
        %s767 = sand.u32 %s38, 1
        %s768 = scalar_lea.sflag [#allocation10], %s767
        %s769 = sand.u32 %s126, 1
        %s770 = smul.addr %s769, 384
        %s771 = scalar_lea.vmem [#allocation9], %s770
        %p772 = pneg %p139
        %p773 = pneg %p136
        %p774 = scmp.lt.s32.totalorder %s43, 1
        %s775 = scalar_select %p774, %s43, 1
        %s776 = smul.addr %s775, 3
        %s777 = scalar_lea.vmem %s4, %s776
        %p778 = pneg %p165
        %p779 = pneg %p162
        %s780 = sand.u32 %s38, 1
        %s781 = scalar_lea.sflag [#allocation10], %s780
        %s782 = sand.u32 %s178, 1
        %s783 = smul.addr %s782, 128
        %s784 = scalar_lea.vmem [#allocation11], %s783
        %p785 = pneg %p191
        %p786 = pneg %p188
        %p787 = scmp.lt.s32.totalorder %s43, 1
        %s788 = scalar_select %p787, %s43, 1
        %s789 = scalar_lea.vmem %s6, %s788
        %p790 = pneg %p217
        %p791 = pneg %p214
        %p792 = scmp.lt.s32.totalorder %s43, 1
        %s793 = scalar_select %p792, %s43, 1
        %s794 = scalar_lea.vmem %s7, %s793
        %p795 = pneg %p243
        %p796 = pneg %p240
        %p797 = scmp.lt.s32.totalorder %s43, 1
        %s798 = scalar_select %p797, %s43, 1
        %s799 = scalar_lea.vmem %s8, %s798
        %p800 = pneg %p269
        %p801 = pneg %p266
        %s802 = sand.u32 %s38, 1
        %s803 = scalar_lea.sflag [#allocation13], %s802
        %s804 = sand.u32 %s282, 1
        %s805 = smul.addr %s804, 256
        %s806 = scalar_lea.vmem [#allocation12], %s805
        %p807 = pneg %p295
        %p808 = pneg %p292
        %p809 = scmp.lt.s32.totalorder %s43, 1
        %s810 = scalar_select %p809, %s43, 1
        %s811 = smul.addr %s810, 2
        %s812 = scalar_lea.vmem %s10, %s811
        %p813 = pneg %p321
        %p814 = pneg %p318
        %s815 = sand.u32 %s38, 1
        %s816 = scalar_lea.sflag [#allocation13], %s815
        %s817 = sand.u32 %s334, 1
        %s818 = smul.addr %s817, 256
        %s819 = scalar_lea.vmem [#allocation14], %s818
        %p820 = pneg %p347
        %p821 = pneg %p344
        %p822 = scmp.lt.s32.totalorder %s43, 1
        %s823 = scalar_select %p822, %s43, 1
        %s824 = scalar_lea.vmem %s12, %s823
        %p825 = pneg %p373
        %p826 = pneg %p370
        %p827 = scmp.lt.s32.totalorder %s43, 1
        %s828 = scalar_select %p827, %s43, 1
        %s829 = scalar_lea.vmem %s13, %s828
        %p830 = pneg %p399
        %p831 = pneg %p396
        %p832 = scmp.lt.s32.totalorder %s43, 1
        %s833 = scalar_select %p832, %s43, 1
        %s834 = scalar_lea.vmem %s14, %s833
        %p835 = pneg %p425
        %p836 = pneg %p422
        %p837 = pneg %p446
        %p838 = pneg %p443
        %p839 = pneg %p467
        %p840 = pneg %p464
        %p841 = pneg %p493
        %p842 = pneg %p490
        %s843 = smul.u32 2, %s42
        %p844 = scmp.lt.s32.totalorder %s43, 1
        %s845 = scalar_select %p844, %s43, 1
        %s846 = smul.addr %s845, 3
        %s847 = scalar_lea.vmem %s4, %s846
        %p848 = scmp.lt.s32.totalorder %s43, 1
        %s849 = scalar_select %p848, %s43, 1
        %s850 = scalar_lea.vmem %s6, %s849
        %p851 = scmp.lt.s32.totalorder %s43, 1
        %s852 = scalar_select %p851, %s43, 1
        %s853 = scalar_lea.vmem %s7, %s852
        %p854 = scmp.lt.s32.totalorder %s43, 1
        %s855 = scalar_select %p854, %s43, 1
        %s856 = scalar_lea.vmem %s8, %s855
        %p857 = scmp.lt.s32.totalorder %s43, 1
        %s858 = scalar_select %p857, %s43, 1
        %s859 = smul.addr %s858, 2
        %s860 = scalar_lea.vmem %s10, %s859
        %p861 = scmp.lt.s32.totalorder %s43, 1
        %s862 = scalar_select %p861, %s43, 1
        %s863 = scalar_lea.vmem %s12, %s862
        %p864 = scmp.lt.s32.totalorder %s43, 1
        %s865 = scalar_select %p864, %s43, 1
        %s866 = scalar_lea.vmem %s13, %s865
        %p867 = scmp.lt.s32.totalorder %s43, 1
        %s868 = scalar_select %p867, %s43, 1
        %s869 = scalar_lea.vmem %s14, %s868
        %s870 = smul.u32 2, %s42
        %p871 = scmp.eq.s32.totalorder %s43, 0
        // Predicated region
        $region121: #{tpu_custom_call.1} parent=87 // pred_check
          %p872 = pneg %p871
        $region122: #{tpu_custom_call.1} parent=87 // pred_check_branch
          %874 = sbr.rel (%p872) target = $region124
        $region123: #{tpu_custom_call.1} parent=87 // pred_region
          %v875 = vld [vmem:[#allocation3] sm:$0xff]
          %v876 = vld [vmem:[#allocation3 + $0x8] sm:$0xff]
          %v877 = vld [vmem:[#allocation6] sm:$0xff]
          %v878 = vld [vmem:[#allocation6 + $0x8] sm:$0xff]
          %v879 = vld [vmem:[#allocation6 + $0x10] sm:$0xff]
          %v880 = vld [vmem:[#allocation6 + $0x18] sm:$0xff]
          %v881 = vld [vmem:[#allocation6 + $0x20] sm:$0xff]
          %v882 = vld [vmem:[#allocation6 + $0x28] sm:$0xff]
          %v883 = vld [vmem:[#allocation6 + $0x30] sm:$0xff]
          %v884 = vld [vmem:[#allocation6 + $0x38] sm:$0xff]
          %v885 = vld [vmem:[#allocation6 + $0x40] sm:$0xff]
          %v886 = vld [vmem:[#allocation6 + $0x48] sm:$0xff]
          %v887 = vld [vmem:[#allocation6 + $0x50] sm:$0xff]
          %v888 = vld [vmem:[#allocation6 + $0x58] sm:$0xff]
          %v889 = vld [vmem:[#allocation6 + $0x60] sm:$0xff]
          %v890 = vld [vmem:[#allocation6 + $0x68] sm:$0xff]
          %v891 = vld [vmem:[#allocation6 + $0x70] sm:$0xff]
          %v892 = vld [vmem:[#allocation6 + $0x78] sm:$0xff]
          %v893 = vld [vmem:[#allocation8] sm:$0x1]
          %v895 = vlaneseq
          %v896 = vshrl.u32 %v895, 7
          %v897 = vsub.s32 0, %v896
          %v898 = vrot.slane %v893, %v897
          %900 = vmatprep.subr.mxu0 0.0
          %901 = vmatpush1.msra.mxu0 %v877
          %902 = vmatprep.subr.mxu0 0.0
          %903 = vmatpush1.msra.mxu0 %v878
          %904 = vmatprep.subr.mxu0 0.0
          %905 = vmatpush1.msra.mxu0 %v879
          %906 = vmatprep.subr.mxu0 0.0
          %907 = vmatpush1.msra.mxu0 %v880
          %908 = vmatprep.subr.mxu0 0.0
          %909 = vmatpush1.msra.mxu0 %v881
          %910 = vmatprep.subr.mxu0 0.0
          %911 = vmatpush1.msra.mxu0 %v882
          %912 = vmatprep.subr.mxu0 0.0
          %913 = vmatpush1.msra.mxu0 %v883
          %914 = vmatprep.subr.mxu0 0.0
          %915 = vmatpush1.msra.mxu0 %v884
          %916 = vmatprep.subr.mxu0 0.0
          %917 = vmatpush1.msra.mxu0 %v885
          %918 = vmatprep.subr.mxu0 0.0
          %919 = vmatpush1.msra.mxu0 %v886
          %920 = vmatprep.subr.mxu0 0.0
          %921 = vmatpush1.msra.mxu0 %v887
          %922 = vmatprep.subr.mxu0 0.0
          %923 = vmatpush1.msra.mxu0 %v888
          %924 = vmatprep.subr.mxu0 0.0
          %925 = vmatpush1.msra.mxu0 %v889
          %926 = vmatprep.subr.mxu0 0.0
          %927 = vmatpush1.msra.mxu0 %v890
          %928 = vmatprep.subr.mxu0 0.0
          %929 = vmatpush1.msra.mxu0 %v891
          %930 = vmatprep.subr.mxu0 0.0
          %931 = vmatpush1.msra.mxu0 %v892
          %932 = vmatprep.subr.mxu0 0.0
          %933 = vmatpush1.msra.mxu0 0.0
          %934 = vmatprep.subr.mxu0 0.0
          %935 = vmatpush1.msra.mxu0 0.0
          %936 = vmatprep.subr.mxu0 0.0
          %937 = vmatpush1.msra.mxu0 0.0
          %938 = vmatprep.subr.mxu0 0.0
          %939 = vmatpush1.msra.mxu0 0.0
          %940 = vmatprep.subr.mxu0 0.0
          %941 = vmatpush1.msra.mxu0 0.0
          %942 = vmatprep.subr.mxu0 0.0
          %943 = vmatpush1.msra.mxu0 0.0
          %944 = vmatprep.subr.mxu0 0.0
          %945 = vmatpush1.msra.mxu0 0.0
          %946 = vmatprep.subr.mxu0 0.0
          %947 = vmatpush1.msra.mxu0 0.0
          %948 = vmatprep.subr.mxu0 0.0
          %949 = vmatpush1.msra.mxu0 0.0
          %950 = vmatprep.subr.mxu0 0.0
          %951 = vmatpush1.msra.mxu0 0.0
          %952 = vmatprep.subr.mxu0 0.0
          %953 = vmatpush1.msra.mxu0 0.0
          %954 = vmatprep.subr.mxu0 0.0
          %955 = vmatpush1.msra.mxu0 0.0
          %956 = vmatprep.subr.mxu0 0.0
          %957 = vmatpush1.msra.mxu0 0.0
          %958 = vmatprep.subr.mxu0 0.0
          %959 = vmatpush1.msra.mxu0 0.0
          %960 = vmatprep.subr.mxu0 0.0
          %961 = vmatpush1.msra.mxu0 0.0
          %962 = vmatprep.subr.mxu0 0.0
          %963 = vmatpush1.msra.mxu0 0.0
          %964 = vmatprep.mubr.f32.mxu0 0.0
          %965 = vmatmul.mubr.f32.gmra.mrb[0].mxu0 %v875
          %v966 = vpop.f32.mrb[0].mxu0
          %v967 = vadd.f32 %v898, %v966
          %v968 = vpop.f32.mrb[0].mxu0
          %969 = vmatprep.mubr.f32.mxu0 0.0
          %970 = vmatmul.mubr.f32.gmra.mrb[0].mxu0 %v876
          %v971 = vpop.f32.mrb[0].mxu0
          %v972 = vadd.f32 %v898, %v971
          %v973 = vpop.f32.mrb[0].mxu0
          %974 = vdwg.mxu0
          %975 = vst [vmem:[#allocation2] sm:$0xff] %v967
          %976 = vst [vmem:[#allocation2 + $0x8] sm:$0xff] %v972
        $region124: #{tpu_custom_call.1} parent=87 // pred_fallthru
          _
        %v977 = vld [vmem:[#allocation2] sm:$0xff]
        %v978 = vld [vmem:[#allocation2 + $0x8] sm:$0xff]
        %v979 = vld [vmem:[%s725] sm:$0xff]
        %v980 = vld [vmem:[%s725 + $0x8] sm:$0xff]
        %v981 = vld [vmem:[%s725 + $0x10] sm:$0xff]
        %v982 = vld [vmem:[%s725 + $0x18] sm:$0xff]
        %v983 = vld [vmem:[%s725 + $0x20] sm:$0xff]
        %v984 = vld [vmem:[%s725 + $0x28] sm:$0xff]
        %v985 = vld [vmem:[%s725 + $0x30] sm:$0xff]
        %v986 = vld [vmem:[%s725 + $0x38] sm:$0xff]
        %v987 = vld [vmem:[%s725 + $0x40] sm:$0xff]
        %v988 = vld [vmem:[%s725 + $0x48] sm:$0xff]
        %v989 = vld [vmem:[%s725 + $0x50] sm:$0xff]
        %v990 = vld [vmem:[%s725 + $0x58] sm:$0xff]
        %v991 = vld [vmem:[%s725 + $0x60] sm:$0xff]
        %v992 = vld [vmem:[%s725 + $0x68] sm:$0xff]
        %v993 = vld [vmem:[%s725 + $0x70] sm:$0xff]
        %v994 = vld [vmem:[%s725 + $0x78] sm:$0xff]
        %v995 = vld [vmem:[%s725 + $0x80] sm:$0xff]
        %v996 = vld [vmem:[%s725 + $0x88] sm:$0xff]
        %v997 = vld [vmem:[%s725 + $0x90] sm:$0xff]
        %v998 = vld [vmem:[%s725 + $0x98] sm:$0xff]
        %v999 = vld [vmem:[%s725 + $0xa0] sm:$0xff]
        %v1000 = vld [vmem:[%s725 + $0xa8] sm:$0xff]
        %v1001 = vld [vmem:[%s725 + $0xb0] sm:$0xff]
        %v1002 = vld [vmem:[%s725 + $0xb8] sm:$0xff]
        %v1003 = vld [vmem:[%s725 + $0xc0] sm:$0xff]
        %v1004 = vld [vmem:[%s725 + $0xc8] sm:$0xff]
        %v1005 = vld [vmem:[%s725 + $0xd0] sm:$0xff]
        %v1006 = vld [vmem:[%s725 + $0xd8] sm:$0xff]
        %v1007 = vld [vmem:[%s725 + $0xe0] sm:$0xff]
        %v1008 = vld [vmem:[%s725 + $0xe8] sm:$0xff]
        %v1009 = vld [vmem:[%s725 + $0xf0] sm:$0xff]
        %v1010 = vld [vmem:[%s725 + $0xf8] sm:$0xff]
        %v1011 = vld [vmem:[%s725 + $0x100] sm:$0xff]
        %v1012 = vld [vmem:[%s725 + $0x108] sm:$0xff]
        %v1013 = vld [vmem:[%s725 + $0x110] sm:$0xff]
        %v1014 = vld [vmem:[%s725 + $0x118] sm:$0xff]
        %v1015 = vld [vmem:[%s725 + $0x120] sm:$0xff]
        %v1016 = vld [vmem:[%s725 + $0x128] sm:$0xff]
        %v1017 = vld [vmem:[%s725 + $0x130] sm:$0xff]
        %v1018 = vld [vmem:[%s725 + $0x138] sm:$0xff]
        %v1019 = vld [vmem:[%s725 + $0x140] sm:$0xff]
        %v1020 = vld [vmem:[%s725 + $0x148] sm:$0xff]
        %v1021 = vld [vmem:[%s725 + $0x150] sm:$0xff]
        %v1022 = vld [vmem:[%s725 + $0x158] sm:$0xff]
        %v1023 = vld [vmem:[%s725 + $0x160] sm:$0xff]
        %v1024 = vld [vmem:[%s725 + $0x168] sm:$0xff]
        %v1025 = vld [vmem:[%s725 + $0x170] sm:$0xff]
        %v1026 = vld [vmem:[%s725 + $0x178] sm:$0xff]
        %v1027 = vld [vmem:[%s847] sm:$0x7]
        %v1029 = vlaneseq
        %v1030 = vshrl.u32 %v1029, 7
        %v1031 = vsub.s32 0, %v1030
        %v1032 = vrot.slane %v1027, %v1031
        %v1033 = vlaneseq
        %v1034 = vshrl.u32 %v1033, 7
        %v1035 = vsub.s32 1, %v1034
        %v1036 = vrot.slane %v1027, %v1035
        %v1037 = vlaneseq
        %v1038 = vshrl.u32 %v1037, 7
        %v1039 = vsub.s32 2, %v1038
        %v1040 = vrot.slane %v1027, %v1039
        %1044 = vmatprep.subr.mxu0 %v980
        %1045 = vmatpush1.msra.mxu0 %v979
        %1046 = vmatprep.subr.mxu0 %v983
        %1047 = vmatpush1.msra.mxu0 %v982
        %1048 = vmatprep.subr.mxu0 %v986
        %1049 = vmatpush1.msra.mxu0 %v985
        %1050 = vmatprep.subr.mxu0 %v989
        %1051 = vmatpush1.msra.mxu0 %v988
        %1052 = vmatprep.subr.mxu0 %v992
        %1053 = vmatpush1.msra.mxu0 %v991
        %1054 = vmatprep.subr.mxu0 %v995
        %1055 = vmatpush1.msra.mxu0 %v994
        %1056 = vmatprep.subr.mxu0 %v998
        %1057 = vmatpush1.msra.mxu0 %v997
        %1058 = vmatprep.subr.mxu0 %v1001
        %1059 = vmatpush1.msra.mxu0 %v1000
        %1060 = vmatprep.subr.mxu0 %v1004
        %1061 = vmatpush1.msra.mxu0 %v1003
        %1062 = vmatprep.subr.mxu0 %v1007
        %1063 = vmatpush1.msra.mxu0 %v1006
        %1064 = vmatprep.subr.mxu0 %v1010
        %1065 = vmatpush1.msra.mxu0 %v1009
        %1066 = vmatprep.subr.mxu0 %v1013
        %1067 = vmatpush1.msra.mxu0 %v1012
        %1068 = vmatprep.subr.mxu0 %v1016
        %1069 = vmatpush1.msra.mxu0 %v1015
        %1070 = vmatprep.subr.mxu0 %v1019
        %1071 = vmatpush1.msra.mxu0 %v1018
        %1072 = vmatprep.subr.mxu0 %v1022
        %1073 = vmatpush1.msra.mxu0 %v1021
        %1074 = vmatprep.subr.mxu0 %v1025
        %1075 = vmatpush1.msra.mxu0 %v1024
        %1076 = vmatprep.subr.mxu0 0.0
        %1077 = vmatpush1.msra.mxu0 0.0
        %1078 = vmatprep.subr.mxu0 0.0
        %1079 = vmatpush1.msra.mxu0 0.0
        %1080 = vmatprep.subr.mxu0 0.0
        %1081 = vmatpush1.msra.mxu0 0.0
        %1082 = vmatprep.subr.mxu0 0.0
        %1083 = vmatpush1.msra.mxu0 0.0
        %1084 = vmatprep.subr.mxu0 0.0
        %1085 = vmatpush1.msra.mxu0 0.0
        %1086 = vmatprep.subr.mxu0 0.0
        %1087 = vmatpush1.msra.mxu0 0.0
        %1088 = vmatprep.subr.mxu0 0.0
        %1089 = vmatpush1.msra.mxu0 0.0
        %1090 = vmatprep.subr.mxu0 0.0
        %1091 = vmatpush1.msra.mxu0 0.0
        %1092 = vmatprep.subr.mxu0 0.0
        %1093 = vmatpush1.msra.mxu0 0.0
        %1094 = vmatprep.subr.mxu0 0.0
        %1095 = vmatpush1.msra.mxu0 0.0
        %1096 = vmatprep.subr.mxu0 0.0
        %1097 = vmatpush1.msra.mxu0 0.0
        %1098 = vmatprep.subr.mxu0 0.0
        %1099 = vmatpush1.msra.mxu0 0.0
        %1100 = vmatprep.subr.mxu0 0.0
        %1101 = vmatpush1.msra.mxu0 0.0
        %1102 = vmatprep.subr.mxu0 0.0
        %1103 = vmatpush1.msra.mxu0 0.0
        %1104 = vmatprep.subr.mxu0 0.0
        %1105 = vmatpush1.msra.mxu0 0.0
        %1106 = vmatprep.subr.mxu0 0.0
        %1107 = vmatpush1.msra.mxu0 0.0
        %1108 = vmatprep.mubr.f32.mxu0 0.0
        %1109 = vmatmul.mubr.f32.gmra.mrb[0].mxu0 %v977
        %v1110 = vpop.f32.mrb[0].mxu0
        %v1111 = vadd.f32 %v1032, %v1110
        %v1112 = vpop.f32.mrb[0].mxu0
        %v1113 = vadd.f32 %v1036, %v1112
        %1114 = vmatprep.mubr.f32.mxu0 0.0
        %1115 = vmatmul.mubr.f32.gmra.mrb[0].mxu0 %v978
        %v1116 = vpop.f32.mrb[0].mxu0
        %v1117 = vadd.f32 %v1032, %v1116
        %v1118 = vpop.f32.mrb[0].mxu0
        %v1119 = vadd.f32 %v1036, %v1118
        %1120 = vdwg.mxu0
        %1121 = vmatprep.subr.mxu0 0.0
        %1122 = vmatpush1.msra.mxu0 %v981
        %1123 = vmatprep.subr.mxu0 0.0
        %1124 = vmatpush1.msra.mxu0 %v984
        %1125 = vmatprep.subr.mxu0 0.0
        %1126 = vmatpush1.msra.mxu0 %v987
        %1127 = vmatprep.subr.mxu0 0.0
        %1128 = vmatpush1.msra.mxu0 %v990
        %1129 = vmatprep.subr.mxu0 0.0
        %1130 = vmatpush1.msra.mxu0 %v993
        %1131 = vmatprep.subr.mxu0 0.0
        %1132 = vmatpush1.msra.mxu0 %v996
        %1133 = vmatprep.subr.mxu0 0.0
        %1134 = vmatpush1.msra.mxu0 %v999
        %1135 = vmatprep.subr.mxu0 0.0
        %1136 = vmatpush1.msra.mxu0 %v1002
        %1137 = vmatprep.subr.mxu0 0.0
        %1138 = vmatpush1.msra.mxu0 %v1005
        %1139 = vmatprep.subr.mxu0 0.0
        %1140 = vmatpush1.msra.mxu0 %v1008
        %1141 = vmatprep.subr.mxu0 0.0
        %1142 = vmatpush1.msra.mxu0 %v1011
        %1143 = vmatprep.subr.mxu0 0.0
        %1144 = vmatpush1.msra.mxu0 %v1014
        %1145 = vmatprep.subr.mxu0 0.0
        %1146 = vmatpush1.msra.mxu0 %v1017
        %1147 = vmatprep.subr.mxu0 0.0
        %1148 = vmatpush1.msra.mxu0 %v1020
        %1149 = vmatprep.subr.mxu0 0.0
        %1150 = vmatpush1.msra.mxu0 %v1023
        %1151 = vmatprep.subr.mxu0 0.0
        %1152 = vmatpush1.msra.mxu0 %v1026
        %1153 = vmatprep.subr.mxu0 0.0
        %1154 = vmatpush1.msra.mxu0 0.0
        %1155 = vmatprep.subr.mxu0 0.0
        %1156 = vmatpush1.msra.mxu0 0.0
        %1157 = vmatprep.subr.mxu0 0.0
        %1158 = vmatpush1.msra.mxu0 0.0
        %1159 = vmatprep.subr.mxu0 0.0
        %1160 = vmatpush1.msra.mxu0 0.0
        %1161 = vmatprep.subr.mxu0 0.0
        %1162 = vmatpush1.msra.mxu0 0.0
        %1163 = vmatprep.subr.mxu0 0.0
        %1164 = vmatpush1.msra.mxu0 0.0
        %1165 = vmatprep.subr.mxu0 0.0
        %1166 = vmatpush1.msra.mxu0 0.0
        %1167 = vmatprep.subr.mxu0 0.0
        %1168 = vmatpush1.msra.mxu0 0.0
        %1169 = vmatprep.subr.mxu0 0.0
        %1170 = vmatpush1.msra.mxu0 0.0
        %1171 = vmatprep.subr.mxu0 0.0
        %1172 = vmatpush1.msra.mxu0 0.0
        %1173 = vmatprep.subr.mxu0 0.0
        %1174 = vmatpush1.msra.mxu0 0.0
        %1175 = vmatprep.subr.mxu0 0.0
        %1176 = vmatpush1.msra.mxu0 0.0
        %1177 = vmatprep.subr.mxu0 0.0
        %1178 = vmatpush1.msra.mxu0 0.0
        %1179 = vmatprep.subr.mxu0 0.0
        %1180 = vmatpush1.msra.mxu0 0.0
        %1181 = vmatprep.subr.mxu0 0.0
        %1182 = vmatpush1.msra.mxu0 0.0
        %1183 = vmatprep.subr.mxu0 0.0
        %1184 = vmatpush1.msra.mxu0 0.0
        %1185 = vmatprep.mubr.f32.mxu0 0.0
        %1186 = vmatmul.mubr.f32.gmra.mrb[0].mxu0 %v977
        %v1187 = vpop.f32.mrb[0].mxu0
        %v1188 = vadd.f32 %v1040, %v1187
        %v1189 = vpop.f32.mrb[0].mxu0
        %1190 = vmatprep.mubr.f32.mxu0 0.0
        %1191 = vmatmul.mubr.f32.gmra.mrb[0].mxu0 %v978
        %v1192 = vpop.f32.mrb[0].mxu0
        %v1193 = vadd.f32 %v1040, %v1192
        %v1194 = vpop.f32.mrb[0].mxu0
        %1195 = vdwg.mxu0
        %v1196 = vld [vmem:[%s734] sm:$0xff]
        %v1197 = vld [vmem:[%s734 + $0x8] sm:$0xff]
        %v1198 = vld [vmem:[%s734 + $0x10] sm:$0xff]
        %v1199 = vld [vmem:[%s734 + $0x18] sm:$0xff]
        %v1200 = vld [vmem:[%s734 + $0x20] sm:$0xff]
        %v1201 = vld [vmem:[%s734 + $0x28] sm:$0xff]
        %v1202 = vld [vmem:[%s734 + $0x30] sm:$0xff]
        %v1203 = vld [vmem:[%s734 + $0x38] sm:$0xff]
        %v1204 = vld [vmem:[%s734 + $0x40] sm:$0xff]
        %v1205 = vld [vmem:[%s734 + $0x48] sm:$0xff]
        %v1206 = vld [vmem:[%s734 + $0x50] sm:$0xff]
        %v1207 = vld [vmem:[%s734 + $0x58] sm:$0xff]
        %v1208 = vld [vmem:[%s734 + $0x60] sm:$0xff]
        %v1209 = vld [vmem:[%s734 + $0x68] sm:$0xff]
        %v1210 = vld [vmem:[%s734 + $0x70] sm:$0xff]
        %v1211 = vld [vmem:[%s734 + $0x78] sm:$0xff]
        %vm1212 = vcmask 261120
        %v1214 = vsel %vm1212, %v1111, 0
        %v1217 = vsel %vm1212, %v1113, 0
        %1219 = vmatprep.subr.mxu0 0.0
        %1220 = vmatpush1.xpose.msra.mxu0 %v1217
        %1221 = vmatprep.subr.mxu0 0.0
        %1222 = vmatpush1.xpose.msra.mxu0 0.0
        %1223 = vmatprep.subr.mxu0 0.0
        %1224 = vmatpush1.xpose.msra.mxu0 0.0
        %1225 = vmatprep.subr.mxu0 0.0
        %1226 = vmatpush1.xpose.msra.mxu0 0.0
        %1227 = vmatprep.subr.mxu0 0.0
        %1228 = vmatpush1.xpose.msra.mxu0 0.0
        %1229 = vmatprep.subr.mxu0 0.0
        %1230 = vmatpush1.xpose.msra.mxu0 0.0
        %1231 = vmatprep.subr.mxu0 0.0
        %1232 = vmatpush1.xpose.msra.mxu0 0.0
        %1233 = vmatprep.subr.mxu0 0.0
        %1234 = vmatpush1.xpose.msra.mxu0 0.0
        %1235 = vmatprep.subr.mxu0 0.0
        %1236 = vmatpush1.xpose.msra.mxu0 0.0
        %1237 = vmatprep.subr.mxu0 0.0
        %1238 = vmatpush1.xpose.msra.mxu0 0.0
        %1239 = vmatprep.subr.mxu0 0.0
        %1240 = vmatpush1.xpose.msra.mxu0 0.0
        %1241 = vmatprep.subr.mxu0 0.0
        %1242 = vmatpush1.xpose.msra.mxu0 0.0
        %1243 = vmatprep.subr.mxu0 0.0
        %1244 = vmatpush1.xpose.msra.mxu0 0.0
        %1245 = vmatprep.subr.mxu0 0.0
        %1246 = vmatpush1.xpose.msra.mxu0 0.0
        %1247 = vmatprep.subr.mxu0 0.0
        %1248 = vmatpush1.xpose.msra.mxu0 0.0
        %1249 = vmatprep.subr.mxu0 0.0
        %1250 = vmatpush1.xpose.msra.mxu0 0.0
        %1251 = vmatprep.subr.mxu0 0.0
        %1252 = vmatpush1.xpose.msra.mxu0 0.0
        %1253 = vmatprep.subr.mxu0 0.0
        %1254 = vmatpush1.xpose.msra.mxu0 0.0
        %1255 = vmatprep.subr.mxu0 0.0
        %1256 = vmatpush1.xpose.msra.mxu0 0.0
        %1257 = vmatprep.subr.mxu0 0.0
        %1258 = vmatpush1.xpose.msra.mxu0 0.0
        %1259 = vmatprep.subr.mxu0 0.0
        %1260 = vmatpush1.xpose.msra.mxu0 0.0
        %1261 = vmatprep.subr.mxu0 0.0
        %1262 = vmatpush1.xpose.msra.mxu0 0.0
        %1263 = vmatprep.subr.mxu0 0.0
        %1264 = vmatpush1.xpose.msra.mxu0 0.0
        %1265 = vmatprep.subr.mxu0 0.0
        %1266 = vmatpush1.xpose.msra.mxu0 0.0
        %1267 = vmatprep.subr.mxu0 0.0
        %1268 = vmatpush1.xpose.msra.mxu0 0.0
        %1269 = vmatprep.subr.mxu0 0.0
        %1270 = vmatpush1.xpose.msra.mxu0 0.0
        %1271 = vmatprep.subr.mxu0 0.0
        %1272 = vmatpush1.xpose.msra.mxu0 0.0
        %1273 = vmatprep.subr.mxu0 0.0
        %1274 = vmatpush1.xpose.msra.mxu0 0.0
        %1275 = vmatprep.subr.mxu0 0.0
        %1276 = vmatpush1.xpose.msra.mxu0 0.0
        %1277 = vmatprep.subr.mxu0 0.0
        %1278 = vmatpush1.xpose.msra.mxu0 0.0
        %1279 = vmatprep.subr.mxu0 0.0
        %1280 = vmatpush1.xpose.msra.mxu0 0.0
        %1281 = vmatprep.subr.mxu0 0.0
        %1282 = vmatpush1.xpose.msra.mxu0 0.0
        %1283 = vmatprep.mubr.f32.mxu0 0.0
        %1284 = vmatmul.mubr.f32.gmra.mrb[0].mxu0 %v1214
        %v1285 = vpop.f32.mrb[0].mxu0
        %v1286 = vadd.f32 0.0, %v1285
        %v1287 = vpop.f32.mrb[0].mxu0
        %1288 = vdwg.mxu0
        %v1290 = vsel %vm1212, %v1117, 0
        %v1293 = vsel %vm1212, %v1119, 0
        %1295 = vmatprep.subr.mxu0 0.0
        %1296 = vmatpush1.xpose.msra.mxu0 %v1293
        %1297 = vmatprep.subr.mxu0 0.0
        %1298 = vmatpush1.xpose.msra.mxu0 0.0
        %1299 = vmatprep.subr.mxu0 0.0
        %1300 = vmatpush1.xpose.msra.mxu0 0.0
        %1301 = vmatprep.subr.mxu0 0.0
        %1302 = vmatpush1.xpose.msra.mxu0 0.0
        %1303 = vmatprep.subr.mxu0 0.0
        %1304 = vmatpush1.xpose.msra.mxu0 0.0
        %1305 = vmatprep.subr.mxu0 0.0
        %1306 = vmatpush1.xpose.msra.mxu0 0.0
        %1307 = vmatprep.subr.mxu0 0.0
        %1308 = vmatpush1.xpose.msra.mxu0 0.0
        %1309 = vmatprep.subr.mxu0 0.0
        %1310 = vmatpush1.xpose.msra.mxu0 0.0
        %1311 = vmatprep.subr.mxu0 0.0
        %1312 = vmatpush1.xpose.msra.mxu0 0.0
        %1313 = vmatprep.subr.mxu0 0.0
        %1314 = vmatpush1.xpose.msra.mxu0 0.0
        %1315 = vmatprep.subr.mxu0 0.0
        %1316 = vmatpush1.xpose.msra.mxu0 0.0
        %1317 = vmatprep.subr.mxu0 0.0
        %1318 = vmatpush1.xpose.msra.mxu0 0.0
        %1319 = vmatprep.subr.mxu0 0.0
        %1320 = vmatpush1.xpose.msra.mxu0 0.0
        %1321 = vmatprep.subr.mxu0 0.0
        %1322 = vmatpush1.xpose.msra.mxu0 0.0
        %1323 = vmatprep.subr.mxu0 0.0
        %1324 = vmatpush1.xpose.msra.mxu0 0.0
        %1325 = vmatprep.subr.mxu0 0.0
        %1326 = vmatpush1.xpose.msra.mxu0 0.0
        %1327 = vmatprep.subr.mxu0 0.0
        %1328 = vmatpush1.xpose.msra.mxu0 0.0
        %1329 = vmatprep.subr.mxu0 0.0
        %1330 = vmatpush1.xpose.msra.mxu0 0.0
        %1331 = vmatprep.subr.mxu0 0.0
        %1332 = vmatpush1.xpose.msra.mxu0 0.0
        %1333 = vmatprep.subr.mxu0 0.0
        %1334 = vmatpush1.xpose.msra.mxu0 0.0
        %1335 = vmatprep.subr.mxu0 0.0
        %1336 = vmatpush1.xpose.msra.mxu0 0.0
        %1337 = vmatprep.subr.mxu0 0.0
        %1338 = vmatpush1.xpose.msra.mxu0 0.0
        %1339 = vmatprep.subr.mxu0 0.0
        %1340 = vmatpush1.xpose.msra.mxu0 0.0
        %1341 = vmatprep.subr.mxu0 0.0
        %1342 = vmatpush1.xpose.msra.mxu0 0.0
        %1343 = vmatprep.subr.mxu0 0.0
        %1344 = vmatpush1.xpose.msra.mxu0 0.0
        %1345 = vmatprep.subr.mxu0 0.0
        %1346 = vmatpush1.xpose.msra.mxu0 0.0
        %1347 = vmatprep.subr.mxu0 0.0
        %1348 = vmatpush1.xpose.msra.mxu0 0.0
        %1349 = vmatprep.subr.mxu0 0.0
        %1350 = vmatpush1.xpose.msra.mxu0 0.0
        %1351 = vmatprep.subr.mxu0 0.0
        %1352 = vmatpush1.xpose.msra.mxu0 0.0
        %1353 = vmatprep.subr.mxu0 0.0
        %1354 = vmatpush1.xpose.msra.mxu0 0.0
        %1355 = vmatprep.subr.mxu0 0.0
        %1356 = vmatpush1.xpose.msra.mxu0 0.0
        %1357 = vmatprep.subr.mxu0 0.0
        %1358 = vmatpush1.xpose.msra.mxu0 0.0
        %1359 = vmatprep.mubr.f32.mxu0 0.0
        %1360 = vmatmul.mubr.f32.gmra.mrb[0].mxu0 %v1290
        %v1361 = vpop.f32.mrb[0].mxu0
        %v1362 = vadd.f32 0.0, %v1361
        %v1363 = vpop.f32.mrb[0].mxu0
        %1364 = vdwg.mxu0
        %v1365 = vmul.f32 %v1286, 0.17677669
        %v1366 = vmul.f32 %v1362, 0.17677669
        %vm1367 = vcmask 64512
        %v1368 = vsel %vm1367, %v1365, -inf
        %1369 = vmax.xlane.f32.xlu0 %v1368
        %v1370 = vpop.xlane.xlu0 %1369
        %v1371 = vsel %vm1367, %v1366, -inf
        %1372 = vmax.xlane.f32.xlu0 %v1371
        %v1373 = vpop.xlane.xlu0 %1372
        %v1374 = vsub.f32 %v1365, %v1370
        %v1375 = vsub.f32 %v1366, %v1373
        %v1376 = vmul.f32 %v1374, 1.442695
        %v1377 = vpow.pop %v1376
        %v1378 = vmul.f32 %v1375, 1.442695
        %v1379 = vpow.pop %v1378
        %v1380 = vsel %vm1367, %v1377, 0.0
        %1381 = vadd.xlane.f32.xlu0 %v1380
        %v1382 = vpop.xlane.xlu0 %1381
        %v1383 = vsel %vm1367, %v1379, 0.0
        %1384 = vadd.xlane.f32.xlu0 %v1383
        %v1385 = vpop.xlane.xlu0 %1384
        %v1386 = vrcp.pop %v1382
        %v1387 = vmul.f32 %v1377, %v1386
        %v1388 = vrcp.pop %v1385
        %v1389 = vmul.f32 %v1379, %v1388
        %v1391 = vsel %vm1367, %v1387, 0
        %1393 = vmatprep.subr.mxu0 0.0
        %1394 = vmatpush1.msra.mxu0 %v1188
        %1395 = vmatprep.subr.mxu0 0.0
        %1396 = vmatpush1.msra.mxu0 0.0
        %1397 = vmatprep.subr.mxu0 0.0
        %1398 = vmatpush1.msra.mxu0 0.0
        %1399 = vmatprep.subr.mxu0 0.0
        %1400 = vmatpush1.msra.mxu0 0.0
        %1401 = vmatprep.subr.mxu0 0.0
        %1402 = vmatpush1.msra.mxu0 0.0
        %1403 = vmatprep.subr.mxu0 0.0
        %1404 = vmatpush1.msra.mxu0 0.0
        %1405 = vmatprep.subr.mxu0 0.0
        %1406 = vmatpush1.msra.mxu0 0.0
        %1407 = vmatprep.subr.mxu0 0.0
        %1408 = vmatpush1.msra.mxu0 0.0
        %1409 = vmatprep.subr.mxu0 0.0
        %1410 = vmatpush1.msra.mxu0 0.0
        %1411 = vmatprep.subr.mxu0 0.0
        %1412 = vmatpush1.msra.mxu0 0.0
        %1413 = vmatprep.subr.mxu0 0.0
        %1414 = vmatpush1.msra.mxu0 0.0
        %1415 = vmatprep.subr.mxu0 0.0
        %1416 = vmatpush1.msra.mxu0 0.0
        %1417 = vmatprep.subr.mxu0 0.0
        %1418 = vmatpush1.msra.mxu0 0.0
        %1419 = vmatprep.subr.mxu0 0.0
        %1420 = vmatpush1.msra.mxu0 0.0
        %1421 = vmatprep.subr.mxu0 0.0
        %1422 = vmatpush1.msra.mxu0 0.0
        %1423 = vmatprep.subr.mxu0 0.0
        %1424 = vmatpush1.msra.mxu0 0.0
        %1425 = vmatprep.subr.mxu0 0.0
        %1426 = vmatpush1.msra.mxu0 0.0
        %1427 = vmatprep.subr.mxu0 0.0
        %1428 = vmatpush1.msra.mxu0 0.0
        %1429 = vmatprep.subr.mxu0 0.0
        %1430 = vmatpush1.msra.mxu0 0.0
        %1431 = vmatprep.subr.mxu0 0.0
        %1432 = vmatpush1.msra.mxu0 0.0
        %1433 = vmatprep.subr.mxu0 0.0
        %1434 = vmatpush1.msra.mxu0 0.0
        %1435 = vmatprep.subr.mxu0 0.0
        %1436 = vmatpush1.msra.mxu0 0.0
        %1437 = vmatprep.subr.mxu0 0.0
        %1438 = vmatpush1.msra.mxu0 0.0
        %1439 = vmatprep.subr.mxu0 0.0
        %1440 = vmatpush1.msra.mxu0 0.0
        %1441 = vmatprep.subr.mxu0 0.0
        %1442 = vmatpush1.msra.mxu0 0.0
        %1443 = vmatprep.subr.mxu0 0.0
        %1444 = vmatpush1.msra.mxu0 0.0
        %1445 = vmatprep.subr.mxu0 0.0
        %1446 = vmatpush1.msra.mxu0 0.0
        %1447 = vmatprep.subr.mxu0 0.0
        %1448 = vmatpush1.msra.mxu0 0.0
        %1449 = vmatprep.subr.mxu0 0.0
        %1450 = vmatpush1.msra.mxu0 0.0
        %1451 = vmatprep.subr.mxu0 0.0
        %1452 = vmatpush1.msra.mxu0 0.0
        %1453 = vmatprep.subr.mxu0 0.0
        %1454 = vmatpush1.msra.mxu0 0.0
        %1455 = vmatprep.subr.mxu0 0.0
        %1456 = vmatpush1.msra.mxu0 0.0
        %1457 = vmatprep.mubr.f32.mxu0 0.0
        %1458 = vmatmul.mubr.f32.gmra.mrb[0].mxu0 %v1391
        %v1459 = vpop.f32.mrb[0].mxu0
        %v1460 = vadd.f32 0.0, %v1459
        %v1461 = vpop.f32.mrb[0].mxu0
        %1462 = vdwg.mxu0
        %v1464 = vsel %vm1367, %v1389, 0
        %1466 = vmatprep.subr.mxu0 0.0
        %1467 = vmatpush1.msra.mxu0 %v1193
        %1468 = vmatprep.subr.mxu0 0.0
        %1469 = vmatpush1.msra.mxu0 0.0
        %1470 = vmatprep.subr.mxu0 0.0
        %1471 = vmatpush1.msra.mxu0 0.0
        %1472 = vmatprep.subr.mxu0 0.0
        %1473 = vmatpush1.msra.mxu0 0.0
        %1474 = vmatprep.subr.mxu0 0.0
        %1475 = vmatpush1.msra.mxu0 0.0
        %1476 = vmatprep.subr.mxu0 0.0
        %1477 = vmatpush1.msra.mxu0 0.0
        %1478 = vmatprep.subr.mxu0 0.0
        %1479 = vmatpush1.msra.mxu0 0.0
        %1480 = vmatprep.subr.mxu0 0.0
        %1481 = vmatpush1.msra.mxu0 0.0
        %1482 = vmatprep.subr.mxu0 0.0
        %1483 = vmatpush1.msra.mxu0 0.0
        %1484 = vmatprep.subr.mxu0 0.0
        %1485 = vmatpush1.msra.mxu0 0.0
        %1486 = vmatprep.subr.mxu0 0.0
        %1487 = vmatpush1.msra.mxu0 0.0
        %1488 = vmatprep.subr.mxu0 0.0
        %1489 = vmatpush1.msra.mxu0 0.0
        %1490 = vmatprep.subr.mxu0 0.0
        %1491 = vmatpush1.msra.mxu0 0.0
        %1492 = vmatprep.subr.mxu0 0.0
        %1493 = vmatpush1.msra.mxu0 0.0
        %1494 = vmatprep.subr.mxu0 0.0
        %1495 = vmatpush1.msra.mxu0 0.0
        %1496 = vmatprep.subr.mxu0 0.0
        %1497 = vmatpush1.msra.mxu0 0.0
        %1498 = vmatprep.subr.mxu0 0.0
        %1499 = vmatpush1.msra.mxu0 0.0
        %1500 = vmatprep.subr.mxu0 0.0
        %1501 = vmatpush1.msra.mxu0 0.0
        %1502 = vmatprep.subr.mxu0 0.0
        %1503 = vmatpush1.msra.mxu0 0.0
        %1504 = vmatprep.subr.mxu0 0.0
        %1505 = vmatpush1.msra.mxu0 0.0
        %1506 = vmatprep.subr.mxu0 0.0
        %1507 = vmatpush1.msra.mxu0 0.0
        %1508 = vmatprep.subr.mxu0 0.0
        %1509 = vmatpush1.msra.mxu0 0.0
        %1510 = vmatprep.subr.mxu0 0.0
        %1511 = vmatpush1.msra.mxu0 0.0
        %1512 = vmatprep.subr.mxu0 0.0
        %1513 = vmatpush1.msra.mxu0 0.0
        %1514 = vmatprep.subr.mxu0 0.0
        %1515 = vmatpush1.msra.mxu0 0.0
        %1516 = vmatprep.subr.mxu0 0.0
        %1517 = vmatpush1.msra.mxu0 0.0
        %1518 = vmatprep.subr.mxu0 0.0
        %1519 = vmatpush1.msra.mxu0 0.0
        %1520 = vmatprep.subr.mxu0 0.0
        %1521 = vmatpush1.msra.mxu0 0.0
        %1522 = vmatprep.subr.mxu0 0.0
        %1523 = vmatpush1.msra.mxu0 0.0
        %1524 = vmatprep.subr.mxu0 0.0
        %1525 = vmatpush1.msra.mxu0 0.0
        %1526 = vmatprep.subr.mxu0 0.0
        %1527 = vmatpush1.msra.mxu0 0.0
        %1528 = vmatprep.subr.mxu0 0.0
        %1529 = vmatpush1.msra.mxu0 0.0
        %1530 = vmatprep.mubr.f32.mxu0 0.0
        %1531 = vmatmul.mubr.f32.gmra.mrb[0].mxu0 %v1464
        %v1532 = vpop.f32.mrb[0].mxu0
        %v1533 = vadd.f32 0.0, %v1532
        %v1534 = vpop.f32.mrb[0].mxu0
        %1535 = vdwg.mxu0
        %1536 = vrot.lane.b32.xlu0 %v1111, 96
        %v1537 = vpop.permute.xlu0 %1536
        %1538 = vrot.lane.b32.xlu0 %v1113, 96
        %v1539 = vpop.permute.xlu0 %1538
        %v1540 = vsel %vm1212, %v1537, 0
        %v1542 = vsel %vm1212, %v1539, 0
        %1544 = vmatprep.subr.mxu0 0.0
        %1545 = vmatpush1.xpose.msra.mxu0 %v1542
        %1546 = vmatprep.subr.mxu0 0.0
        %1547 = vmatpush1.xpose.msra.mxu0 0.0
        %1548 = vmatprep.subr.mxu0 0.0
        %1549 = vmatpush1.xpose.msra.mxu0 0.0
        %1550 = vmatprep.subr.mxu0 0.0
        %1551 = vmatpush1.xpose.msra.mxu0 0.0
        %1552 = vmatprep.subr.mxu0 0.0
        %1553 = vmatpush1.xpose.msra.mxu0 0.0
        %1554 = vmatprep.subr.mxu0 0.0
        %1555 = vmatpush1.xpose.msra.mxu0 0.0
        %1556 = vmatprep.subr.mxu0 0.0
        %1557 = vmatpush1.xpose.msra.mxu0 0.0
        %1558 = vmatprep.subr.mxu0 0.0
        %1559 = vmatpush1.xpose.msra.mxu0 0.0
        %1560 = vmatprep.subr.mxu0 0.0
        %1561 = vmatpush1.xpose.msra.mxu0 0.0
        %1562 = vmatprep.subr.mxu0 0.0
        %1563 = vmatpush1.xpose.msra.mxu0 0.0
        %1564 = vmatprep.subr.mxu0 0.0
        %1565 = vmatpush1.xpose.msra.mxu0 0.0
        %1566 = vmatprep.subr.mxu0 0.0
        %1567 = vmatpush1.xpose.msra.mxu0 0.0
        %1568 = vmatprep.subr.mxu0 0.0
        %1569 = vmatpush1.xpose.msra.mxu0 0.0
        %1570 = vmatprep.subr.mxu0 0.0
        %1571 = vmatpush1.xpose.msra.mxu0 0.0
        %1572 = vmatprep.subr.mxu0 0.0
        %1573 = vmatpush1.xpose.msra.mxu0 0.0
        %1574 = vmatprep.subr.mxu0 0.0
        %1575 = vmatpush1.xpose.msra.mxu0 0.0
        %1576 = vmatprep.subr.mxu0 0.0
        %1577 = vmatpush1.xpose.msra.mxu0 0.0
        %1578 = vmatprep.subr.mxu0 0.0
        %1579 = vmatpush1.xpose.msra.mxu0 0.0
        %1580 = vmatprep.subr.mxu0 0.0
        %1581 = vmatpush1.xpose.msra.mxu0 0.0
        %1582 = vmatprep.subr.mxu0 0.0
        %1583 = vmatpush1.xpose.msra.mxu0 0.0
        %1584 = vmatprep.subr.mxu0 0.0
        %1585 = vmatpush1.xpose.msra.mxu0 0.0
        %1586 = vmatprep.subr.mxu0 0.0
        %1587 = vmatpush1.xpose.msra.mxu0 0.0
        %1588 = vmatprep.subr.mxu0 0.0
        %1589 = vmatpush1.xpose.msra.mxu0 0.0
        %1590 = vmatprep.subr.mxu0 0.0
        %1591 = vmatpush1.xpose.msra.mxu0 0.0
        %1592 = vmatprep.subr.mxu0 0.0
        %1593 = vmatpush1.xpose.msra.mxu0 0.0
        %1594 = vmatprep.subr.mxu0 0.0
        %1595 = vmatpush1.xpose.msra.mxu0 0.0
        %1596 = vmatprep.subr.mxu0 0.0
        %1597 = vmatpush1.xpose.msra.mxu0 0.0
        %1598 = vmatprep.subr.mxu0 0.0
        %1599 = vmatpush1.xpose.msra.mxu0 0.0
        %1600 = vmatprep.subr.mxu0 0.0
        %1601 = vmatpush1.xpose.msra.mxu0 0.0
        %1602 = vmatprep.subr.mxu0 0.0
        %1603 = vmatpush1.xpose.msra.mxu0 0.0
        %1604 = vmatprep.subr.mxu0 0.0
        %1605 = vmatpush1.xpose.msra.mxu0 0.0
        %1606 = vmatprep.subr.mxu0 0.0
        %1607 = vmatpush1.xpose.msra.mxu0 0.0
        %1608 = vmatprep.mubr.f32.mxu0 0.0
        %1609 = vmatmul.mubr.f32.gmra.mrb[0].mxu0 %v1540
        %v1610 = vpop.f32.mrb[0].mxu0
        %v1611 = vadd.f32 0.0, %v1610
        %v1612 = vpop.f32.mrb[0].mxu0
        %1613 = vdwg.mxu0
        %1614 = vrot.lane.b32.xlu0 %v1117, 96
        %v1615 = vpop.permute.xlu0 %1614
        %1616 = vrot.lane.b32.xlu0 %v1119, 96
        %v1617 = vpop.permute.xlu0 %1616
        %v1618 = vsel %vm1212, %v1615, 0
        %v1620 = vsel %vm1212, %v1617, 0
        %1622 = vmatprep.subr.mxu0 0.0
        %1623 = vmatpush1.xpose.msra.mxu0 %v1620
        %1624 = vmatprep.subr.mxu0 0.0
        %1625 = vmatpush1.xpose.msra.mxu0 0.0
        %1626 = vmatprep.subr.mxu0 0.0
        %1627 = vmatpush1.xpose.msra.mxu0 0.0
        %1628 = vmatprep.subr.mxu0 0.0
        %1629 = vmatpush1.xpose.msra.mxu0 0.0
        %1630 = vmatprep.subr.mxu0 0.0
        %1631 = vmatpush1.xpose.msra.mxu0 0.0
        %1632 = vmatprep.subr.mxu0 0.0
        %1633 = vmatpush1.xpose.msra.mxu0 0.0
        %1634 = vmatprep.subr.mxu0 0.0
        %1635 = vmatpush1.xpose.msra.mxu0 0.0
        %1636 = vmatprep.subr.mxu0 0.0
        %1637 = vmatpush1.xpose.msra.mxu0 0.0
        %1638 = vmatprep.subr.mxu0 0.0
        %1639 = vmatpush1.xpose.msra.mxu0 0.0
        %1640 = vmatprep.subr.mxu0 0.0
        %1641 = vmatpush1.xpose.msra.mxu0 0.0
        %1642 = vmatprep.subr.mxu0 0.0
        %1643 = vmatpush1.xpose.msra.mxu0 0.0
        %1644 = vmatprep.subr.mxu0 0.0
        %1645 = vmatpush1.xpose.msra.mxu0 0.0
        %1646 = vmatprep.subr.mxu0 0.0
        %1647 = vmatpush1.xpose.msra.mxu0 0.0
        %1648 = vmatprep.subr.mxu0 0.0
        %1649 = vmatpush1.xpose.msra.mxu0 0.0
        %1650 = vmatprep.subr.mxu0 0.0
        %1651 = vmatpush1.xpose.msra.mxu0 0.0
        %1652 = vmatprep.subr.mxu0 0.0
        %1653 = vmatpush1.xpose.msra.mxu0 0.0
        %1654 = vmatprep.subr.mxu0 0.0
        %1655 = vmatpush1.xpose.msra.mxu0 0.0
        %1656 = vmatprep.subr.mxu0 0.0
        %1657 = vmatpush1.xpose.msra.mxu0 0.0
        %1658 = vmatprep.subr.mxu0 0.0
        %1659 = vmatpush1.xpose.msra.mxu0 0.0
        %1660 = vmatprep.subr.mxu0 0.0
        %1661 = vmatpush1.xpose.msra.mxu0 0.0
        %1662 = vmatprep.subr.mxu0 0.0
        %1663 = vmatpush1.xpose.msra.mxu0 0.0
        %1664 = vmatprep.subr.mxu0 0.0
        %1665 = vmatpush1.xpose.msra.mxu0 0.0
        %1666 = vmatprep.subr.mxu0 0.0
        %1667 = vmatpush1.xpose.msra.mxu0 0.0
        %1668 = vmatprep.subr.mxu0 0.0
        %1669 = vmatpush1.xpose.msra.mxu0 0.0
        %1670 = vmatprep.subr.mxu0 0.0
        %1671 = vmatpush1.xpose.msra.mxu0 0.0
        %1672 = vmatprep.subr.mxu0 0.0
        %1673 = vmatpush1.xpose.msra.mxu0 0.0
        %1674 = vmatprep.subr.mxu0 0.0
        %1675 = vmatpush1.xpose.msra.mxu0 0.0
        %1676 = vmatprep.subr.mxu0 0.0
        %1677 = vmatpush1.xpose.msra.mxu0 0.0
        %1678 = vmatprep.subr.mxu0 0.0
        %1679 = vmatpush1.xpose.msra.mxu0 0.0
        %1680 = vmatprep.subr.mxu0 0.0
        %1681 = vmatpush1.xpose.msra.mxu0 0.0
        %1682 = vmatprep.subr.mxu0 0.0
        %1683 = vmatpush1.xpose.msra.mxu0 0.0
        %1684 = vmatprep.subr.mxu0 0.0
        %1685 = vmatpush1.xpose.msra.mxu0 0.0
        %1686 = vmatprep.mubr.f32.mxu0 0.0
        %1687 = vmatmul.mubr.f32.gmra.mrb[0].mxu0 %v1618
        %v1688 = vpop.f32.mrb[0].mxu0
        %v1689 = vadd.f32 0.0, %v1688
        %v1690 = vpop.f32.mrb[0].mxu0
        %1691 = vdwg.mxu0
        %v1692 = vmul.f32 %v1611, 0.17677669
        %v1693 = vmul.f32 %v1689, 0.17677669
        %v1694 = vsel %vm1367, %v1692, -inf
        %1695 = vmax.xlane.f32.xlu0 %v1694
        %v1696 = vpop.xlane.xlu0 %1695
        %v1697 = vsel %vm1367, %v1693, -inf
        %1698 = vmax.xlane.f32.xlu0 %v1697
        %v1699 = vpop.xlane.xlu0 %1698
        %v1700 = vsub.f32 %v1692, %v1696
        %v1701 = vsub.f32 %v1693, %v1699
        %v1702 = vmul.f32 %v1700, 1.442695
        %v1703 = vpow.pop %v1702
        %v1704 = vmul.f32 %v1701, 1.442695
        %v1705 = vpow.pop %v1704
        %v1706 = vsel %vm1367, %v1703, 0.0
        %1707 = vadd.xlane.f32.xlu0 %v1706
        %v1708 = vpop.xlane.xlu0 %1707
        %v1709 = vsel %vm1367, %v1705, 0.0
        %1710 = vadd.xlane.f32.xlu0 %v1709
        %v1711 = vpop.xlane.xlu0 %1710
        %v1712 = vrcp.pop %v1708
        %v1713 = vmul.f32 %v1703, %v1712
        %v1714 = vrcp.pop %v1711
        %v1715 = vmul.f32 %v1705, %v1714
        %1717 = vrot.lane.b32.xlu0 %v1188, 96
        %v1718 = vpop.permute.xlu0 %1717
        %v1721 = vsel %vm1367, %v1713, 0
        %1723 = vmatprep.subr.mxu0 0.0
        %1724 = vmatpush1.msra.mxu0 %v1718
        %1725 = vmatprep.subr.mxu0 0.0
        %1726 = vmatpush1.msra.mxu0 0.0
        %1727 = vmatprep.subr.mxu0 0.0
        %1728 = vmatpush1.msra.mxu0 0.0
        %1729 = vmatprep.subr.mxu0 0.0
        %1730 = vmatpush1.msra.mxu0 0.0
        %1731 = vmatprep.subr.mxu0 0.0
        %1732 = vmatpush1.msra.mxu0 0.0
        %1733 = vmatprep.subr.mxu0 0.0
        %1734 = vmatpush1.msra.mxu0 0.0
        %1735 = vmatprep.subr.mxu0 0.0
        %1736 = vmatpush1.msra.mxu0 0.0
        %1737 = vmatprep.subr.mxu0 0.0
        %1738 = vmatpush1.msra.mxu0 0.0
        %1739 = vmatprep.subr.mxu0 0.0
        %1740 = vmatpush1.msra.mxu0 0.0
        %1741 = vmatprep.subr.mxu0 0.0
        %1742 = vmatpush1.msra.mxu0 0.0
        %1743 = vmatprep.subr.mxu0 0.0
        %1744 = vmatpush1.msra.mxu0 0.0
        %1745 = vmatprep.subr.mxu0 0.0
        %1746 = vmatpush1.msra.mxu0 0.0
        %1747 = vmatprep.subr.mxu0 0.0
        %1748 = vmatpush1.msra.mxu0 0.0
        %1749 = vmatprep.subr.mxu0 0.0
        %1750 = vmatpush1.msra.mxu0 0.0
        %1751 = vmatprep.subr.mxu0 0.0
        %1752 = vmatpush1.msra.mxu0 0.0
        %1753 = vmatprep.subr.mxu0 0.0
        %1754 = vmatpush1.msra.mxu0 0.0
        %1755 = vmatprep.subr.mxu0 0.0
        %1756 = vmatpush1.msra.mxu0 0.0
        %1757 = vmatprep.subr.mxu0 0.0
        %1758 = vmatpush1.msra.mxu0 0.0
        %1759 = vmatprep.subr.mxu0 0.0
        %1760 = vmatpush1.msra.mxu0 0.0
        %1761 = vmatprep.subr.mxu0 0.0
        %1762 = vmatpush1.msra.mxu0 0.0
        %1763 = vmatprep.subr.mxu0 0.0
        %1764 = vmatpush1.msra.mxu0 0.0
        %1765 = vmatprep.subr.mxu0 0.0
        %1766 = vmatpush1.msra.mxu0 0.0
        %1767 = vmatprep.subr.mxu0 0.0
        %1768 = vmatpush1.msra.mxu0 0.0
        %1769 = vmatprep.subr.mxu0 0.0
        %1770 = vmatpush1.msra.mxu0 0.0
        %1771 = vmatprep.subr.mxu0 0.0
        %1772 = vmatpush1.msra.mxu0 0.0
        %1773 = vmatprep.subr.mxu0 0.0
        %1774 = vmatpush1.msra.mxu0 0.0
        %1775 = vmatprep.subr.mxu0 0.0
        %1776 = vmatpush1.msra.mxu0 0.0
        %1777 = vmatprep.subr.mxu0 0.0
        %1778 = vmatpush1.msra.mxu0 0.0
        %1779 = vmatprep.subr.mxu0 0.0
        %1780 = vmatpush1.msra.mxu0 0.0
        %1781 = vmatprep.subr.mxu0 0.0
        %1782 = vmatpush1.msra.mxu0 0.0
        %1783 = vmatprep.subr.mxu0 0.0
        %1784 = vmatpush1.msra.mxu0 0.0
        %1785 = vmatprep.subr.mxu0 0.0
        %1786 = vmatpush1.msra.mxu0 0.0
        %1787 = vmatprep.mubr.f32.mxu0 0.0
        %1788 = vmatmul.mubr.f32.gmra.mrb[0].mxu0 %v1721
        %v1789 = vpop.f32.mrb[0].mxu0
        %v1790 = vadd.f32 0.0, %v1789
        %v1791 = vpop.f32.mrb[0].mxu0
        %1792 = vdwg.mxu0
        %1794 = vrot.lane.b32.xlu0 %v1193, 96
        %v1795 = vpop.permute.xlu0 %1794
        %v1798 = vsel %vm1367, %v1715, 0
        %1800 = vmatprep.subr.mxu0 0.0
        %1801 = vmatpush1.msra.mxu0 %v1795
        %1802 = vmatprep.subr.mxu0 0.0
        %1803 = vmatpush1.msra.mxu0 0.0
        %1804 = vmatprep.subr.mxu0 0.0
        %1805 = vmatpush1.msra.mxu0 0.0
        %1806 = vmatprep.subr.mxu0 0.0
        %1807 = vmatpush1.msra.mxu0 0.0
        %1808 = vmatprep.subr.mxu0 0.0
        %1809 = vmatpush1.msra.mxu0 0.0
        %1810 = vmatprep.subr.mxu0 0.0
        %1811 = vmatpush1.msra.mxu0 0.0
        %1812 = vmatprep.subr.mxu0 0.0
        %1813 = vmatpush1.msra.mxu0 0.0
        %1814 = vmatprep.subr.mxu0 0.0
        %1815 = vmatpush1.msra.mxu0 0.0
        %1816 = vmatprep.subr.mxu0 0.0
        %1817 = vmatpush1.msra.mxu0 0.0
        %1818 = vmatprep.subr.mxu0 0.0
        %1819 = vmatpush1.msra.mxu0 0.0
        %1820 = vmatprep.subr.mxu0 0.0
        %1821 = vmatpush1.msra.mxu0 0.0
        %1822 = vmatprep.subr.mxu0 0.0
        %1823 = vmatpush1.msra.mxu0 0.0
        %1824 = vmatprep.subr.mxu0 0.0
        %1825 = vmatpush1.msra.mxu0 0.0
        %1826 = vmatprep.subr.mxu0 0.0
        %1827 = vmatpush1.msra.mxu0 0.0
        %1828 = vmatprep.subr.mxu0 0.0
        %1829 = vmatpush1.msra.mxu0 0.0
        %1830 = vmatprep.subr.mxu0 0.0
        %1831 = vmatpush1.msra.mxu0 0.0
        %1832 = vmatprep.subr.mxu0 0.0
        %1833 = vmatpush1.msra.mxu0 0.0
        %1834 = vmatprep.subr.mxu0 0.0
        %1835 = vmatpush1.msra.mxu0 0.0
        %1836 = vmatprep.subr.mxu0 0.0
        %1837 = vmatpush1.msra.mxu0 0.0
        %1838 = vmatprep.subr.mxu0 0.0
        %1839 = vmatpush1.msra.mxu0 0.0
        %1840 = vmatprep.subr.mxu0 0.0
        %1841 = vmatpush1.msra.mxu0 0.0
        %1842 = vmatprep.subr.mxu0 0.0
        %1843 = vmatpush1.msra.mxu0 0.0
        %1844 = vmatprep.subr.mxu0 0.0
        %1845 = vmatpush1.msra.mxu0 0.0
        %1846 = vmatprep.subr.mxu0 0.0
        %1847 = vmatpush1.msra.mxu0 0.0
        %1848 = vmatprep.subr.mxu0 0.0
        %1849 = vmatpush1.msra.mxu0 0.0
        %1850 = vmatprep.subr.mxu0 0.0
        %1851 = vmatpush1.msra.mxu0 0.0
        %1852 = vmatprep.subr.mxu0 0.0
        %1853 = vmatpush1.msra.mxu0 0.0
        %1854 = vmatprep.subr.mxu0 0.0
        %1855 = vmatpush1.msra.mxu0 0.0
        %1856 = vmatprep.subr.mxu0 0.0
        %1857 = vmatpush1.msra.mxu0 0.0
        %1858 = vmatprep.subr.mxu0 0.0
        %1859 = vmatpush1.msra.mxu0 0.0
        %1860 = vmatprep.subr.mxu0 0.0
        %1861 = vmatpush1.msra.mxu0 0.0
        %1862 = vmatprep.subr.mxu0 0.0
        %1863 = vmatpush1.msra.mxu0 0.0
        %1864 = vmatprep.mubr.f32.mxu0 0.0
        %1865 = vmatmul.mubr.f32.gmra.mrb[0].mxu0 %v1798
        %v1866 = vpop.f32.mrb[0].mxu0
        %v1867 = vadd.f32 0.0, %v1866
        %v1868 = vpop.f32.mrb[0].mxu0
        %1869 = vdwg.mxu0
        %v1871 = vsel %vm1212, %v1790, 0
        %v1874 = vsel %vm1212, %v1867, 0
        %1876 = vmatprep.subr.mxu0 0.0
        %1877 = vmatpush1.msra.mxu0 %v1200
        %1878 = vmatprep.subr.mxu0 0.0
        %1879 = vmatpush1.msra.mxu0 %v1201
        %1880 = vmatprep.subr.mxu0 0.0
        %1881 = vmatpush1.msra.mxu0 %v1202
        %1882 = vmatprep.subr.mxu0 0.0
        %1883 = vmatpush1.msra.mxu0 %v1203
        %1884 = vmatprep.subr.mxu0 0.0
        %1885 = vmatpush1.msra.mxu0 0.0
        %1886 = vmatprep.subr.mxu0 0.0
        %1887 = vmatpush1.msra.mxu0 0.0
        %1888 = vmatprep.subr.mxu0 0.0
        %1889 = vmatpush1.msra.mxu0 0.0
        %1890 = vmatprep.subr.mxu0 0.0
        %1891 = vmatpush1.msra.mxu0 0.0
        %1892 = vmatprep.subr.mxu0 0.0
        %1893 = vmatpush1.msra.mxu0 0.0
        %1894 = vmatprep.subr.mxu0 0.0
        %1895 = vmatpush1.msra.mxu0 0.0
        %1896 = vmatprep.subr.mxu0 0.0
        %1897 = vmatpush1.msra.mxu0 0.0
        %1898 = vmatprep.subr.mxu0 0.0
        %1899 = vmatpush1.msra.mxu0 0.0
        %1900 = vmatprep.subr.mxu0 0.0
        %1901 = vmatpush1.msra.mxu0 0.0
        %1902 = vmatprep.subr.mxu0 0.0
        %1903 = vmatpush1.msra.mxu0 0.0
        %1904 = vmatprep.subr.mxu0 0.0
        %1905 = vmatpush1.msra.mxu0 0.0
        %1906 = vmatprep.subr.mxu0 0.0
        %1907 = vmatpush1.msra.mxu0 0.0
        %1908 = vmatprep.subr.mxu0 0.0
        %1909 = vmatpush1.msra.mxu0 0.0
        %1910 = vmatprep.subr.mxu0 0.0
        %1911 = vmatpush1.msra.mxu0 0.0
        %1912 = vmatprep.subr.mxu0 0.0
        %1913 = vmatpush1.msra.mxu0 0.0
        %1914 = vmatprep.subr.mxu0 0.0
        %1915 = vmatpush1.msra.mxu0 0.0
        %1916 = vmatprep.subr.mxu0 0.0
        %1917 = vmatpush1.msra.mxu0 0.0
        %1918 = vmatprep.subr.mxu0 0.0
        %1919 = vmatpush1.msra.mxu0 0.0
        %1920 = vmatprep.subr.mxu0 0.0
        %1921 = vmatpush1.msra.mxu0 0.0
        %1922 = vmatprep.subr.mxu0 0.0
        %1923 = vmatpush1.msra.mxu0 0.0
        %1924 = vmatprep.subr.mxu0 0.0
        %1925 = vmatpush1.msra.mxu0 0.0
        %1926 = vmatprep.subr.mxu0 0.0
        %1927 = vmatpush1.msra.mxu0 0.0
        %1928 = vmatprep.subr.mxu0 0.0
        %1929 = vmatpush1.msra.mxu0 0.0
        %1930 = vmatprep.subr.mxu0 0.0
        %1931 = vmatpush1.msra.mxu0 0.0
        %1932 = vmatprep.subr.mxu0 0.0
        %1933 = vmatpush1.msra.mxu0 0.0
        %1934 = vmatprep.subr.mxu0 0.0
        %1935 = vmatpush1.msra.mxu0 0.0
        %1936 = vmatprep.subr.mxu0 0.0
        %1937 = vmatpush1.msra.mxu0 0.0
        %1938 = vmatprep.subr.mxu0 0.0
        %1939 = vmatpush1.msra.mxu0 0.0
        %1940 = vmatprep.mubr.f32.mxu0 0.0
        %1941 = vmatmul.mubr.f32.gmra.mrb[0].mxu0 %v1871
        %v1942 = vpop.f32.mrb[0].mxu0
        %v1943 = vadd.f32 0.0, %v1942
        %v1944 = vpop.f32.mrb[0].mxu0
        %1945 = vmatprep.mubr.f32.mxu0 0.0
        %1946 = vmatmul.mubr.f32.gmra.mrb[0].mxu0 %v1874
        %v1947 = vpop.f32.mrb[0].mxu0
        %v1948 = vadd.f32 0.0, %v1947
        %v1949 = vpop.f32.mrb[0].mxu0
        %1950 = vdwg.mxu0
        %v1952 = vsel %vm1212, %v1460, 0
        %v1955 = vsel %vm1212, %v1533, 0
        %1957 = vmatprep.subr.mxu0 0.0
        %1958 = vmatpush1.msra.mxu0 %v1196
        %1959 = vmatprep.subr.mxu0 0.0
        %1960 = vmatpush1.msra.mxu0 %v1197
        %1961 = vmatprep.subr.mxu0 0.0
        %1962 = vmatpush1.msra.mxu0 %v1198
        %1963 = vmatprep.subr.mxu0 0.0
        %1964 = vmatpush1.msra.mxu0 %v1199
        %1965 = vmatprep.subr.mxu0 0.0
        %1966 = vmatpush1.msra.mxu0 0.0
        %1967 = vmatprep.subr.mxu0 0.0
        %1968 = vmatpush1.msra.mxu0 0.0
        %1969 = vmatprep.subr.mxu0 0.0
        %1970 = vmatpush1.msra.mxu0 0.0
        %1971 = vmatprep.subr.mxu0 0.0
        %1972 = vmatpush1.msra.mxu0 0.0
        %1973 = vmatprep.subr.mxu0 0.0
        %1974 = vmatpush1.msra.mxu0 0.0
        %1975 = vmatprep.subr.mxu0 0.0
        %1976 = vmatpush1.msra.mxu0 0.0
        %1977 = vmatprep.subr.mxu0 0.0
        %1978 = vmatpush1.msra.mxu0 0.0
        %1979 = vmatprep.subr.mxu0 0.0
        %1980 = vmatpush1.msra.mxu0 0.0
        %1981 = vmatprep.subr.mxu0 0.0
        %1982 = vmatpush1.msra.mxu0 0.0
        %1983 = vmatprep.subr.mxu0 0.0
        %1984 = vmatpush1.msra.mxu0 0.0
        %1985 = vmatprep.subr.mxu0 0.0
        %1986 = vmatpush1.msra.mxu0 0.0
        %1987 = vmatprep.subr.mxu0 0.0
        %1988 = vmatpush1.msra.mxu0 0.0
        %1989 = vmatprep.subr.mxu0 0.0
        %1990 = vmatpush1.msra.mxu0 0.0
        %1991 = vmatprep.subr.mxu0 0.0
        %1992 = vmatpush1.msra.mxu0 0.0
        %1993 = vmatprep.subr.mxu0 0.0
        %1994 = vmatpush1.msra.mxu0 0.0
        %1995 = vmatprep.subr.mxu0 0.0
        %1996 = vmatpush1.msra.mxu0 0.0
        %1997 = vmatprep.subr.mxu0 0.0
        %1998 = vmatpush1.msra.mxu0 0.0
        %1999 = vmatprep.subr.mxu0 0.0
        %2000 = vmatpush1.msra.mxu0 0.0
        %2001 = vmatprep.subr.mxu0 0.0
        %2002 = vmatpush1.msra.mxu0 0.0
        %2003 = vmatprep.subr.mxu0 0.0
        %2004 = vmatpush1.msra.mxu0 0.0
        %2005 = vmatprep.subr.mxu0 0.0
        %2006 = vmatpush1.msra.mxu0 0.0
        %2007 = vmatprep.subr.mxu0 0.0
        %2008 = vmatpush1.msra.mxu0 0.0
        %2009 = vmatprep.subr.mxu0 0.0
        %2010 = vmatpush1.msra.mxu0 0.0
        %2011 = vmatprep.subr.mxu0 0.0
        %2012 = vmatpush1.msra.mxu0 0.0
        %2013 = vmatprep.subr.mxu0 0.0
        %2014 = vmatpush1.msra.mxu0 0.0
        %2015 = vmatprep.subr.mxu0 0.0
        %2016 = vmatpush1.msra.mxu0 0.0
        %2017 = vmatprep.subr.mxu0 0.0
        %2018 = vmatpush1.msra.mxu0 0.0
        %2019 = vmatprep.subr.mxu0 0.0
        %2020 = vmatpush1.msra.mxu0 0.0
        %2021 = vmatprep.mubr.f32.mxu0 0.0
        %2022 = vmatmul.mubr.f32.gmra.mrb[0].mxu0 %v1952
        %v2023 = vpop.f32.mrb[0].mxu0
        %v2024 = vadd.f32 %v1943, %v2023
        %v2025 = vpop.f32.mrb[0].mxu0
        %2026 = vmatprep.mubr.f32.mxu0 0.0
        %2027 = vmatmul.mubr.f32.gmra.mrb[0].mxu0 %v1955
        %v2028 = vpop.f32.mrb[0].mxu0
        %v2029 = vadd.f32 %v1948, %v2028
        %v2030 = vpop.f32.mrb[0].mxu0
        %2031 = vdwg.mxu0
        %2032 = vrot.lane.b32.xlu0 %v1111, 64
        %v2033 = vpop.permute.xlu0 %2032
        %2034 = vrot.lane.b32.xlu0 %v1113, 64
        %v2035 = vpop.permute.xlu0 %2034
        %v2036 = vsel %vm1212, %v2033, 0
        %v2038 = vsel %vm1212, %v2035, 0
        %2040 = vmatprep.subr.mxu0 0.0
        %2041 = vmatpush1.xpose.msra.mxu0 %v2038
        %2042 = vmatprep.subr.mxu0 0.0
        %2043 = vmatpush1.xpose.msra.mxu0 0.0
        %2044 = vmatprep.subr.mxu0 0.0
        %2045 = vmatpush1.xpose.msra.mxu0 0.0
        %2046 = vmatprep.subr.mxu0 0.0
        %2047 = vmatpush1.xpose.msra.mxu0 0.0
        %2048 = vmatprep.subr.mxu0 0.0
        %2049 = vmatpush1.xpose.msra.mxu0 0.0
        %2050 = vmatprep.subr.mxu0 0.0
        %2051 = vmatpush1.xpose.msra.mxu0 0.0
        %2052 = vmatprep.subr.mxu0 0.0
        %2053 = vmatpush1.xpose.msra.mxu0 0.0
        %2054 = vmatprep.subr.mxu0 0.0
        %2055 = vmatpush1.xpose.msra.mxu0 0.0
        %2056 = vmatprep.subr.mxu0 0.0
        %2057 = vmatpush1.xpose.msra.mxu0 0.0
        %2058 = vmatprep.subr.mxu0 0.0
        %2059 = vmatpush1.xpose.msra.mxu0 0.0
        %2060 = vmatprep.subr.mxu0 0.0
        %2061 = vmatpush1.xpose.msra.mxu0 0.0
        %2062 = vmatprep.subr.mxu0 0.0
        %2063 = vmatpush1.xpose.msra.mxu0 0.0
        %2064 = vmatprep.subr.mxu0 0.0
        %2065 = vmatpush1.xpose.msra.mxu0 0.0
        %2066 = vmatprep.subr.mxu0 0.0
        %2067 = vmatpush1.xpose.msra.mxu0 0.0
        %2068 = vmatprep.subr.mxu0 0.0
        %2069 = vmatpush1.xpose.msra.mxu0 0.0
        %2070 = vmatprep.subr.mxu0 0.0
        %2071 = vmatpush1.xpose.msra.mxu0 0.0
        %2072 = vmatprep.subr.mxu0 0.0
        %2073 = vmatpush1.xpose.msra.mxu0 0.0
        %2074 = vmatprep.subr.mxu0 0.0
        %2075 = vmatpush1.xpose.msra.mxu0 0.0
        %2076 = vmatprep.subr.mxu0 0.0
        %2077 = vmatpush1.xpose.msra.mxu0 0.0
        %2078 = vmatprep.subr.mxu0 0.0
        %2079 = vmatpush1.xpose.msra.mxu0 0.0
        %2080 = vmatprep.subr.mxu0 0.0
        %2081 = vmatpush1.xpose.msra.mxu0 0.0
        %2082 = vmatprep.subr.mxu0 0.0
        %2083 = vmatpush1.xpose.msra.mxu0 0.0
        %2084 = vmatprep.subr.mxu0 0.0
        %2085 = vmatpush1.xpose.msra.mxu0 0.0
        %2086 = vmatprep.subr.mxu0 0.0
        %2087 = vmatpush1.xpose.msra.mxu0 0.0
        %2088 = vmatprep.subr.mxu0 0.0
        %2089 = vmatpush1.xpose.msra.mxu0 0.0
        %2090 = vmatprep.subr.mxu0 0.0
        %2091 = vmatpush1.xpose.msra.mxu0 0.0
        %2092 = vmatprep.subr.mxu0 0.0
        %2093 = vmatpush1.xpose.msra.mxu0 0.0
        %2094 = vmatprep.subr.mxu0 0.0
        %2095 = vmatpush1.xpose.msra.mxu0 0.0
        %2096 = vmatprep.subr.mxu0 0.0
        %2097 = vmatpush1.xpose.msra.mxu0 0.0
        %2098 = vmatprep.subr.mxu0 0.0
        %2099 = vmatpush1.xpose.msra.mxu0 0.0
        %2100 = vmatprep.subr.mxu0 0.0
        %2101 = vmatpush1.xpose.msra.mxu0 0.0
        %2102 = vmatprep.subr.mxu0 0.0
        %2103 = vmatpush1.xpose.msra.mxu0 0.0
        %2104 = vmatprep.mubr.f32.mxu0 0.0
        %2105 = vmatmul.mubr.f32.gmra.mrb[0].mxu0 %v2036
        %v2106 = vpop.f32.mrb[0].mxu0
        %v2107 = vadd.f32 0.0, %v2106
        %v2108 = vpop.f32.mrb[0].mxu0
        %2109 = vdwg.mxu0
        %2110 = vrot.lane.b32.xlu0 %v1117, 64
        %v2111 = vpop.permute.xlu0 %2110
        %2112 = vrot.lane.b32.xlu0 %v1119, 64
        %v2113 = vpop.permute.xlu0 %2112
        %v2114 = vsel %vm1212, %v2111, 0
        %v2116 = vsel %vm1212, %v2113, 0
        %2118 = vmatprep.subr.mxu0 0.0
        %2119 = vmatpush1.xpose.msra.mxu0 %v2116
        %2120 = vmatprep.subr.mxu0 0.0
        %2121 = vmatpush1.xpose.msra.mxu0 0.0
        %2122 = vmatprep.subr.mxu0 0.0
        %2123 = vmatpush1.xpose.msra.mxu0 0.0
        %2124 = vmatprep.subr.mxu0 0.0
        %2125 = vmatpush1.xpose.msra.mxu0 0.0
        %2126 = vmatprep.subr.mxu0 0.0
        %2127 = vmatpush1.xpose.msra.mxu0 0.0
        %2128 = vmatprep.subr.mxu0 0.0
        %2129 = vmatpush1.xpose.msra.mxu0 0.0
        %2130 = vmatprep.subr.mxu0 0.0
        %2131 = vmatpush1.xpose.msra.mxu0 0.0
        %2132 = vmatprep.subr.mxu0 0.0
        %2133 = vmatpush1.xpose.msra.mxu0 0.0
        %2134 = vmatprep.subr.mxu0 0.0
        %2135 = vmatpush1.xpose.msra.mxu0 0.0
        %2136 = vmatprep.subr.mxu0 0.0
        %2137 = vmatpush1.xpose.msra.mxu0 0.0
        %2138 = vmatprep.subr.mxu0 0.0
        %2139 = vmatpush1.xpose.msra.mxu0 0.0
        %2140 = vmatprep.subr.mxu0 0.0
        %2141 = vmatpush1.xpose.msra.mxu0 0.0
        %2142 = vmatprep.subr.mxu0 0.0
        %2143 = vmatpush1.xpose.msra.mxu0 0.0
        %2144 = vmatprep.subr.mxu0 0.0
        %2145 = vmatpush1.xpose.msra.mxu0 0.0
        %2146 = vmatprep.subr.mxu0 0.0
        %2147 = vmatpush1.xpose.msra.mxu0 0.0
        %2148 = vmatprep.subr.mxu0 0.0
        %2149 = vmatpush1.xpose.msra.mxu0 0.0
        %2150 = vmatprep.subr.mxu0 0.0
        %2151 = vmatpush1.xpose.msra.mxu0 0.0
        %2152 = vmatprep.subr.mxu0 0.0
        %2153 = vmatpush1.xpose.msra.mxu0 0.0
        %2154 = vmatprep.subr.mxu0 0.0
        %2155 = vmatpush1.xpose.msra.mxu0 0.0
        %2156 = vmatprep.subr.mxu0 0.0
        %2157 = vmatpush1.xpose.msra.mxu0 0.0
        %2158 = vmatprep.subr.mxu0 0.0
        %2159 = vmatpush1.xpose.msra.mxu0 0.0
        %2160 = vmatprep.subr.mxu0 0.0
        %2161 = vmatpush1.xpose.msra.mxu0 0.0
        %2162 = vmatprep.subr.mxu0 0.0
        %2163 = vmatpush1.xpose.msra.mxu0 0.0
        %2164 = vmatprep.subr.mxu0 0.0
        %2165 = vmatpush1.xpose.msra.mxu0 0.0
        %2166 = vmatprep.subr.mxu0 0.0
        %2167 = vmatpush1.xpose.msra.mxu0 0.0
        %2168 = vmatprep.subr.mxu0 0.0
        %2169 = vmatpush1.xpose.msra.mxu0 0.0
        %2170 = vmatprep.subr.mxu0 0.0
        %2171 = vmatpush1.xpose.msra.mxu0 0.0
        %2172 = vmatprep.subr.mxu0 0.0
        %2173 = vmatpush1.xpose.msra.mxu0 0.0
        %2174 = vmatprep.subr.mxu0 0.0
        %2175 = vmatpush1.xpose.msra.mxu0 0.0
        %2176 = vmatprep.subr.mxu0 0.0
        %2177 = vmatpush1.xpose.msra.mxu0 0.0
        %2178 = vmatprep.subr.mxu0 0.0
        %2179 = vmatpush1.xpose.msra.mxu0 0.0
        %2180 = vmatprep.subr.mxu0 0.0
        %2181 = vmatpush1.xpose.msra.mxu0 0.0
        %2182 = vmatprep.mubr.f32.mxu0 0.0
        %2183 = vmatmul.mubr.f32.gmra.mrb[0].mxu0 %v2114
        %v2184 = vpop.f32.mrb[0].mxu0
        %v2185 = vadd.f32 0.0, %v2184
        %v2186 = vpop.f32.mrb[0].mxu0
        %2187 = vdwg.mxu0
        %v2188 = vmul.f32 %v2107, 0.17677669
        %v2189 = vmul.f32 %v2185, 0.17677669
        %v2190 = vsel %vm1367, %v2188, -inf
        %2191 = vmax.xlane.f32.xlu0 %v2190
        %v2192 = vpop.xlane.xlu0 %2191
        %v2193 = vsel %vm1367, %v2189, -inf
        %2194 = vmax.xlane.f32.xlu0 %v2193
        %v2195 = vpop.xlane.xlu0 %2194
        %v2196 = vsub.f32 %v2188, %v2192
        %v2197 = vsub.f32 %v2189, %v2195
        %v2198 = vmul.f32 %v2196, 1.442695
        %v2199 = vpow.pop %v2198
        %v2200 = vmul.f32 %v2197, 1.442695
        %v2201 = vpow.pop %v2200
        %v2202 = vsel %vm1367, %v2199, 0.0
        %2203 = vadd.xlane.f32.xlu0 %v2202
        %v2204 = vpop.xlane.xlu0 %2203
        %v2205 = vsel %vm1367, %v2201, 0.0
        %2206 = vadd.xlane.f32.xlu0 %v2205
        %v2207 = vpop.xlane.xlu0 %2206
        %v2208 = vrcp.pop %v2204
        %v2209 = vmul.f32 %v2199, %v2208
        %v2210 = vrcp.pop %v2207
        %v2211 = vmul.f32 %v2201, %v2210
        %2212 = vrot.lane.b32.xlu0 %v1188, 64
        %v2213 = vpop.permute.xlu0 %2212
        %v2216 = vsel %vm1367, %v2209, 0
        %2218 = vmatprep.subr.mxu0 0.0
        %2219 = vmatpush1.msra.mxu0 %v2213
        %2220 = vmatprep.subr.mxu0 0.0
        %2221 = vmatpush1.msra.mxu0 0.0
        %2222 = vmatprep.subr.mxu0 0.0
        %2223 = vmatpush1.msra.mxu0 0.0
        %2224 = vmatprep.subr.mxu0 0.0
        %2225 = vmatpush1.msra.mxu0 0.0
        %2226 = vmatprep.subr.mxu0 0.0
        %2227 = vmatpush1.msra.mxu0 0.0
        %2228 = vmatprep.subr.mxu0 0.0
        %2229 = vmatpush1.msra.mxu0 0.0
        %2230 = vmatprep.subr.mxu0 0.0
        %2231 = vmatpush1.msra.mxu0 0.0
        %2232 = vmatprep.subr.mxu0 0.0
        %2233 = vmatpush1.msra.mxu0 0.0
        %2234 = vmatprep.subr.mxu0 0.0
        %2235 = vmatpush1.msra.mxu0 0.0
        %2236 = vmatprep.subr.mxu0 0.0
        %2237 = vmatpush1.msra.mxu0 0.0
        %2238 = vmatprep.subr.mxu0 0.0
        %2239 = vmatpush1.msra.mxu0 0.0
        %2240 = vmatprep.subr.mxu0 0.0
        %2241 = vmatpush1.msra.mxu0 0.0
        %2242 = vmatprep.subr.mxu0 0.0
        %2243 = vmatpush1.msra.mxu0 0.0
        %2244 = vmatprep.subr.mxu0 0.0
        %2245 = vmatpush1.msra.mxu0 0.0
        %2246 = vmatprep.subr.mxu0 0.0
        %2247 = vmatpush1.msra.mxu0 0.0
        %2248 = vmatprep.subr.mxu0 0.0
        %2249 = vmatpush1.msra.mxu0 0.0
        %2250 = vmatprep.subr.mxu0 0.0
        %2251 = vmatpush1.msra.mxu0 0.0
        %2252 = vmatprep.subr.mxu0 0.0
        %2253 = vmatpush1.msra.mxu0 0.0
        %2254 = vmatprep.subr.mxu0 0.0
        %2255 = vmatpush1.msra.mxu0 0.0
        %2256 = vmatprep.subr.mxu0 0.0
        %2257 = vmatpush1.msra.mxu0 0.0
        %2258 = vmatprep.subr.mxu0 0.0
        %2259 = vmatpush1.msra.mxu0 0.0
        %2260 = vmatprep.subr.mxu0 0.0
        %2261 = vmatpush1.msra.mxu0 0.0
        %2262 = vmatprep.subr.mxu0 0.0
        %2263 = vmatpush1.msra.mxu0 0.0
        %2264 = vmatprep.subr.mxu0 0.0
        %2265 = vmatpush1.msra.mxu0 0.0
        %2266 = vmatprep.subr.mxu0 0.0
        %2267 = vmatpush1.msra.mxu0 0.0
        %2268 = vmatprep.subr.mxu0 0.0
        %2269 = vmatpush1.msra.mxu0 0.0
        %2270 = vmatprep.subr.mxu0 0.0
        %2271 = vmatpush1.msra.mxu0 0.0
        %2272 = vmatprep.subr.mxu0 0.0
        %2273 = vmatpush1.msra.mxu0 0.0
        %2274 = vmatprep.subr.mxu0 0.0
        %2275 = vmatpush1.msra.mxu0 0.0
        %2276 = vmatprep.subr.mxu0 0.0
        %2277 = vmatpush1.msra.mxu0 0.0
        %2278 = vmatprep.subr.mxu0 0.0
        %2279 = vmatpush1.msra.mxu0 0.0
        %2280 = vmatprep.subr.mxu0 0.0
        %2281 = vmatpush1.msra.mxu0 0.0
        %2282 = vmatprep.mubr.f32.mxu0 0.0
        %2283 = vmatmul.mubr.f32.gmra.mrb[0].mxu0 %v2216
        %v2284 = vpop.f32.mrb[0].mxu0
        %v2285 = vadd.f32 0.0, %v2284
        %v2286 = vpop.f32.mrb[0].mxu0
        %2287 = vdwg.mxu0
        %2288 = vrot.lane.b32.xlu0 %v1193, 64
        %v2289 = vpop.permute.xlu0 %2288
        %v2292 = vsel %vm1367, %v2211, 0
        %2294 = vmatprep.subr.mxu0 0.0
        %2295 = vmatpush1.msra.mxu0 %v2289
        %2296 = vmatprep.subr.mxu0 0.0
        %2297 = vmatpush1.msra.mxu0 0.0
        %2298 = vmatprep.subr.mxu0 0.0
        %2299 = vmatpush1.msra.mxu0 0.0
        %2300 = vmatprep.subr.mxu0 0.0
        %2301 = vmatpush1.msra.mxu0 0.0
        %2302 = vmatprep.subr.mxu0 0.0
        %2303 = vmatpush1.msra.mxu0 0.0
        %2304 = vmatprep.subr.mxu0 0.0
        %2305 = vmatpush1.msra.mxu0 0.0
        %2306 = vmatprep.subr.mxu0 0.0
        %2307 = vmatpush1.msra.mxu0 0.0
        %2308 = vmatprep.subr.mxu0 0.0
        %2309 = vmatpush1.msra.mxu0 0.0
        %2310 = vmatprep.subr.mxu0 0.0
        %2311 = vmatpush1.msra.mxu0 0.0
        %2312 = vmatprep.subr.mxu0 0.0
        %2313 = vmatpush1.msra.mxu0 0.0
        %2314 = vmatprep.subr.mxu0 0.0
        %2315 = vmatpush1.msra.mxu0 0.0
        %2316 = vmatprep.subr.mxu0 0.0
        %2317 = vmatpush1.msra.mxu0 0.0
        %2318 = vmatprep.subr.mxu0 0.0
        %2319 = vmatpush1.msra.mxu0 0.0
        %2320 = vmatprep.subr.mxu0 0.0
        %2321 = vmatpush1.msra.mxu0 0.0
        %2322 = vmatprep.subr.mxu0 0.0
        %2323 = vmatpush1.msra.mxu0 0.0
        %2324 = vmatprep.subr.mxu0 0.0
        %2325 = vmatpush1.msra.mxu0 0.0
        %2326 = vmatprep.subr.mxu0 0.0
        %2327 = vmatpush1.msra.mxu0 0.0
        %2328 = vmatprep.subr.mxu0 0.0
        %2329 = vmatpush1.msra.mxu0 0.0
        %2330 = vmatprep.subr.mxu0 0.0
        %2331 = vmatpush1.msra.mxu0 0.0
        %2332 = vmatprep.subr.mxu0 0.0
        %2333 = vmatpush1.msra.mxu0 0.0
        %2334 = vmatprep.subr.mxu0 0.0
        %2335 = vmatpush1.msra.mxu0 0.0
        %2336 = vmatprep.subr.mxu0 0.0
        %2337 = vmatpush1.msra.mxu0 0.0
        %2338 = vmatprep.subr.mxu0 0.0
        %2339 = vmatpush1.msra.mxu0 0.0
        %2340 = vmatprep.subr.mxu0 0.0
        %2341 = vmatpush1.msra.mxu0 0.0
        %2342 = vmatprep.subr.mxu0 0.0
        %2343 = vmatpush1.msra.mxu0 0.0
        %2344 = vmatprep.subr.mxu0 0.0
        %2345 = vmatpush1.msra.mxu0 0.0
        %2346 = vmatprep.subr.mxu0 0.0
        %2347 = vmatpush1.msra.mxu0 0.0
        %2348 = vmatprep.subr.mxu0 0.0
        %2349 = vmatpush1.msra.mxu0 0.0
        %2350 = vmatprep.subr.mxu0 0.0
        %2351 = vmatpush1.msra.mxu0 0.0
        %2352 = vmatprep.subr.mxu0 0.0
        %2353 = vmatpush1.msra.mxu0 0.0
        %2354 = vmatprep.subr.mxu0 0.0
        %2355 = vmatpush1.msra.mxu0 0.0
        %2356 = vmatprep.subr.mxu0 0.0
        %2357 = vmatpush1.msra.mxu0 0.0
        %2358 = vmatprep.mubr.f32.mxu0 0.0
        %2359 = vmatmul.mubr.f32.gmra.mrb[0].mxu0 %v2292
        %v2360 = vpop.f32.mrb[0].mxu0
        %v2361 = vadd.f32 0.0, %v2360
        %v2362 = vpop.f32.mrb[0].mxu0
        %2363 = vdwg.mxu0
        %v2365 = vsel %vm1212, %v2285, 0
        %v2368 = vsel %vm1212, %v2361, 0
        %2370 = vmatprep.subr.mxu0 0.0
        %2371 = vmatpush1.msra.mxu0 %v1204
        %2372 = vmatprep.subr.mxu0 0.0
        %2373 = vmatpush1.msra.mxu0 %v1205
        %2374 = vmatprep.subr.mxu0 0.0
        %2375 = vmatpush1.msra.mxu0 %v1206
        %2376 = vmatprep.subr.mxu0 0.0
        %2377 = vmatpush1.msra.mxu0 %v1207
        %2378 = vmatprep.subr.mxu0 0.0
        %2379 = vmatpush1.msra.mxu0 0.0
        %2380 = vmatprep.subr.mxu0 0.0
        %2381 = vmatpush1.msra.mxu0 0.0
        %2382 = vmatprep.subr.mxu0 0.0
        %2383 = vmatpush1.msra.mxu0 0.0
        %2384 = vmatprep.subr.mxu0 0.0
        %2385 = vmatpush1.msra.mxu0 0.0
        %2386 = vmatprep.subr.mxu0 0.0
        %2387 = vmatpush1.msra.mxu0 0.0
        %2388 = vmatprep.subr.mxu0 0.0
        %2389 = vmatpush1.msra.mxu0 0.0
        %2390 = vmatprep.subr.mxu0 0.0
        %2391 = vmatpush1.msra.mxu0 0.0
        %2392 = vmatprep.subr.mxu0 0.0
        %2393 = vmatpush1.msra.mxu0 0.0
        %2394 = vmatprep.subr.mxu0 0.0
        %2395 = vmatpush1.msra.mxu0 0.0
        %2396 = vmatprep.subr.mxu0 0.0
        %2397 = vmatpush1.msra.mxu0 0.0
        %2398 = vmatprep.subr.mxu0 0.0
        %2399 = vmatpush1.msra.mxu0 0.0
        %2400 = vmatprep.subr.mxu0 0.0
        %2401 = vmatpush1.msra.mxu0 0.0
        %2402 = vmatprep.subr.mxu0 0.0
        %2403 = vmatpush1.msra.mxu0 0.0
        %2404 = vmatprep.subr.mxu0 0.0
        %2405 = vmatpush1.msra.mxu0 0.0
        %2406 = vmatprep.subr.mxu0 0.0
        %2407 = vmatpush1.msra.mxu0 0.0
        %2408 = vmatprep.subr.mxu0 0.0
        %2409 = vmatpush1.msra.mxu0 0.0
        %2410 = vmatprep.subr.mxu0 0.0
        %2411 = vmatpush1.msra.mxu0 0.0
        %2412 = vmatprep.subr.mxu0 0.0
        %2413 = vmatpush1.msra.mxu0 0.0
        %2414 = vmatprep.subr.mxu0 0.0
        %2415 = vmatpush1.msra.mxu0 0.0
        %2416 = vmatprep.subr.mxu0 0.0
        %2417 = vmatpush1.msra.mxu0 0.0
        %2418 = vmatprep.subr.mxu0 0.0
        %2419 = vmatpush1.msra.mxu0 0.0
        %2420 = vmatprep.subr.mxu0 0.0
        %2421 = vmatpush1.msra.mxu0 0.0
        %2422 = vmatprep.subr.mxu0 0.0
        %2423 = vmatpush1.msra.mxu0 0.0
        %2424 = vmatprep.subr.mxu0 0.0
        %2425 = vmatpush1.msra.mxu0 0.0
        %2426 = vmatprep.subr.mxu0 0.0
        %2427 = vmatpush1.msra.mxu0 0.0
        %2428 = vmatprep.subr.mxu0 0.0
        %2429 = vmatpush1.msra.mxu0 0.0
        %2430 = vmatprep.subr.mxu0 0.0
        %2431 = vmatpush1.msra.mxu0 0.0
        %2432 = vmatprep.subr.mxu0 0.0
        %2433 = vmatpush1.msra.mxu0 0.0
        %2434 = vmatprep.mubr.f32.mxu0 0.0
        %2435 = vmatmul.mubr.f32.gmra.mrb[0].mxu0 %v2365
        %v2436 = vpop.f32.mrb[0].mxu0
        %v2437 = vadd.f32 0.0, %v2436
        %v2438 = vpop.f32.mrb[0].mxu0
        %2439 = vmatprep.mubr.f32.mxu0 0.0
        %2440 = vmatmul.mubr.f32.gmra.mrb[0].mxu0 %v2368
        %v2441 = vpop.f32.mrb[0].mxu0
        %v2442 = vadd.f32 0.0, %v2441
        %v2443 = vpop.f32.mrb[0].mxu0
        %2444 = vdwg.mxu0
        %v2445 = vadd.f32 %v2024, %v2437
        %v2446 = vadd.f32 %v2029, %v2442
        %2447 = vrot.lane.b32.xlu0 %v1111, 32
        %v2448 = vpop.permute.xlu0 %2447
        %2449 = vrot.lane.b32.xlu0 %v1113, 32
        %v2450 = vpop.permute.xlu0 %2449
        %v2451 = vsel %vm1212, %v2448, 0
        %v2453 = vsel %vm1212, %v2450, 0
        %2455 = vmatprep.subr.mxu0 0.0
        %2456 = vmatpush1.xpose.msra.mxu0 %v2453
        %2457 = vmatprep.subr.mxu0 0.0
        %2458 = vmatpush1.xpose.msra.mxu0 0.0
        %2459 = vmatprep.subr.mxu0 0.0
        %2460 = vmatpush1.xpose.msra.mxu0 0.0
        %2461 = vmatprep.subr.mxu0 0.0
        %2462 = vmatpush1.xpose.msra.mxu0 0.0
        %2463 = vmatprep.subr.mxu0 0.0
        %2464 = vmatpush1.xpose.msra.mxu0 0.0
        %2465 = vmatprep.subr.mxu0 0.0
        %2466 = vmatpush1.xpose.msra.mxu0 0.0
        %2467 = vmatprep.subr.mxu0 0.0
        %2468 = vmatpush1.xpose.msra.mxu0 0.0
        %2469 = vmatprep.subr.mxu0 0.0
        %2470 = vmatpush1.xpose.msra.mxu0 0.0
        %2471 = vmatprep.subr.mxu0 0.0
        %2472 = vmatpush1.xpose.msra.mxu0 0.0
        %2473 = vmatprep.subr.mxu0 0.0
        %2474 = vmatpush1.xpose.msra.mxu0 0.0
        %2475 = vmatprep.subr.mxu0 0.0
        %2476 = vmatpush1.xpose.msra.mxu0 0.0
        %2477 = vmatprep.subr.mxu0 0.0
        %2478 = vmatpush1.xpose.msra.mxu0 0.0
        %2479 = vmatprep.subr.mxu0 0.0
        %2480 = vmatpush1.xpose.msra.mxu0 0.0
        %2481 = vmatprep.subr.mxu0 0.0
        %2482 = vmatpush1.xpose.msra.mxu0 0.0
        %2483 = vmatprep.subr.mxu0 0.0
        %2484 = vmatpush1.xpose.msra.mxu0 0.0
        %2485 = vmatprep.subr.mxu0 0.0
        %2486 = vmatpush1.xpose.msra.mxu0 0.0
        %2487 = vmatprep.subr.mxu0 0.0
        %2488 = vmatpush1.xpose.msra.mxu0 0.0
        %2489 = vmatprep.subr.mxu0 0.0
        %2490 = vmatpush1.xpose.msra.mxu0 0.0
        %2491 = vmatprep.subr.mxu0 0.0
        %2492 = vmatpush1.xpose.msra.mxu0 0.0
        %2493 = vmatprep.subr.mxu0 0.0
        %2494 = vmatpush1.xpose.msra.mxu0 0.0
        %2495 = vmatprep.subr.mxu0 0.0
        %2496 = vmatpush1.xpose.msra.mxu0 0.0
        %2497 = vmatprep.subr.mxu0 0.0
        %2498 = vmatpush1.xpose.msra.mxu0 0.0
        %2499 = vmatprep.subr.mxu0 0.0
        %2500 = vmatpush1.xpose.msra.mxu0 0.0
        %2501 = vmatprep.subr.mxu0 0.0
        %2502 = vmatpush1.xpose.msra.mxu0 0.0
        %2503 = vmatprep.subr.mxu0 0.0
        %2504 = vmatpush1.xpose.msra.mxu0 0.0
        %2505 = vmatprep.subr.mxu0 0.0
        %2506 = vmatpush1.xpose.msra.mxu0 0.0
        %2507 = vmatprep.subr.mxu0 0.0
        %2508 = vmatpush1.xpose.msra.mxu0 0.0
        %2509 = vmatprep.subr.mxu0 0.0
        %2510 = vmatpush1.xpose.msra.mxu0 0.0
        %2511 = vmatprep.subr.mxu0 0.0
        %2512 = vmatpush1.xpose.msra.mxu0 0.0
        %2513 = vmatprep.subr.mxu0 0.0
        %2514 = vmatpush1.xpose.msra.mxu0 0.0
        %2515 = vmatprep.subr.mxu0 0.0
        %2516 = vmatpush1.xpose.msra.mxu0 0.0
        %2517 = vmatprep.subr.mxu0 0.0
        %2518 = vmatpush1.xpose.msra.mxu0 0.0
        %2519 = vmatprep.mubr.f32.mxu0 0.0
        %2520 = vmatmul.mubr.f32.gmra.mrb[0].mxu0 %v2451
        %v2521 = vpop.f32.mrb[0].mxu0
        %v2522 = vadd.f32 0.0, %v2521
        %v2523 = vpop.f32.mrb[0].mxu0
        %2524 = vdwg.mxu0
        %2525 = vrot.lane.b32.xlu0 %v1117, 32
        %v2526 = vpop.permute.xlu0 %2525
        %2527 = vrot.lane.b32.xlu0 %v1119, 32
        %v2528 = vpop.permute.xlu0 %2527
        %v2529 = vsel %vm1212, %v2526, 0
        %v2531 = vsel %vm1212, %v2528, 0
        %2533 = vmatprep.subr.mxu0 0.0
        %2534 = vmatpush1.xpose.msra.mxu0 %v2531
        %2535 = vmatprep.subr.mxu0 0.0
        %2536 = vmatpush1.xpose.msra.mxu0 0.0
        %2537 = vmatprep.subr.mxu0 0.0
        %2538 = vmatpush1.xpose.msra.mxu0 0.0
        %2539 = vmatprep.subr.mxu0 0.0
        %2540 = vmatpush1.xpose.msra.mxu0 0.0
        %2541 = vmatprep.subr.mxu0 0.0
        %2542 = vmatpush1.xpose.msra.mxu0 0.0
        %2543 = vmatprep.subr.mxu0 0.0
        %2544 = vmatpush1.xpose.msra.mxu0 0.0
        %2545 = vmatprep.subr.mxu0 0.0
        %2546 = vmatpush1.xpose.msra.mxu0 0.0
        %2547 = vmatprep.subr.mxu0 0.0
        %2548 = vmatpush1.xpose.msra.mxu0 0.0
        %2549 = vmatprep.subr.mxu0 0.0
        %2550 = vmatpush1.xpose.msra.mxu0 0.0
        %2551 = vmatprep.subr.mxu0 0.0
        %2552 = vmatpush1.xpose.msra.mxu0 0.0
        %2553 = vmatprep.subr.mxu0 0.0
        %2554 = vmatpush1.xpose.msra.mxu0 0.0
        %2555 = vmatprep.subr.mxu0 0.0
        %2556 = vmatpush1.xpose.msra.mxu0 0.0
        %2557 = vmatprep.subr.mxu0 0.0
        %2558 = vmatpush1.xpose.msra.mxu0 0.0
        %2559 = vmatprep.subr.mxu0 0.0
        %2560 = vmatpush1.xpose.msra.mxu0 0.0
        %2561 = vmatprep.subr.mxu0 0.0
        %2562 = vmatpush1.xpose.msra.mxu0 0.0
        %2563 = vmatprep.subr.mxu0 0.0
        %2564 = vmatpush1.xpose.msra.mxu0 0.0
        %2565 = vmatprep.subr.mxu0 0.0
        %2566 = vmatpush1.xpose.msra.mxu0 0.0
        %2567 = vmatprep.subr.mxu0 0.0
        %2568 = vmatpush1.xpose.msra.mxu0 0.0
        %2569 = vmatprep.subr.mxu0 0.0
        %2570 = vmatpush1.xpose.msra.mxu0 0.0
        %2571 = vmatprep.subr.mxu0 0.0
        %2572 = vmatpush1.xpose.msra.mxu0 0.0
        %2573 = vmatprep.subr.mxu0 0.0
        %2574 = vmatpush1.xpose.msra.mxu0 0.0
        %2575 = vmatprep.subr.mxu0 0.0
        %2576 = vmatpush1.xpose.msra.mxu0 0.0
        %2577 = vmatprep.subr.mxu0 0.0
        %2578 = vmatpush1.xpose.msra.mxu0 0.0
        %2579 = vmatprep.subr.mxu0 0.0
        %2580 = vmatpush1.xpose.msra.mxu0 0.0
        %2581 = vmatprep.subr.mxu0 0.0
        %2582 = vmatpush1.xpose.msra.mxu0 0.0
        %2583 = vmatprep.subr.mxu0 0.0
        %2584 = vmatpush1.xpose.msra.mxu0 0.0
        %2585 = vmatprep.subr.mxu0 0.0
        %2586 = vmatpush1.xpose.msra.mxu0 0.0
        %2587 = vmatprep.subr.mxu0 0.0
        %2588 = vmatpush1.xpose.msra.mxu0 0.0
        %2589 = vmatprep.subr.mxu0 0.0
        %2590 = vmatpush1.xpose.msra.mxu0 0.0
        %2591 = vmatprep.subr.mxu0 0.0
        %2592 = vmatpush1.xpose.msra.mxu0 0.0
        %2593 = vmatprep.subr.mxu0 0.0
        %2594 = vmatpush1.xpose.msra.mxu0 0.0
        %2595 = vmatprep.subr.mxu0 0.0
        %2596 = vmatpush1.xpose.msra.mxu0 0.0
        %2597 = vmatprep.mubr.f32.mxu0 0.0
        %2598 = vmatmul.mubr.f32.gmra.mrb[0].mxu0 %v2529
        %v2599 = vpop.f32.mrb[0].mxu0
        %v2600 = vadd.f32 0.0, %v2599
        %v2601 = vpop.f32.mrb[0].mxu0
        %2602 = vdwg.mxu0
        %v2603 = vmul.f32 %v2522, 0.17677669
        %v2604 = vmul.f32 %v2600, 0.17677669
        %v2605 = vsel %vm1367, %v2603, -inf
        %2606 = vmax.xlane.f32.xlu0 %v2605
        %v2607 = vpop.xlane.xlu0 %2606
        %v2608 = vsel %vm1367, %v2604, -inf
        %2609 = vmax.xlane.f32.xlu0 %v2608
        %v2610 = vpop.xlane.xlu0 %2609
        %v2611 = vsub.f32 %v2603, %v2607
        %v2612 = vsub.f32 %v2604, %v2610
        %v2613 = vmul.f32 %v2611, 1.442695
        %v2614 = vpow.pop %v2613
        %v2615 = vmul.f32 %v2612, 1.442695
        %v2616 = vpow.pop %v2615
        %v2617 = vsel %vm1367, %v2614, 0.0
        %2618 = vadd.xlane.f32.xlu0 %v2617
        %v2619 = vpop.xlane.xlu0 %2618
        %v2620 = vsel %vm1367, %v2616, 0.0
        %2621 = vadd.xlane.f32.xlu0 %v2620
        %v2622 = vpop.xlane.xlu0 %2621
        %v2623 = vrcp.pop %v2619
        %v2624 = vmul.f32 %v2614, %v2623
        %v2625 = vrcp.pop %v2622
        %v2626 = vmul.f32 %v2616, %v2625
        %2627 = vrot.lane.b32.xlu0 %v1188, 32
        %v2628 = vpop.permute.xlu0 %2627
        %v2631 = vsel %vm1367, %v2624, 0
        %2633 = vmatprep.subr.mxu0 0.0
        %2634 = vmatpush1.msra.mxu0 %v2628
        %2635 = vmatprep.subr.mxu0 0.0
        %2636 = vmatpush1.msra.mxu0 0.0
        %2637 = vmatprep.subr.mxu0 0.0
        %2638 = vmatpush1.msra.mxu0 0.0
        %2639 = vmatprep.subr.mxu0 0.0
        %2640 = vmatpush1.msra.mxu0 0.0
        %2641 = vmatprep.subr.mxu0 0.0
        %2642 = vmatpush1.msra.mxu0 0.0
        %2643 = vmatprep.subr.mxu0 0.0
        %2644 = vmatpush1.msra.mxu0 0.0
        %2645 = vmatprep.subr.mxu0 0.0
        %2646 = vmatpush1.msra.mxu0 0.0
        %2647 = vmatprep.subr.mxu0 0.0
        %2648 = vmatpush1.msra.mxu0 0.0
        %2649 = vmatprep.subr.mxu0 0.0
        %2650 = vmatpush1.msra.mxu0 0.0
        %2651 = vmatprep.subr.mxu0 0.0
        %2652 = vmatpush1.msra.mxu0 0.0
        %2653 = vmatprep.subr.mxu0 0.0
        %2654 = vmatpush1.msra.mxu0 0.0
        %2655 = vmatprep.subr.mxu0 0.0
        %2656 = vmatpush1.msra.mxu0 0.0
        %2657 = vmatprep.subr.mxu0 0.0
        %2658 = vmatpush1.msra.mxu0 0.0
        %2659 = vmatprep.subr.mxu0 0.0
        %2660 = vmatpush1.msra.mxu0 0.0
        %2661 = vmatprep.subr.mxu0 0.0
        %2662 = vmatpush1.msra.mxu0 0.0
        %2663 = vmatprep.subr.mxu0 0.0
        %2664 = vmatpush1.msra.mxu0 0.0
        %2665 = vmatprep.subr.mxu0 0.0
        %2666 = vmatpush1.msra.mxu0 0.0
        %2667 = vmatprep.subr.mxu0 0.0
        %2668 = vmatpush1.msra.mxu0 0.0
        %2669 = vmatprep.subr.mxu0 0.0
        %2670 = vmatpush1.msra.mxu0 0.0
        %2671 = vmatprep.subr.mxu0 0.0
        %2672 = vmatpush1.msra.mxu0 0.0
        %2673 = vmatprep.subr.mxu0 0.0
        %2674 = vmatpush1.msra.mxu0 0.0
        %2675 = vmatprep.subr.mxu0 0.0
        %2676 = vmatpush1.msra.mxu0 0.0
        %2677 = vmatprep.subr.mxu0 0.0
        %2678 = vmatpush1.msra.mxu0 0.0
        %2679 = vmatprep.subr.mxu0 0.0
        %2680 = vmatpush1.msra.mxu0 0.0
        %2681 = vmatprep.subr.mxu0 0.0
        %2682 = vmatpush1.msra.mxu0 0.0
        %2683 = vmatprep.subr.mxu0 0.0
        %2684 = vmatpush1.msra.mxu0 0.0
        %2685 = vmatprep.subr.mxu0 0.0
        %2686 = vmatpush1.msra.mxu0 0.0
        %2687 = vmatprep.subr.mxu0 0.0
        %2688 = vmatpush1.msra.mxu0 0.0
        %2689 = vmatprep.subr.mxu0 0.0
        %2690 = vmatpush1.msra.mxu0 0.0
        %2691 = vmatprep.subr.mxu0 0.0
        %2692 = vmatpush1.msra.mxu0 0.0
        %2693 = vmatprep.subr.mxu0 0.0
        %2694 = vmatpush1.msra.mxu0 0.0
        %2695 = vmatprep.subr.mxu0 0.0
        %2696 = vmatpush1.msra.mxu0 0.0
        %2697 = vmatprep.mubr.f32.mxu0 0.0
        %2698 = vmatmul.mubr.f32.gmra.mrb[0].mxu0 %v2631
        %v2699 = vpop.f32.mrb[0].mxu0
        %v2700 = vadd.f32 0.0, %v2699
        %v2701 = vpop.f32.mrb[0].mxu0
        %2702 = vdwg.mxu0
        %2703 = vrot.lane.b32.xlu0 %v1193, 32
        %v2704 = vpop.permute.xlu0 %2703
        %v2707 = vsel %vm1367, %v2626, 0
        %2709 = vmatprep.subr.mxu0 0.0
        %2710 = vmatpush1.msra.mxu0 %v2704
        %2711 = vmatprep.subr.mxu0 0.0
        %2712 = vmatpush1.msra.mxu0 0.0
        %2713 = vmatprep.subr.mxu0 0.0
        %2714 = vmatpush1.msra.mxu0 0.0
        %2715 = vmatprep.subr.mxu0 0.0
        %2716 = vmatpush1.msra.mxu0 0.0
        %2717 = vmatprep.subr.mxu0 0.0
        %2718 = vmatpush1.msra.mxu0 0.0
        %2719 = vmatprep.subr.mxu0 0.0
        %2720 = vmatpush1.msra.mxu0 0.0
        %2721 = vmatprep.subr.mxu0 0.0
        %2722 = vmatpush1.msra.mxu0 0.0
        %2723 = vmatprep.subr.mxu0 0.0
        %2724 = vmatpush1.msra.mxu0 0.0
        %2725 = vmatprep.subr.mxu0 0.0
        %2726 = vmatpush1.msra.mxu0 0.0
        %2727 = vmatprep.subr.mxu0 0.0
        %2728 = vmatpush1.msra.mxu0 0.0
        %2729 = vmatprep.subr.mxu0 0.0
        %2730 = vmatpush1.msra.mxu0 0.0
        %2731 = vmatprep.subr.mxu0 0.0
        %2732 = vmatpush1.msra.mxu0 0.0
        %2733 = vmatprep.subr.mxu0 0.0
        %2734 = vmatpush1.msra.mxu0 0.0
        %2735 = vmatprep.subr.mxu0 0.0
        %2736 = vmatpush1.msra.mxu0 0.0
        %2737 = vmatprep.subr.mxu0 0.0
        %2738 = vmatpush1.msra.mxu0 0.0
        %2739 = vmatprep.subr.mxu0 0.0
        %2740 = vmatpush1.msra.mxu0 0.0
        %2741 = vmatprep.subr.mxu0 0.0
        %2742 = vmatpush1.msra.mxu0 0.0
        %2743 = vmatprep.subr.mxu0 0.0
        %2744 = vmatpush1.msra.mxu0 0.0
        %2745 = vmatprep.subr.mxu0 0.0
        %2746 = vmatpush1.msra.mxu0 0.0
        %2747 = vmatprep.subr.mxu0 0.0
        %2748 = vmatpush1.msra.mxu0 0.0
        %2749 = vmatprep.subr.mxu0 0.0
        %2750 = vmatpush1.msra.mxu0 0.0
        %2751 = vmatprep.subr.mxu0 0.0
        %2752 = vmatpush1.msra.mxu0 0.0
        %2753 = vmatprep.subr.mxu0 0.0
        %2754 = vmatpush1.msra.mxu0 0.0
        %2755 = vmatprep.subr.mxu0 0.0
        %2756 = vmatpush1.msra.mxu0 0.0
        %2757 = vmatprep.subr.mxu0 0.0
        %2758 = vmatpush1.msra.mxu0 0.0
        %2759 = vmatprep.subr.mxu0 0.0
        %2760 = vmatpush1.msra.mxu0 0.0
        %2761 = vmatprep.subr.mxu0 0.0
        %2762 = vmatpush1.msra.mxu0 0.0
        %2763 = vmatprep.subr.mxu0 0.0
        %2764 = vmatpush1.msra.mxu0 0.0
        %2765 = vmatprep.subr.mxu0 0.0
        %2766 = vmatpush1.msra.mxu0 0.0
        %2767 = vmatprep.subr.mxu0 0.0
        %2768 = vmatpush1.msra.mxu0 0.0
        %2769 = vmatprep.subr.mxu0 0.0
        %2770 = vmatpush1.msra.mxu0 0.0
        %2771 = vmatprep.subr.mxu0 0.0
        %2772 = vmatpush1.msra.mxu0 0.0
        %2773 = vmatprep.mubr.f32.mxu0 0.0
        %2774 = vmatmul.mubr.f32.gmra.mrb[0].mxu0 %v2707
        %v2775 = vpop.f32.mrb[0].mxu0
        %v2776 = vadd.f32 0.0, %v2775
        %v2777 = vpop.f32.mrb[0].mxu0
        %2778 = vdwg.mxu0
        %v2780 = vsel %vm1212, %v2700, 0
        %v2783 = vsel %vm1212, %v2776, 0
        %2785 = vmatprep.subr.mxu0 0.0
        %2786 = vmatpush1.msra.mxu0 %v1208
        %2787 = vmatprep.subr.mxu0 0.0
        %2788 = vmatpush1.msra.mxu0 %v1209
        %2789 = vmatprep.subr.mxu0 0.0
        %2790 = vmatpush1.msra.mxu0 %v1210
        %2791 = vmatprep.subr.mxu0 0.0
        %2792 = vmatpush1.msra.mxu0 %v1211
        %2793 = vmatprep.subr.mxu0 0.0
        %2794 = vmatpush1.msra.mxu0 0.0
        %2795 = vmatprep.subr.mxu0 0.0
        %2796 = vmatpush1.msra.mxu0 0.0
        %2797 = vmatprep.subr.mxu0 0.0
        %2798 = vmatpush1.msra.mxu0 0.0
        %2799 = vmatprep.subr.mxu0 0.0
        %2800 = vmatpush1.msra.mxu0 0.0
        %2801 = vmatprep.subr.mxu0 0.0
        %2802 = vmatpush1.msra.mxu0 0.0
        %2803 = vmatprep.subr.mxu0 0.0
        %2804 = vmatpush1.msra.mxu0 0.0
        %2805 = vmatprep.subr.mxu0 0.0
        %2806 = vmatpush1.msra.mxu0 0.0
        %2807 = vmatprep.subr.mxu0 0.0
        %2808 = vmatpush1.msra.mxu0 0.0
        %2809 = vmatprep.subr.mxu0 0.0
        %2810 = vmatpush1.msra.mxu0 0.0
        %2811 = vmatprep.subr.mxu0 0.0
        %2812 = vmatpush1.msra.mxu0 0.0
        %2813 = vmatprep.subr.mxu0 0.0
        %2814 = vmatpush1.msra.mxu0 0.0
        %2815 = vmatprep.subr.mxu0 0.0
        %2816 = vmatpush1.msra.mxu0 0.0
        %2817 = vmatprep.subr.mxu0 0.0
        %2818 = vmatpush1.msra.mxu0 0.0
        %2819 = vmatprep.subr.mxu0 0.0
        %2820 = vmatpush1.msra.mxu0 0.0
        %2821 = vmatprep.subr.mxu0 0.0
        %2822 = vmatpush1.msra.mxu0 0.0
        %2823 = vmatprep.subr.mxu0 0.0
        %2824 = vmatpush1.msra.mxu0 0.0
        %2825 = vmatprep.subr.mxu0 0.0
        %2826 = vmatpush1.msra.mxu0 0.0
        %2827 = vmatprep.subr.mxu0 0.0
        %2828 = vmatpush1.msra.mxu0 0.0
        %2829 = vmatprep.subr.mxu0 0.0
        %2830 = vmatpush1.msra.mxu0 0.0
        %2831 = vmatprep.subr.mxu0 0.0
        %2832 = vmatpush1.msra.mxu0 0.0
        %2833 = vmatprep.subr.mxu0 0.0
        %2834 = vmatpush1.msra.mxu0 0.0
        %2835 = vmatprep.subr.mxu0 0.0
        %2836 = vmatpush1.msra.mxu0 0.0
        %2837 = vmatprep.subr.mxu0 0.0
        %2838 = vmatpush1.msra.mxu0 0.0
        %2839 = vmatprep.subr.mxu0 0.0
        %2840 = vmatpush1.msra.mxu0 0.0
        %2841 = vmatprep.subr.mxu0 0.0
        %2842 = vmatpush1.msra.mxu0 0.0
        %2843 = vmatprep.subr.mxu0 0.0
        %2844 = vmatpush1.msra.mxu0 0.0
        %2845 = vmatprep.subr.mxu0 0.0
        %2846 = vmatpush1.msra.mxu0 0.0
        %2847 = vmatprep.subr.mxu0 0.0
        %2848 = vmatpush1.msra.mxu0 0.0
        %2849 = vmatprep.mubr.f32.mxu0 0.0
        %2850 = vmatmul.mubr.f32.gmra.mrb[0].mxu0 %v2780
        %v2851 = vpop.f32.mrb[0].mxu0
        %v2852 = vadd.f32 0.0, %v2851
        %v2853 = vpop.f32.mrb[0].mxu0
        %2854 = vmatprep.mubr.f32.mxu0 0.0
        %2855 = vmatmul.mubr.f32.gmra.mrb[0].mxu0 %v2783
        %v2856 = vpop.f32.mrb[0].mxu0
        %v2857 = vadd.f32 0.0, %v2856
        %v2858 = vpop.f32.mrb[0].mxu0
        %2859 = vdwg.mxu0
        %v2860 = vadd.f32 %v2445, %v2852
        %v2861 = vadd.f32 %v2446, %v2857
        %v2862 = vld [vmem:[%s850] sm:$0x1]
        %v2864 = vlaneseq
        %v2865 = vshrl.u32 %v2864, 7
        %v2866 = vsub.s32 0, %v2865
        %v2867 = vrot.slane %v2862, %v2866
        %v2869 = vadd.f32 %v2860, %v2867
        %v2870 = vadd.f32 %v2861, %v2867
        %v2871 = vadd.f32 %v977, %v2869
        %v2872 = vadd.f32 %v978, %v2870
        %v2873 = vld [vmem:[%s853] sm:$0x1]
        %v2874 = vld [vmem:[%s856] sm:$0x1]
        %2875 = vadd.xlane.f32.xlu0 %v2871
        %v2876 = vpop.xlane.xlu0 %2875
        %2877 = vadd.xlane.f32.xlu0 %v2872
        %v2878 = vpop.xlane.xlu0 %2877
        %v2879 = vrcp.pop 128.0
        %v2880 = vmul.f32 %v2876, %v2879
        %v2881 = vmul.f32 %v2878, %v2879
        %v2882 = vsub.f32 %v2871, %v2880
        %v2883 = vsub.f32 %v2872, %v2881
        %v2884 = vmul.f32 %v2882, %v2882
        %v2885 = vmul.f32 %v2883, %v2883
        %2886 = vadd.xlane.f32.xlu0 %v2884
        %v2887 = vpop.xlane.xlu0 %2886
        %2888 = vadd.xlane.f32.xlu0 %v2885
        %v2889 = vpop.xlane.xlu0 %2888
        %v2890 = vmul.f32 %v2887, %v2879
        %v2891 = vmul.f32 %v2889, %v2879
        %v2892 = vadd.f32 %v2890, 1e-05
        %v2893 = vadd.f32 %v2891, 1e-05
        %v2894 = vrsqrt.pop %v2892
        %v2895 = vrsqrt.pop %v2893
        %v2896 = vmul.f32 %v2882, %v2894
        %v2897 = vmul.f32 %v2883, %v2895
        %v2899 = vlaneseq
        %v2900 = vshrl.u32 %v2899, 7
        %v2901 = vsub.s32 0, %v2900
        %v2902 = vrot.slane %v2873, %v2901
        %v2904 = vmul.f32 %v2896, %v2902
        %v2905 = vmul.f32 %v2897, %v2902
        %v2907 = vlaneseq
        %v2908 = vshrl.u32 %v2907, 7
        %v2909 = vsub.s32 0, %v2908
        %v2910 = vrot.slane %v2874, %v2909
        %v2912 = vadd.f32 %v2904, %v2910
        %v2913 = vadd.f32 %v2905, %v2910
        %v2914 = vld [vmem:[%s743] sm:$0xff]
        %v2915 = vld [vmem:[%s743 + $0x8] sm:$0xff]
        %v2916 = vld [vmem:[%s743 + $0x10] sm:$0xff]
        %v2917 = vld [vmem:[%s743 + $0x18] sm:$0xff]
        %v2918 = vld [vmem:[%s743 + $0x20] sm:$0xff]
        %v2919 = vld [vmem:[%s743 + $0x28] sm:$0xff]
        %v2920 = vld [vmem:[%s743 + $0x30] sm:$0xff]
        %v2921 = vld [vmem:[%s743 + $0x38] sm:$0xff]
        %v2922 = vld [vmem:[%s743 + $0x40] sm:$0xff]
        %v2923 = vld [vmem:[%s743 + $0x48] sm:$0xff]
        %v2924 = vld [vmem:[%s743 + $0x50] sm:$0xff]
        %v2925 = vld [vmem:[%s743 + $0x58] sm:$0xff]
        %v2926 = vld [vmem:[%s743 + $0x60] sm:$0xff]
        %v2927 = vld [vmem:[%s743 + $0x68] sm:$0xff]
        %v2928 = vld [vmem:[%s743 + $0x70] sm:$0xff]
        %v2929 = vld [vmem:[%s743 + $0x78] sm:$0xff]
        %v2930 = vld [vmem:[%s743 + $0x80] sm:$0xff]
        %v2931 = vld [vmem:[%s743 + $0x88] sm:$0xff]
        %v2932 = vld [vmem:[%s743 + $0x90] sm:$0xff]
        %v2933 = vld [vmem:[%s743 + $0x98] sm:$0xff]
        %v2934 = vld [vmem:[%s743 + $0xa0] sm:$0xff]
        %v2935 = vld [vmem:[%s743 + $0xa8] sm:$0xff]
        %v2936 = vld [vmem:[%s743 + $0xb0] sm:$0xff]
        %v2937 = vld [vmem:[%s743 + $0xb8] sm:$0xff]
        %v2938 = vld [vmem:[%s743 + $0xc0] sm:$0xff]
        %v2939 = vld [vmem:[%s743 + $0xc8] sm:$0xff]
        %v2940 = vld [vmem:[%s743 + $0xd0] sm:$0xff]
        %v2941 = vld [vmem:[%s743 + $0xd8] sm:$0xff]
        %v2942 = vld [vmem:[%s743 + $0xe0] sm:$0xff]
        %v2943 = vld [vmem:[%s743 + $0xe8] sm:$0xff]
        %v2944 = vld [vmem:[%s743 + $0xf0] sm:$0xff]
        %v2945 = vld [vmem:[%s743 + $0xf8] sm:$0xff]
        %v2946 = vld [vmem:[%s860] sm:$0x3]
        %v2948 = vlaneseq
        %v2949 = vshrl.u32 %v2948, 7
        %v2950 = vsub.s32 0, %v2949
        %v2951 = vrot.slane %v2946, %v2950
        %v2952 = vlaneseq
        %v2953 = vshrl.u32 %v2952, 7
        %v2954 = vsub.s32 1, %v2953
        %v2955 = vrot.slane %v2946, %v2954
        %2958 = vmatprep.subr.mxu0 %v2915
        %2959 = vmatpush1.msra.mxu0 %v2914
        %2960 = vmatprep.subr.mxu0 %v2917
        %2961 = vmatpush1.msra.mxu0 %v2916
        %2962 = vmatprep.subr.mxu0 %v2919
        %2963 = vmatpush1.msra.mxu0 %v2918
        %2964 = vmatprep.subr.mxu0 %v2921
        %2965 = vmatpush1.msra.mxu0 %v2920
        %2966 = vmatprep.subr.mxu0 %v2923
        %2967 = vmatpush1.msra.mxu0 %v2922
        %2968 = vmatprep.subr.mxu0 %v2925
        %2969 = vmatpush1.msra.mxu0 %v2924
        %2970 = vmatprep.subr.mxu0 %v2927
        %2971 = vmatpush1.msra.mxu0 %v2926
        %2972 = vmatprep.subr.mxu0 %v2929
        %2973 = vmatpush1.msra.mxu0 %v2928
        %2974 = vmatprep.subr.mxu0 %v2931
        %2975 = vmatpush1.msra.mxu0 %v2930
        %2976 = vmatprep.subr.mxu0 %v2933
        %2977 = vmatpush1.msra.mxu0 %v2932
        %2978 = vmatprep.subr.mxu0 %v2935
        %2979 = vmatpush1.msra.mxu0 %v2934
        %2980 = vmatprep.subr.mxu0 %v2937
        %2981 = vmatpush1.msra.mxu0 %v2936
        %2982 = vmatprep.subr.mxu0 %v2939
        %2983 = vmatpush1.msra.mxu0 %v2938
        %2984 = vmatprep.subr.mxu0 %v2941
        %2985 = vmatpush1.msra.mxu0 %v2940
        %2986 = vmatprep.subr.mxu0 %v2943
        %2987 = vmatpush1.msra.mxu0 %v2942
        %2988 = vmatprep.subr.mxu0 %v2945
        %2989 = vmatpush1.msra.mxu0 %v2944
        %2990 = vmatprep.subr.mxu0 0.0
        %2991 = vmatpush1.msra.mxu0 0.0
        %2992 = vmatprep.subr.mxu0 0.0
        %2993 = vmatpush1.msra.mxu0 0.0
        %2994 = vmatprep.subr.mxu0 0.0
        %2995 = vmatpush1.msra.mxu0 0.0
        %2996 = vmatprep.subr.mxu0 0.0
        %2997 = vmatpush1.msra.mxu0 0.0
        %2998 = vmatprep.subr.mxu0 0.0
        %2999 = vmatpush1.msra.mxu0 0.0
        %3000 = vmatprep.subr.mxu0 0.0
        %3001 = vmatpush1.msra.mxu0 0.0
        %3002 = vmatprep.subr.mxu0 0.0
        %3003 = vmatpush1.msra.mxu0 0.0
        %3004 = vmatprep.subr.mxu0 0.0
        %3005 = vmatpush1.msra.mxu0 0.0
        %3006 = vmatprep.subr.mxu0 0.0
        %3007 = vmatpush1.msra.mxu0 0.0
        %3008 = vmatprep.subr.mxu0 0.0
        %3009 = vmatpush1.msra.mxu0 0.0
        %3010 = vmatprep.subr.mxu0 0.0
        %3011 = vmatpush1.msra.mxu0 0.0
        %3012 = vmatprep.subr.mxu0 0.0
        %3013 = vmatpush1.msra.mxu0 0.0
        %3014 = vmatprep.subr.mxu0 0.0
        %3015 = vmatpush1.msra.mxu0 0.0
        %3016 = vmatprep.subr.mxu0 0.0
        %3017 = vmatpush1.msra.mxu0 0.0
        %3018 = vmatprep.subr.mxu0 0.0
        %3019 = vmatpush1.msra.mxu0 0.0
        %3020 = vmatprep.subr.mxu0 0.0
        %3021 = vmatpush1.msra.mxu0 0.0
        %3022 = vmatprep.mubr.f32.mxu0 0.0
        %3023 = vmatmul.mubr.f32.gmra.mrb[0].mxu0 %v2912
        %v3024 = vpop.f32.mrb[0].mxu0
        %v3025 = vadd.f32 %v2951, %v3024
        %v3026 = vpop.f32.mrb[0].mxu0
        %v3027 = vadd.f32 %v2955, %v3026
        %3028 = vmatprep.mubr.f32.mxu0 0.0
        %3029 = vmatmul.mubr.f32.gmra.mrb[0].mxu0 %v2913
        %v3030 = vpop.f32.mrb[0].mxu0
        %v3031 = vadd.f32 %v2951, %v3030
        %v3032 = vpop.f32.mrb[0].mxu0
        %v3033 = vadd.f32 %v2955, %v3032
        %3034 = vdwg.mxu0
        %v3035 = vmax.f32 %v3025, 0.0
        %v3036 = vmax.f32 %v3027, 0.0
        %v3037 = vmax.f32 %v3031, 0.0
        %v3038 = vmax.f32 %v3033, 0.0
        %v3039 = vld [vmem:[%s752] sm:$0xff]
        %v3040 = vld [vmem:[%s752 + $0x8] sm:$0xff]
        %v3041 = vld [vmem:[%s752 + $0x10] sm:$0xff]
        %v3042 = vld [vmem:[%s752 + $0x18] sm:$0xff]
        %v3043 = vld [vmem:[%s752 + $0x20] sm:$0xff]
        %v3044 = vld [vmem:[%s752 + $0x28] sm:$0xff]
        %v3045 = vld [vmem:[%s752 + $0x30] sm:$0xff]
        %v3046 = vld [vmem:[%s752 + $0x38] sm:$0xff]
        %v3047 = vld [vmem:[%s752 + $0x40] sm:$0xff]
        %v3048 = vld [vmem:[%s752 + $0x48] sm:$0xff]
        %v3049 = vld [vmem:[%s752 + $0x50] sm:$0xff]
        %v3050 = vld [vmem:[%s752 + $0x58] sm:$0xff]
        %v3051 = vld [vmem:[%s752 + $0x60] sm:$0xff]
        %v3052 = vld [vmem:[%s752 + $0x68] sm:$0xff]
        %v3053 = vld [vmem:[%s752 + $0x70] sm:$0xff]
        %v3054 = vld [vmem:[%s752 + $0x78] sm:$0xff]
        %v3055 = vld [vmem:[%s752 + $0x80] sm:$0xff]
        %v3056 = vld [vmem:[%s752 + $0x88] sm:$0xff]
        %v3057 = vld [vmem:[%s752 + $0x90] sm:$0xff]
        %v3058 = vld [vmem:[%s752 + $0x98] sm:$0xff]
        %v3059 = vld [vmem:[%s752 + $0xa0] sm:$0xff]
        %v3060 = vld [vmem:[%s752 + $0xa8] sm:$0xff]
        %v3061 = vld [vmem:[%s752 + $0xb0] sm:$0xff]
        %v3062 = vld [vmem:[%s752 + $0xb8] sm:$0xff]
        %v3063 = vld [vmem:[%s752 + $0xc0] sm:$0xff]
        %v3064 = vld [vmem:[%s752 + $0xc8] sm:$0xff]
        %v3065 = vld [vmem:[%s752 + $0xd0] sm:$0xff]
        %v3066 = vld [vmem:[%s752 + $0xd8] sm:$0xff]
        %v3067 = vld [vmem:[%s752 + $0xe0] sm:$0xff]
        %v3068 = vld [vmem:[%s752 + $0xe8] sm:$0xff]
        %v3069 = vld [vmem:[%s752 + $0xf0] sm:$0xff]
        %v3070 = vld [vmem:[%s752 + $0xf8] sm:$0xff]
        %v3071 = vld [vmem:[%s863] sm:$0x1]
        %v3073 = vlaneseq
        %v3074 = vshrl.u32 %v3073, 7
        %v3075 = vsub.s32 0, %v3074
        %v3076 = vrot.slane %v3071, %v3075
        %3078 = vmatprep.subr.mxu0 0.0
        %3079 = vmatpush1.msra.mxu0 %v3039
        %3080 = vmatprep.subr.mxu0 0.0
        %3081 = vmatpush1.msra.mxu0 %v3040
        %3082 = vmatprep.subr.mxu0 0.0
        %3083 = vmatpush1.msra.mxu0 %v3041
        %3084 = vmatprep.subr.mxu0 0.0
        %3085 = vmatpush1.msra.mxu0 %v3042
        %3086 = vmatprep.subr.mxu0 0.0
        %3087 = vmatpush1.msra.mxu0 %v3043
        %3088 = vmatprep.subr.mxu0 0.0
        %3089 = vmatpush1.msra.mxu0 %v3044
        %3090 = vmatprep.subr.mxu0 0.0
        %3091 = vmatpush1.msra.mxu0 %v3045
        %3092 = vmatprep.subr.mxu0 0.0
        %3093 = vmatpush1.msra.mxu0 %v3046
        %3094 = vmatprep.subr.mxu0 0.0
        %3095 = vmatpush1.msra.mxu0 %v3047
        %3096 = vmatprep.subr.mxu0 0.0
        %3097 = vmatpush1.msra.mxu0 %v3048
        %3098 = vmatprep.subr.mxu0 0.0
        %3099 = vmatpush1.msra.mxu0 %v3049
        %3100 = vmatprep.subr.mxu0 0.0
        %3101 = vmatpush1.msra.mxu0 %v3050
        %3102 = vmatprep.subr.mxu0 0.0
        %3103 = vmatpush1.msra.mxu0 %v3051
        %3104 = vmatprep.subr.mxu0 0.0
        %3105 = vmatpush1.msra.mxu0 %v3052
        %3106 = vmatprep.subr.mxu0 0.0
        %3107 = vmatpush1.msra.mxu0 %v3053
        %3108 = vmatprep.subr.mxu0 0.0
        %3109 = vmatpush1.msra.mxu0 %v3054
        %3110 = vmatprep.subr.mxu0 0.0
        %3111 = vmatpush1.msra.mxu0 %v3055
        %3112 = vmatprep.subr.mxu0 0.0
        %3113 = vmatpush1.msra.mxu0 %v3056
        %3114 = vmatprep.subr.mxu0 0.0
        %3115 = vmatpush1.msra.mxu0 %v3057
        %3116 = vmatprep.subr.mxu0 0.0
        %3117 = vmatpush1.msra.mxu0 %v3058
        %3118 = vmatprep.subr.mxu0 0.0
        %3119 = vmatpush1.msra.mxu0 %v3059
        %3120 = vmatprep.subr.mxu0 0.0
        %3121 = vmatpush1.msra.mxu0 %v3060
        %3122 = vmatprep.subr.mxu0 0.0
        %3123 = vmatpush1.msra.mxu0 %v3061
        %3124 = vmatprep.subr.mxu0 0.0
        %3125 = vmatpush1.msra.mxu0 %v3062
        %3126 = vmatprep.subr.mxu0 0.0
        %3127 = vmatpush1.msra.mxu0 %v3063
        %3128 = vmatprep.subr.mxu0 0.0
        %3129 = vmatpush1.msra.mxu0 %v3064
        %3130 = vmatprep.subr.mxu0 0.0
        %3131 = vmatpush1.msra.mxu0 %v3065
        %3132 = vmatprep.subr.mxu0 0.0
        %3133 = vmatpush1.msra.mxu0 %v3066
        %3134 = vmatprep.subr.mxu0 0.0
        %3135 = vmatpush1.msra.mxu0 %v3067
        %3136 = vmatprep.subr.mxu0 0.0
        %3137 = vmatpush1.msra.mxu0 %v3068
        %3138 = vmatprep.subr.mxu0 0.0
        %3139 = vmatpush1.msra.mxu0 %v3069
        %3140 = vmatprep.subr.mxu0 0.0
        %3141 = vmatpush1.msra.mxu0 %v3070
        %3142 = vmatprep.mubr.f32.mxu0 %v3036
        %3143 = vmatmul.mubr.f32.gmra.mrb[0].mxu0 %v3035
        %v3144 = vpop.f32.mrb[0].mxu0
        %v3145 = vadd.f32 %v3076, %v3144
        %v3146 = vpop.f32.mrb[0].mxu0
        %3147 = vmatprep.mubr.f32.mxu0 %v3038
        %3148 = vmatmul.mubr.f32.gmra.mrb[0].mxu0 %v3037
        %v3149 = vpop.f32.mrb[0].mxu0
        %v3150 = vadd.f32 %v3076, %v3149
        %v3151 = vpop.f32.mrb[0].mxu0
        %3152 = vdwg.mxu0
        %v3153 = vadd.f32 %v2912, %v3145
        %v3154 = vadd.f32 %v2913, %v3150
        %v3155 = vld [vmem:[%s866] sm:$0x1]
        %v3156 = vld [vmem:[%s869] sm:$0x1]
        %3157 = vadd.xlane.f32.xlu0 %v3153
        %v3158 = vpop.xlane.xlu0 %3157
        %3159 = vadd.xlane.f32.xlu0 %v3154
        %v3160 = vpop.xlane.xlu0 %3159
        %v3161 = vmul.f32 %v3158, %v2879
        %v3162 = vmul.f32 %v3160, %v2879
        %v3163 = vsub.f32 %v3153, %v3161
        %v3164 = vsub.f32 %v3154, %v3162
        %v3165 = vmul.f32 %v3163, %v3163
        %v3166 = vmul.f32 %v3164, %v3164
        %3167 = vadd.xlane.f32.xlu0 %v3165
        %v3168 = vpop.xlane.xlu0 %3167
        %3169 = vadd.xlane.f32.xlu0 %v3166
        %v3170 = vpop.xlane.xlu0 %3169
        %v3171 = vmul.f32 %v3168, %v2879
        %v3172 = vmul.f32 %v3170, %v2879
        %v3173 = vadd.f32 %v3171, 1e-05
        %v3174 = vadd.f32 %v3172, 1e-05
        %v3175 = vrsqrt.pop %v3173
        %v3176 = vrsqrt.pop %v3174
        %v3177 = vmul.f32 %v3163, %v3175
        %v3178 = vmul.f32 %v3164, %v3176
        %v3180 = vlaneseq
        %v3181 = vshrl.u32 %v3180, 7
        %v3182 = vsub.s32 0, %v3181
        %v3183 = vrot.slane %v3155, %v3182
        %v3185 = vmul.f32 %v3177, %v3183
        %v3186 = vmul.f32 %v3178, %v3183
        %v3188 = vlaneseq
        %v3189 = vshrl.u32 %v3188, 7
        %v3190 = vsub.s32 0, %v3189
        %v3191 = vrot.slane %v3156, %v3190
        %v3193 = vadd.f32 %v3185, %v3191
        %v3194 = vadd.f32 %v3186, %v3191
        %3195 = vst [vmem:[#allocation2] sm:$0xff] %v3193
        %3196 = vst [vmem:[#allocation2 + $0x8] sm:$0xff] %v3194
        %p3197 = scmp.eq.s32.totalorder %s43, 1
        // Predicated region
        $region125: #{tpu_custom_call.1} parent=87 // pred_check
          %p3198 = pneg %p3197
        $region126: #{tpu_custom_call.1} parent=87 // pred_check_branch
          %3200 = sbr.rel (%p3198) target = $region128
        $region127: #{tpu_custom_call.1} parent=87 // pred_region
          %v3201 = vld [vmem:[#allocation15] sm:$0xff]
          %v3202 = vld [vmem:[#allocation15 + $0x8] sm:$0xff]
          %v3203 = vld [vmem:[#allocation15 + $0x10] sm:$0xff]
          %v3204 = vld [vmem:[#allocation15 + $0x18] sm:$0xff]
          %v3205 = vld [vmem:[#allocation15 + $0x20] sm:$0xff]
          %v3206 = vld [vmem:[#allocation15 + $0x28] sm:$0xff]
          %v3207 = vld [vmem:[#allocation15 + $0x30] sm:$0xff]
          %v3208 = vld [vmem:[#allocation15 + $0x38] sm:$0xff]
          %v3209 = vld [vmem:[#allocation15 + $0x40] sm:$0xff]
          %v3210 = vld [vmem:[#allocation15 + $0x48] sm:$0xff]
          %v3211 = vld [vmem:[#allocation15 + $0x50] sm:$0xff]
          %v3212 = vld [vmem:[#allocation15 + $0x58] sm:$0xff]
          %v3213 = vld [vmem:[#allocation15 + $0x60] sm:$0xff]
          %v3214 = vld [vmem:[#allocation15 + $0x68] sm:$0xff]
          %v3215 = vld [vmem:[#allocation15 + $0x70] sm:$0xff]
          %v3216 = vld [vmem:[#allocation15 + $0x78] sm:$0xff]
          %v3217 = vld [vmem:[%s16] sm:$0x1]
          %v3219 = vlaneseq
          %v3220 = vshrl.u32 %v3219, 7
          %v3221 = vsub.s32 0, %v3220
          %v3222 = vrot.slane %v3217, %v3221
          %3224 = vmatprep.subr.mxu0 0.0
          %3225 = vmatpush1.msra.mxu0 %v3201
          %3226 = vmatprep.subr.mxu0 0.0
          %3227 = vmatpush1.msra.mxu0 %v3202
          %3228 = vmatprep.subr.mxu0 0.0
          %3229 = vmatpush1.msra.mxu0 %v3203
          %3230 = vmatprep.subr.mxu0 0.0
          %3231 = vmatpush1.msra.mxu0 %v3204
          %3232 = vmatprep.subr.mxu0 0.0
          %3233 = vmatpush1.msra.mxu0 %v3205
          %3234 = vmatprep.subr.mxu0 0.0
          %3235 = vmatpush1.msra.mxu0 %v3206
          %3236 = vmatprep.subr.mxu0 0.0
          %3237 = vmatpush1.msra.mxu0 %v3207
          %3238 = vmatprep.subr.mxu0 0.0
          %3239 = vmatpush1.msra.mxu0 %v3208
          %3240 = vmatprep.subr.mxu0 0.0
          %3241 = vmatpush1.msra.mxu0 %v3209
          %3242 = vmatprep.subr.mxu0 0.0
          %3243 = vmatpush1.msra.mxu0 %v3210
          %3244 = vmatprep.subr.mxu0 0.0
          %3245 = vmatpush1.msra.mxu0 %v3211
          %3246 = vmatprep.subr.mxu0 0.0
          %3247 = vmatpush1.msra.mxu0 %v3212
          %3248 = vmatprep.subr.mxu0 0.0
          %3249 = vmatpush1.msra.mxu0 %v3213
          %3250 = vmatprep.subr.mxu0 0.0
          %3251 = vmatpush1.msra.mxu0 %v3214
          %3252 = vmatprep.subr.mxu0 0.0
          %3253 = vmatpush1.msra.mxu0 %v3215
          %3254 = vmatprep.subr.mxu0 0.0
          %3255 = vmatpush1.msra.mxu0 %v3216
          %3256 = vmatprep.subr.mxu0 0.0
          %3257 = vmatpush1.msra.mxu0 0.0
          %3258 = vmatprep.subr.mxu0 0.0
          %3259 = vmatpush1.msra.mxu0 0.0
          %3260 = vmatprep.subr.mxu0 0.0
          %3261 = vmatpush1.msra.mxu0 0.0
          %3262 = vmatprep.subr.mxu0 0.0
          %3263 = vmatpush1.msra.mxu0 0.0
          %3264 = vmatprep.subr.mxu0 0.0
          %3265 = vmatpush1.msra.mxu0 0.0
          %3266 = vmatprep.subr.mxu0 0.0
          %3267 = vmatpush1.msra.mxu0 0.0
          %3268 = vmatprep.subr.mxu0 0.0
          %3269 = vmatpush1.msra.mxu0 0.0
          %3270 = vmatprep.subr.mxu0 0.0
          %3271 = vmatpush1.msra.mxu0 0.0
          %3272 = vmatprep.subr.mxu0 0.0
          %3273 = vmatpush1.msra.mxu0 0.0
          %3274 = vmatprep.subr.mxu0 0.0
          %3275 = vmatpush1.msra.mxu0 0.0
          %3276 = vmatprep.subr.mxu0 0.0
          %3277 = vmatpush1.msra.mxu0 0.0
          %3278 = vmatprep.subr.mxu0 0.0
          %3279 = vmatpush1.msra.mxu0 0.0
          %3280 = vmatprep.subr.mxu0 0.0
          %3281 = vmatpush1.msra.mxu0 0.0
          %3282 = vmatprep.subr.mxu0 0.0
          %3283 = vmatpush1.msra.mxu0 0.0
          %3284 = vmatprep.subr.mxu0 0.0
          %3285 = vmatpush1.msra.mxu0 0.0
          %3286 = vmatprep.subr.mxu0 0.0
          %3287 = vmatpush1.msra.mxu0 0.0
          %3288 = vmatprep.mubr.f32.mxu0 0.0
          %3289 = vmatmul.mubr.f32.gmra.mrb[0].mxu0 %v3193
          %v3290 = vpop.f32.mrb[0].mxu0
          %v3291 = vadd.f32 %v3222, %v3290
          %v3292 = vpop.f32.mrb[0].mxu0
          %3293 = vmatprep.mubr.f32.mxu0 0.0
          %3294 = vmatmul.mubr.f32.gmra.mrb[0].mxu0 %v3194
          %v3295 = vpop.f32.mrb[0].mxu0
          %v3296 = vadd.f32 %v3222, %v3295
          %v3297 = vpop.f32.mrb[0].mxu0
          %3298 = vdwg.mxu0
          %3299 = vst [vmem:[#allocation17] sm:$0xff] %v3291
          %3300 = vst [vmem:[#allocation17 + $0x8] sm:$0xff] %v3296
        $region128: #{tpu_custom_call.1} parent=87 // pred_fallthru
          _
        // Predicated region
        $region129: #{tpu_custom_call.1} parent=87 // pred_check
          %p3301 = pneg %p490
        $region130: #{tpu_custom_call.1} parent=87 // pred_check_branch
          %3303 = sbr.rel (%p3301) target = $region132
        $region131: #{tpu_custom_call.1} parent=87 // pred_region
          %s3304 = smul.u32 2, %s42
          %s3306 = ssub.s32 256, 256
          %3307 = vsyncadd [#allocation5], %s3306
          %s3308 = smul.addr %s3304, 128
          %s3309 = scalar_lea.hbm %s17, %s3308
          %s3310 = sshll.u32 [#allocation17], 4
          %s3311 = int_to_ptr.vmem [resolvable:$true] %s3310
          %3316 = dma.vmem_to_hbm [thread:$0]  %s3311, 256, %s3309, [#allocation5], 128, 128, 8
        $region132: #{tpu_custom_call.1} parent=87 // pred_fallthru
          _
        // Predicated region
        $region133: #{tpu_custom_call.1} parent=87 // pred_check
          %p3317 = pneg %p490
        $region134: #{tpu_custom_call.1} parent=87 // pred_check_branch
          %3319 = sbr.rel (%p3317) target = $region136
        $region135: #{tpu_custom_call.1} parent=87 // pred_region
          %3320 = dma.done [#allocation5], 256
        $region136: #{tpu_custom_call.1} parent=87 // pred_fallthru
          _
      $region88: #{tpu_custom_call.1} parent=5 // pred_fallthru
        _
      %p3321 = scmp.le.s32.totalorder 2, %s33
      // Predicated region
      $region137: #{tpu_custom_call.1} parent=5 // pred_check
        %p3322 = pneg %p3321
      $region138: #{tpu_custom_call.1} parent=5 // pred_check_branch
        %3324 = sbr.rel (%p3322) target = $region140
      $region139: #{tpu_custom_call.1} parent=5 // pred_region
        %s3325 = ssub.s32 %s33, 2
      $region140: #{tpu_custom_call.1} parent=5 // pred_fallthru
        _
    $region6: #{tpu_custom_call.1} parent=1 // loop_footer
      %s37 = sadd.s32 1, %s33
    $region7: #{tpu_custom_call.1} parent=1 // loop_footer_branch
      %32 = sbr.rel target = $region3
    $region8: #{tpu_custom_call.1} parent=1 // loop_exit
      _
    %3326 = vsyncpa [#allocation4], 1
    %s3327 = scalar_lea.sflag [#allocation4], 1
    %3328 = vsyncpa %s3327, 1
    %3329 = vsyncpa [#allocation7], 1
    %3330 = vsyncpa [#allocation10], 1
    %s3331 = scalar_lea.sflag [#allocation10], 1
    %3332 = vsyncpa %s3331, 1
    %3333 = vsyncpa [#allocation13], 1
    %s3334 = scalar_lea.sflag [#allocation13], 1
    %3335 = vsyncpa %s3334, 1
    %3336 = vsyncpa [#allocation16], 1
    %3337 = vsyncpa [#allocation5], 1
    %s3338 = scalar_lea.sflag [#allocation5], 1
    %3339 = vsyncpa %s3338, 1

</llo_original>
